<compile_context>
chip_gen: v6e
topology: v6e:2x2x1
jax: 0.10.0
libtpu: 0.0.40
codegen_flags: <defaults>
</compile_context>

<pallas_src>
import math

import numpy as np
import jax
import jax.numpy as jnp
from jax.experimental import pallas as pl
from jax.experimental.pallas import tpu as pltpu


# ----------------------------------------------------------------------------
# Fused kernel: head + iteration 0 + all LISTA iterations, one grid step per image.
# ----------------------------------------------------------------------------
def _make_fused_kernel(nIter, H, W, V, Dss, K_head, NxN):
    WV, WD, WN = W * V, W * Dss, W * NxN

    def im2row3(y):
        """(H, N) unpadded source -> (H, 3N) slab.

        Reflect ROW padding of 1 and the 3 vertical taps are folded into the lane
        axis, so a whole 3x3 conv becomes ONE MXU matmul with internal accumulation
        (reflect COLUMN padding is already folded into the Toeplitz weights)."""
        top = jnp.concatenate([y[1:2, :], y[:H - 1, :]], axis=0)        # rows -1..H-2
        bot = jnp.concatenate([y[1:H, :], y[H - 2:H - 1, :]], axis=0)   # rows  1..H
        return jnp.concatenate([top, y, bot], axis=1)

    def bdot(a, w):
        # bf16 operands on the MXU, f32 accumulation.
        return jnp.dot(a.astype(jnp.bfloat16), w, preferred_element_type=jnp.float32)

    def kernel(xc_ref, tc_ref, t1h_ref, b1h_ref,
               t10_ref, b1s_ref, t2a_ref, t2b_ref, b2s_ref,
               out_ref, slab_ref):
        xc = xc_ref[0]                                   # (H + K_head - 1, W*NxN) f32

        # ---- head: 15x15 cmprs conv as ONE matmul over a concatenated contraction.
        # Build the im2row slab (H, K_head*W*NxN) in VMEM scratch (lane-aligned
        # column writes), then a single (H, 1920) @ (1920, W*V) dot.
        for kh in range(K_head):                         # statically unrolled taps
            slab_ref[:, kh * WN:(kh + 1) * WN] = xc[kh:kh + H, :]
        y = bdot(slab_ref[...], tc_ref[...])             # (H, W*V) f32 == cmprs output

        # ---- iteration 0: W1Lis0 (3x3, bias) + ReLU
        out = jnp.maximum(bdot(im2row3(y), t1h_ref[...]) + b1h_ref[...], 0.0)

        # ---- LISTA iterations 1..nIter-1 (static unroll, weights resident in VMEM)
        src = y                                          # tmp1Prev (unpadded)
        for i in range(nIter - 1):
            # W1Lis_i and W0Lis_i share the same LHS -> fused on the output (N) axis.
            z = bdot(im2row3(src), t10_ref[i])           # (H, WD + WV) = [tmp1 | new src]
            tmp1 = z[:, :WD] + b1s_ref[i]
            src = z[:, WD:]                              # W0Lis_i(tmp1Prev)
            a = bdot(im2row3(out), t2a_ref[i])           # W2Lis_i[0]
            tmp2 = bdot(im2row3(a), t2b_ref[i]) + b2s_ref[i]   # W2Lis_i[1] (+bias)
            out = jnp.maximum(tmp1 + out - tmp2, 0.0)

        out_ref[0] = out.astype(out_ref.dtype)

    return kernel


def invrs_pallas(xr, packed, nIter, H, W, V, Dss, NxN, K_head=15):
    B, Hr, WN = xr.shape
    WD = W * Dss

    def full(a):
        return pl.BlockSpec(a.shape, lambda b: (0,) * a.ndim)

    return pl.pallas_call(
        _make_fused_kernel(nIter, H, W, V, Dss, K_head, NxN),
        out_shape=jax.ShapeDtypeStruct((B, H, WD), jnp.float32),
        grid=(B,),
        in_specs=[
            pl.BlockSpec((1, Hr, WN), lambda b: (b, 0, 0)),
            full(packed["Tc"]), full(packed["T1_0"]), full(packed["b1_0"]),
            full(packed["T10"]), full(packed["b1s"]),
            full(packed["T2a"]), full(packed["T2b"]), full(packed["b2s"]),
        ],
        out_specs=pl.BlockSpec((1, H, WD), lambda b: (b, 0, 0)),
        scratch_shapes=[pltpu.VMEM((H, K_head * WN), jnp.float32)],
        compiler_params=pltpu.CompilerParams(
            dimension_semantics=("parallel",),        # v7x: shard batch over both TCs
            vmem_limit_bytes=32 * 1024 * 1024,        # few-MB footprint; explicit budget
        ),
    )(xr, packed["Tc"], packed["T1_0"], packed["b1_0"],
      packed["T10"], packed["b1s"], packed["T2a"], packed["T2b"], packed["b2s"])


# ----------------------------------------------------------------------------
# Host-side weight packing: conv weights -> tap-stacked Toeplitz matrices (bf16)
# with the reflect COLUMN padding folded in; biases pre-tiled to the lane layout.
# ----------------------------------------------------------------------------
def _reflect_idx(i, n):
    if i < 0:
        i = -i
    if i > n - 1:
        i = 2 * (n - 1) - i
    return i


def _toeplitz_reflect_stacked(w_hwio, W_img, pad):
    """(K,K,Cin,Cout) HWIO weights -> (K*W*Cin, W*Cout) f32, taps stacked on rows."""
    w = np.asarray(jax.device_get(w_hwio), np.float32)
    K, _, Cin, Cout = w.shape
    T = np.zeros((K, W_img * Cin, W_img * Cout), np.float32)
    for wo in range(W_img):
        for kw in range(K):
            wi = _reflect_idx(wo + kw - pad, W_img)
            # accumulate: reflection can map several taps onto the same column
            T[:, wi * Cin:(wi + 1) * Cin, wo * Cout:(wo + 1) * Cout] += w[:, kw]
    return T.reshape(K * W_img * Cin, W_img * Cout)


def _tile_bias_np(b, W_img):
    bb = np.asarray(jax.device_get(b), np.float32)
    return np.tile(bb, W_img)[None, :]                 # (1, W*Cout)


def pack_params(params, W_img, nIter):
    assert nIter >= 2, "fused kernel packing expects nIter >= 2"
    Tc = _toeplitz_reflect_stacked(params["cmprs_w"], W_img, pad=7)
    T1 = [_toeplitz_reflect_stacked(w, W_img, pad=1) for w in params["W1_w"]]
    b1 = [_tile_bias_np(b, W_img) for b in params["W1_b"]]
    T0 = [_toeplitz_reflect_stacked(w, W_img, pad=1) for w in params["W0_w"][1:]]
    T2a = [_toeplitz_reflect_stacked(w, W_img, pad=1) for w in params["W2a_w"][1:]]
    T2b = [_toeplitz_reflect_stacked(w, W_img, pad=1) for w in params["W2b_w"][1:]]
    b2 = [_tile_bias_np(b, W_img) for b in params["W2b_b"][1:]]
    # W1/W0 fused on the output axis (shared LHS): [tmp1 | new tmp1Prev]
    T10 = np.stack([np.concatenate([T1[i + 1], T0[i]], axis=1)
                    for i in range(nIter - 1)])
    return {
        "Tc": jnp.asarray(Tc, jnp.bfloat16),
        "T1_0": jnp.asarray(T1[0], jnp.bfloat16),
        "b1_0": jnp.asarray(b1[0], jnp.float32),
        "T10": jnp.asarray(T10, jnp.bfloat16),                     # (nIter-1, 3WV, WD+WV)
        "b1s": jnp.asarray(np.stack(b1[1:]), jnp.float32),         # (nIter-1, 1, WD)
        "T2a": jnp.asarray(np.stack(T2a), jnp.bfloat16),           # (nIter-1, 3WD, WV)
        "T2b": jnp.asarray(np.stack(T2b), jnp.bfloat16),           # (nIter-1, 3WV, WD)
        "b2s": jnp.asarray(np.stack(b2), jnp.float32),             # (nIter-1, 1, WD)
    }


# ----------------------------------------------------------------------------
# Parameters (deterministic synthetic init, matching the module's init recipe)
# ----------------------------------------------------------------------------
def init_params(key, nIter, nDepths, s, V, NxN):
    Dss = nDepths * s * s

    def normal(k, shape, std):
        return (1e-5 + std * jax.random.normal(k, shape, jnp.float32)).astype(jnp.float32)

    keys = jax.random.split(key, 4 * nIter + 2)
    p = {}
    p["cmprs_w"] = normal(keys[0], (15, 15, NxN, V), math.sqrt(2e-10 / (V * 15 * 15)))
    p["W1_w"] = [normal(keys[1 + i], (3, 3, V, Dss), math.sqrt(2e-10 / (Dss * 9)))
                 for i in range(nIter)]
    p["W1_b"] = [jnp.zeros((Dss,), jnp.float32) for _ in range(nIter)]
    p["W0_w"] = [None] + [normal(keys[1 + nIter + i], (3, 3, V, V),
                                 math.sqrt(2e-10 / (V * 9)))
                          for i in range(1, nIter)]
    p["W2a_w"] = [None] + [normal(keys[1 + 2 * nIter + i], (3, 3, Dss, V),
                                  math.sqrt(2e-10 / (V * 9)))
                           for i in range(1, nIter)]
    p["W2b_w"] = [None] + [normal(keys[1 + 3 * nIter + i], (3, 3, V, Dss),
                                  math.sqrt(2e-10 / (Dss * 9)))
                           for i in range(1, nIter)]
    p["W2b_b"] = [None] + [jnp.zeros((Dss,), jnp.float32) for _ in range(1, nIter)]
    return p


# ----------------------------------------------------------------------------
# Forward pass (test == 1 semantics: reflect padding everywhere)
# ----------------------------------------------------------------------------
def invrs_forward(x_nchw, packed, nIter, nDepths, s, V):
    B, C_in, H, W = x_nchw.shape
    Dss = nDepths * s * s

    # NCHW -> NHWC -> flatten (W, C) into the lane axis; reflect row-pad by 7
    # (column padding of the cmprs conv is folded into its Toeplitz weights).
    x = jnp.transpose(x_nchw, (0, 2, 3, 1)).reshape(B, H, W * C_in)
    x = jnp.pad(x, ((0, 0), (7, 7), (0, 0)), mode="reflect")   # (B, H+14, W*NxN)

    out = invrs_pallas(x, packed, nIter, H, W, V, Dss, C_in)   # (B, H, W*Dss)

    # final pixel-shuffle-style rearrangement (matches the PyTorch view/permute/reshape)
    out = out.reshape(B, H, W, Dss)
    o = jnp.transpose(out, (0, 3, 1, 2)).reshape(B, nDepths, s, s, H, W)
    o = jnp.transpose(o, (0, 1, 4, 2, 5, 3)).reshape(B, nDepths, H * s, W * s)
    return o


# ----------------------------------------------------------------------------
# Plain-numpy (float64) reference of the same forward, for a correctness check.
# ----------------------------------------------------------------------------
def _ref_forward_np(x_nchw, params, nIter, nDepths, s):
    x = np.asarray(jax.device_get(x_nchw), np.float64)

    def conv(u, w_hwio, b=None, pad=0):
        w = np.asarray(jax.device_get(w_hwio), np.float64)
        K, _, _, Cout = w.shape
        if pad:
            u = np.pad(u, ((0, 0), (pad, pad), (pad, pad), (0, 0)), mode="reflect")
        Bn, Hp, Wp, _ = u.shape
        Ho, Wo = Hp - K + 1, Wp - K + 1
        out = np.zeros((Bn, Ho, Wo, Cout), np.float64)
        for kh in range(K):
            for kw in range(K):
                out += np.tensordot(u[:, kh:kh + Ho, kw:kw + Wo, :], w[kh, kw],
                                    axes=([3], [0]))
        if b is not None:
            out += np.asarray(jax.device_get(b), np.float64)
        return out

    xh = np.transpose(x, (0, 2, 3, 1))
    y = conv(xh, params["cmprs_w"], pad=7)
    out = np.maximum(conv(y, params["W1_w"][0], params["W1_b"][0], pad=1), 0.0)
    prev = y
    for i in range(1, nIter):
        tmp1 = conv(prev, params["W1_w"][i], params["W1_b"][i], pad=1)
        prev = conv(prev, params["W0_w"][i], pad=1)
        tmp2 = conv(out, params["W2a_w"][i], pad=1)
        tmp2 = conv(tmp2, params["W2b_w"][i], params["W2b_b"][i], pad=1)
        out = np.maximum(tmp1 + out - tmp2, 0.0)
    Bn, Hh, Ww, _ = out.shape
    o = np.transpose(out, (0, 3, 1, 2)).reshape(Bn, nDepths, s, s, Hh, Ww)
    o = np.transpose(o, (0, 1, 4, 2, 5, 3)).reshape(Bn, nDepths, Hh * s, Ww * s)
    return o


# ----------------------------------------------------------------------------
if __name__ == "__main__":
    # Small, forward-consistent configuration (W*NxN = W*V = 128, W*Dss = 256).
    nIter, nDepths, s, V, NxN = 3, 4, 2, 8, 8
    B, H, W = 2, 16, 16

    key = jax.random.PRNGKey(0)
    kx, kp = jax.random.split(key)
    x = jax.random.normal(kx, (B, NxN, H, W), jnp.float32)   # NCHW like the PyTorch module
    params = init_params(kp, nIter, nDepths, s, V, NxN)
    packed = pack_params(params, W, nIter)

    fwd = jax.jit(invrs_forward, static_argnums=(2, 3, 4, 5))
    out = fwd(x, packed, nIter, nDepths, s, V)
    out = jax.block_until_ready(out)

    assert out.shape == (B, nDepths, H * s, W * s), out.shape
    assert bool(jnp.all(jnp.isfinite(out)))

    # Correctness check vs. a float64 numpy reference of the same forward pass
    # (tolerance accounts for bf16 weights/activations with f32 MXU accumulation).
    ref = _ref_forward_np(x, params, nIter, nDepths, s)
    rel = float(np.max(np.abs(np.asarray(out, np.float64) - ref))
                / (np.max(np.abs(ref)) + 1e-30))
    assert rel < 8e-2, f"relative error too large: {rel}"

    print("KERNEL_OK")
</pallas_src>

<mosaic_0001>
module attributes {stable_mosaic.version = 11 : i64} {
  func.func @kernel(%arg0: i32, %arg1: memref<1x30x128xf32, #tpu.memory_space<vmem>>, %arg2: memref<1920x128xbf16, #tpu.memory_space<vmem>>, %arg3: memref<384x256xbf16, #tpu.memory_space<vmem>>, %arg4: memref<1x256xf32, #tpu.memory_space<vmem>>, %arg5: memref<2x384x384xbf16, #tpu.memory_space<vmem>>, %arg6: memref<2x1x256xf32, #tpu.memory_space<vmem>>, %arg7: memref<2x768x128xbf16, #tpu.memory_space<vmem>>, %arg8: memref<2x384x256xbf16, #tpu.memory_space<vmem>>, %arg9: memref<2x1x256xf32, #tpu.memory_space<vmem>>, %arg10: memref<1x16x256xf32, #tpu.memory_space<vmem>>, %arg11: memref<16x1920xf32, #tpu.memory_space<vmem>>) attributes {dimension_semantics = [#tpu.dimension_semantics<parallel>], iteration_bounds = array<i64: 2>, scalar_prefetch = 0 : i64, scratch_operands = 1 : i64, tpu.core_type = #tpu.core_type<tc>, window_params = [{transform_indices = @transform_0, window_bounds = array<i64: 1, 30, 128>}, {pipeline_mode = #tpu.pipeline_mode<synchronous>, transform_indices = @transform_1, window_bounds = array<i64: 1920, 128>}, {pipeline_mode = #tpu.pipeline_mode<synchronous>, transform_indices = @transform_2, window_bounds = array<i64: 384, 256>}, {pipeline_mode = #tpu.pipeline_mode<synchronous>, transform_indices = @transform_3, window_bounds = array<i64: 1, 256>}, {pipeline_mode = #tpu.pipeline_mode<synchronous>, transform_indices = @transform_4, window_bounds = array<i64: 2, 384, 384>}, {pipeline_mode = #tpu.pipeline_mode<synchronous>, transform_indices = @transform_5, window_bounds = array<i64: 2, 1, 256>}, {pipeline_mode = #tpu.pipeline_mode<synchronous>, transform_indices = @transform_6, window_bounds = array<i64: 2, 768, 128>}, {pipeline_mode = #tpu.pipeline_mode<synchronous>, transform_indices = @transform_7, window_bounds = array<i64: 2, 384, 256>}, {pipeline_mode = #tpu.pipeline_mode<synchronous>, transform_indices = @transform_8, window_bounds = array<i64: 2, 1, 256>}, {transform_indices = @transform_9, window_bounds = array<i64: 1, 16, 256>}]} {
    %c0 = arith.constant 0 : index
    %c0_0 = arith.constant 0 : index
    %c0_1 = arith.constant 0 : index
    %0 = vector.load %arg1[%c0, %c0_0, %c0_1] : memref<1x30x128xf32, #tpu.memory_space<vmem>>, vector<1x30x128xf32>
    %1 = vector.shape_cast %0 : vector<1x30x128xf32> to vector<30x128xf32>
    %2 = vector.extract_strided_slice %1 {offsets = [0, 0], sizes = [16, 128], strides = [1, 1]} : vector<30x128xf32> to vector<16x128xf32>
    %c0_2 = arith.constant 0 : index
    %c0_3 = arith.constant 0 : index
    %3 = vector.load %arg11[%c0_2, %c0_3] : memref<16x1920xf32, #tpu.memory_space<vmem>>, vector<16x128xf32>
    tpu.vector_store %arg11[%c0_2, %c0_3], %2 {strides = array<i32>} : memref<16x1920xf32, #tpu.memory_space<vmem>>, vector<16x128xf32>,
    %4 = vector.extract_strided_slice %1 {offsets = [1, 0], sizes = [16, 128], strides = [1, 1]} : vector<30x128xf32> to vector<16x128xf32>
    %c0_4 = arith.constant 0 : index
    %c128 = arith.constant 128 : index
    %5 = vector.load %arg11[%c0_4, %c128] : memref<16x1920xf32, #tpu.memory_space<vmem>>, vector<16x128xf32>
    tpu.vector_store %arg11[%c0_4, %c128], %4 {strides = array<i32>} : memref<16x1920xf32, #tpu.memory_space<vmem>>, vector<16x128xf32>,
    %6 = vector.extract_strided_slice %1 {offsets = [2, 0], sizes = [16, 128], strides = [1, 1]} : vector<30x128xf32> to vector<16x128xf32>
    %c0_5 = arith.constant 0 : index
    %c256 = arith.constant 256 : index
    %7 = vector.load %arg11[%c0_5, %c256] : memref<16x1920xf32, #tpu.memory_space<vmem>>, vector<16x128xf32>
    tpu.vector_store %arg11[%c0_5, %c256], %6 {strides = array<i32>} : memref<16x1920xf32, #tpu.memory_space<vmem>>, vector<16x128xf32>,
    %8 = vector.extract_strided_slice %1 {offsets = [3, 0], sizes = [16, 128], strides = [1, 1]} : vector<30x128xf32> to vector<16x128xf32>
    %c0_6 = arith.constant 0 : index
    %c384 = arith.constant 384 : index
    %9 = vector.load %arg11[%c0_6, %c384] : memref<16x1920xf32, #tpu.memory_space<vmem>>, vector<16x128xf32>
    tpu.vector_store %arg11[%c0_6, %c384], %8 {strides = array<i32>} : memref<16x1920xf32, #tpu.memory_space<vmem>>, vector<16x128xf32>,
    %10 = vector.extract_strided_slice %1 {offsets = [4, 0], sizes = [16, 128], strides = [1, 1]} : vector<30x128xf32> to vector<16x128xf32>
    %c0_7 = arith.constant 0 : index
    %c512 = arith.constant 512 : index
    %11 = vector.load %arg11[%c0_7, %c512] : memref<16x1920xf32, #tpu.memory_space<vmem>>, vector<16x128xf32>
    tpu.vector_store %arg11[%c0_7, %c512], %10 {strides = array<i32>} : memref<16x1920xf32, #tpu.memory_space<vmem>>, vector<16x128xf32>,
    %12 = vector.extract_strided_slice %1 {offsets = [5, 0], sizes = [16, 128], strides = [1, 1]} : vector<30x128xf32> to vector<16x128xf32>
    %c0_8 = arith.constant 0 : index
    %c640 = arith.constant 640 : index
    %13 = vector.load %arg11[%c0_8, %c640] : memref<16x1920xf32, #tpu.memory_space<vmem>>, vector<16x128xf32>
    tpu.vector_store %arg11[%c0_8, %c640], %12 {strides = array<i32>} : memref<16x1920xf32, #tpu.memory_space<vmem>>, vector<16x128xf32>,
    %14 = vector.extract_strided_slice %1 {offsets = [6, 0], sizes = [16, 128], strides = [1, 1]} : vector<30x128xf32> to vector<16x128xf32>
    %c0_9 = arith.constant 0 : index
    %c768 = arith.constant 768 : index
    %15 = vector.load %arg11[%c0_9, %c768] : memref<16x1920xf32, #tpu.memory_space<vmem>>, vector<16x128xf32>
    tpu.vector_store %arg11[%c0_9, %c768], %14 {strides = array<i32>} : memref<16x1920xf32, #tpu.memory_space<vmem>>, vector<16x128xf32>,
    %16 = vector.extract_strided_slice %1 {offsets = [7, 0], sizes = [16, 128], strides = [1, 1]} : vector<30x128xf32> to vector<16x128xf32>
    %c0_10 = arith.constant 0 : index
    %c896 = arith.constant 896 : index
    %17 = vector.load %arg11[%c0_10, %c896] : memref<16x1920xf32, #tpu.memory_space<vmem>>, vector<16x128xf32>
    tpu.vector_store %arg11[%c0_10, %c896], %16 {strides = array<i32>} : memref<16x1920xf32, #tpu.memory_space<vmem>>, vector<16x128xf32>,
    %18 = vector.extract_strided_slice %1 {offsets = [8, 0], sizes = [16, 128], strides = [1, 1]} : vector<30x128xf32> to vector<16x128xf32>
    %c0_11 = arith.constant 0 : index
    %c1024 = arith.constant 1024 : index
    %19 = vector.load %arg11[%c0_11, %c1024] : memref<16x1920xf32, #tpu.memory_space<vmem>>, vector<16x128xf32>
    tpu.vector_store %arg11[%c0_11, %c1024], %18 {strides = array<i32>} : memref<16x1920xf32, #tpu.memory_space<vmem>>, vector<16x128xf32>,
    %20 = vector.extract_strided_slice %1 {offsets = [9, 0], sizes = [16, 128], strides = [1, 1]} : vector<30x128xf32> to vector<16x128xf32>
    %c0_12 = arith.constant 0 : index
    %c1152 = arith.constant 1152 : index
    %21 = vector.load %arg11[%c0_12, %c1152] : memref<16x1920xf32, #tpu.memory_space<vmem>>, vector<16x128xf32>
    tpu.vector_store %arg11[%c0_12, %c1152], %20 {strides = array<i32>} : memref<16x1920xf32, #tpu.memory_space<vmem>>, vector<16x128xf32>,
    %22 = vector.extract_strided_slice %1 {offsets = [10, 0], sizes = [16, 128], strides = [1, 1]} : vector<30x128xf32> to vector<16x128xf32>
    %c0_13 = arith.constant 0 : index
    %c1280 = arith.constant 1280 : index
    %23 = vector.load %arg11[%c0_13, %c1280] : memref<16x1920xf32, #tpu.memory_space<vmem>>, vector<16x128xf32>
    tpu.vector_store %arg11[%c0_13, %c1280], %22 {strides = array<i32>} : memref<16x1920xf32, #tpu.memory_space<vmem>>, vector<16x128xf32>,
    %24 = vector.extract_strided_slice %1 {offsets = [11, 0], sizes = [16, 128], strides = [1, 1]} : vector<30x128xf32> to vector<16x128xf32>
    %c0_14 = arith.constant 0 : index
    %c1408 = arith.constant 1408 : index
    %25 = vector.load %arg11[%c0_14, %c1408] : memref<16x1920xf32, #tpu.memory_space<vmem>>, vector<16x128xf32>
    tpu.vector_store %arg11[%c0_14, %c1408], %24 {strides = array<i32>} : memref<16x1920xf32, #tpu.memory_space<vmem>>, vector<16x128xf32>,
    %26 = vector.extract_strided_slice %1 {offsets = [12, 0], sizes = [16, 128], strides = [1, 1]} : vector<30x128xf32> to vector<16x128xf32>
    %c0_15 = arith.constant 0 : index
    %c1536 = arith.constant 1536 : index
    %27 = vector.load %arg11[%c0_15, %c1536] : memref<16x1920xf32, #tpu.memory_space<vmem>>, vector<16x128xf32>
    tpu.vector_store %arg11[%c0_15, %c1536], %26 {strides = array<i32>} : memref<16x1920xf32, #tpu.memory_space<vmem>>, vector<16x128xf32>,
    %28 = vector.extract_strided_slice %1 {offsets = [13, 0], sizes = [16, 128], strides = [1, 1]} : vector<30x128xf32> to vector<16x128xf32>
    %c0_16 = arith.constant 0 : index
    %c1664 = arith.constant 1664 : index
    %29 = vector.load %arg11[%c0_16, %c1664] : memref<16x1920xf32, #tpu.memory_space<vmem>>, vector<16x128xf32>
    tpu.vector_store %arg11[%c0_16, %c1664], %28 {strides = array<i32>} : memref<16x1920xf32, #tpu.memory_space<vmem>>, vector<16x128xf32>,
    %30 = vector.extract_strided_slice %1 {offsets = [14, 0], sizes = [16, 128], strides = [1, 1]} : vector<30x128xf32> to vector<16x128xf32>
    %c0_17 = arith.constant 0 : index
    %c1792 = arith.constant 1792 : index
    %31 = vector.load %arg11[%c0_17, %c1792] : memref<16x1920xf32, #tpu.memory_space<vmem>>, vector<16x128xf32>
    tpu.vector_store %arg11[%c0_17, %c1792], %30 {strides = array<i32>} : memref<16x1920xf32, #tpu.memory_space<vmem>>, vector<16x128xf32>,
    %c0_18 = arith.constant 0 : index
    %c0_19 = arith.constant 0 : index
    %32 = vector.load %arg11[%c0_18, %c0_19] : memref<16x1920xf32, #tpu.memory_space<vmem>>, vector<16x1920xf32>
    %c0_20 = arith.constant 0 : index
    %c0_21 = arith.constant 0 : index
    %33 = vector.load %arg2[%c0_20, %c0_21] : memref<1920x128xbf16, #tpu.memory_space<vmem>>, vector<1920x128xbf16>
    %34 = arith.truncf %32 : vector<16x1920xf32> to vector<16x1920xbf16>
    %cst = arith.constant dense<0.000000e+00> : vector<16x128xf32>
    %35 = tpu.matmul %34, %33, %cst {dimension_numbers = #tpu.dot_dimension_numbers<[1], [0], [0], [1], [0, 0, 1, 1], [], []>} : vector<16x1920xbf16>, vector<1920x128xbf16>, vector<16x128xf32> -> vector<16x128xf32>
    %36 = vector.extract_strided_slice %35 {offsets = [1, 0], sizes = [1, 128], strides = [1, 1]} : vector<16x128xf32> to vector<1x128xf32>
    %37 = vector.extract_strided_slice %35 {offsets = [0, 0], sizes = [15, 128], strides = [1, 1]} : vector<16x128xf32> to vector<15x128xf32>
    %38 = tpu.concatenate %36, %37 in 0 : vector<1x128xf32>, vector<15x128xf32> -> vector<16x128xf32>
    %39 = vector.extract_strided_slice %35 {offsets = [1, 0], sizes = [15, 128], strides = [1, 1]} : vector<16x128xf32> to vector<15x128xf32>
    %40 = vector.extract_strided_slice %35 {offsets = [14, 0], sizes = [1, 128], strides = [1, 1]} : vector<16x128xf32> to vector<1x128xf32>
    %41 = tpu.concatenate %39, %40 in 0 : vector<15x128xf32>, vector<1x128xf32> -> vector<16x128xf32>
    %42 = tpu.concatenate %38, %35, %41 in 1 : vector<16x128xf32>, vector<16x128xf32>, vector<16x128xf32> -> vector<16x384xf32>
    %c0_22 = arith.constant 0 : index
    %c0_23 = arith.constant 0 : index
    %43 = vector.load %arg3[%c0_22, %c0_23] : memref<384x256xbf16, #tpu.memory_space<vmem>>, vector<384x256xbf16>
    %44 = arith.truncf %42 : vector<16x384xf32> to vector<16x384xbf16>
    %cst_24 = arith.constant dense<0.000000e+00> : vector<16x256xf32>
    %45 = tpu.matmul %44, %43, %cst_24 {dimension_numbers = #tpu.dot_dimension_numbers<[1], [0], [0], [1], [0, 0, 1, 1], [], []>} : vector<16x384xbf16>, vector<384x256xbf16>, vector<16x256xf32> -> vector<16x256xf32>
    %c0_25 = arith.constant 0 : index
    %c0_26 = arith.constant 0 : index
    %46 = vector.load %arg4[%c0_25, %c0_26] : memref<1x256xf32, #tpu.memory_space<vmem>>, vector<1x256xf32>
    %47 = vector.broadcast %46 : vector<1x256xf32> to vector<16x256xf32>
    %48 = arith.addf %45, %47 : vector<16x256xf32>
    %cst_27 = arith.constant 0.000000e+00 : f32
    %49 = vector.broadcast %cst_27 : f32 to vector<16x256xf32>
    %50 = arith.maximumf %48, %49 : vector<16x256xf32>
    %51 = vector.extract_strided_slice %35 {offsets = [1, 0], sizes = [1, 128], strides = [1, 1]} : vector<16x128xf32> to vector<1x128xf32>
    %52 = vector.extract_strided_slice %35 {offsets = [0, 0], sizes = [15, 128], strides = [1, 1]} : vector<16x128xf32> to vector<15x128xf32>
    %53 = tpu.concatenate %51, %52 in 0 : vector<1x128xf32>, vector<15x128xf32> -> vector<16x128xf32>
    %54 = vector.extract_strided_slice %35 {offsets = [1, 0], sizes = [15, 128], strides = [1, 1]} : vector<16x128xf32> to vector<15x128xf32>
    %55 = vector.extract_strided_slice %35 {offsets = [14, 0], sizes = [1, 128], strides = [1, 1]} : vector<16x128xf32> to vector<1x128xf32>
    %56 = tpu.concatenate %54, %55 in 0 : vector<15x128xf32>, vector<1x128xf32> -> vector<16x128xf32>
    %57 = tpu.concatenate %53, %35, %56 in 1 : vector<16x128xf32>, vector<16x128xf32>, vector<16x128xf32> -> vector<16x384xf32>
    %c0_28 = arith.constant 0 : index
    %c0_29 = arith.constant 0 : index
    %c0_30 = arith.constant 0 : index
    %58 = vector.load %arg5[%c0_28, %c0_29, %c0_30] : memref<2x384x384xbf16, #tpu.memory_space<vmem>>, vector<1x384x384xbf16>
    %59 = vector.shape_cast %58 : vector<1x384x384xbf16> to vector<384x384xbf16>
    %60 = arith.truncf %57 : vector<16x384xf32> to vector<16x384xbf16>
    %cst_31 = arith.constant dense<0.000000e+00> : vector<16x384xf32>
    %61 = tpu.matmul %60, %59, %cst_31 {dimension_numbers = #tpu.dot_dimension_numbers<[1], [0], [0], [1], [0, 0, 1, 1], [], []>} : vector<16x384xbf16>, vector<384x384xbf16>, vector<16x384xf32> -> vector<16x384xf32>
    %62 = vector.extract_strided_slice %61 {offsets = [0, 0], sizes = [16, 256], strides = [1, 1]} : vector<16x384xf32> to vector<16x256xf32>
    %c0_32 = arith.constant 0 : index
    %c0_33 = arith.constant 0 : index
    %c0_34 = arith.constant 0 : index
    %63 = vector.load %arg6[%c0_32, %c0_33, %c0_34] : memref<2x1x256xf32, #tpu.memory_space<vmem>>, vector<1x1x256xf32>
    %64 = vector.shape_cast %63 : vector<1x1x256xf32> to vector<1x256xf32>
    %65 = vector.broadcast %64 : vector<1x256xf32> to vector<16x256xf32>
    %66 = arith.addf %62, %65 : vector<16x256xf32>
    %67 = vector.extract_strided_slice %61 {offsets = [0, 256], sizes = [16, 128], strides = [1, 1]} : vector<16x384xf32> to vector<16x128xf32>
    %68 = vector.extract_strided_slice %50 {offsets = [1, 0], sizes = [1, 256], strides = [1, 1]} : vector<16x256xf32> to vector<1x256xf32>
    %69 = vector.extract_strided_slice %50 {offsets = [0, 0], sizes = [15, 256], strides = [1, 1]} : vector<16x256xf32> to vector<15x256xf32>
    %70 = tpu.concatenate %68, %69 in 0 : vector<1x256xf32>, vector<15x256xf32> -> vector<16x256xf32>
    %71 = vector.extract_strided_slice %50 {offsets = [1, 0], sizes = [15, 256], strides = [1, 1]} : vector<16x256xf32> to vector<15x256xf32>
    %72 = vector.extract_strided_slice %50 {offsets = [14, 0], sizes = [1, 256], strides = [1, 1]} : vector<16x256xf32> to vector<1x256xf32>
    %73 = tpu.concatenate %71, %72 in 0 : vector<15x256xf32>, vector<1x256xf32> -> vector<16x256xf32>
    %74 = tpu.concatenate %70, %50, %73 in 1 : vector<16x256xf32>, vector<16x256xf32>, vector<16x256xf32> -> vector<16x768xf32>
    %c0_35 = arith.constant 0 : index
    %c0_36 = arith.constant 0 : index
    %c0_37 = arith.constant 0 : index
    %75 = vector.load %arg7[%c0_35, %c0_36, %c0_37] : memref<2x768x128xbf16, #tpu.memory_space<vmem>>, vector<1x768x128xbf16>
    %76 = vector.shape_cast %75 : vector<1x768x128xbf16> to vector<768x128xbf16>
    %77 = arith.truncf %74 : vector<16x768xf32> to vector<16x768xbf16>
    %cst_38 = arith.constant dense<0.000000e+00> : vector<16x128xf32>
    %78 = tpu.matmul %77, %76, %cst_38 {dimension_numbers = #tpu.dot_dimension_numbers<[1], [0], [0], [1], [0, 0, 1, 1], [], []>} : vector<16x768xbf16>, vector<768x128xbf16>, vector<16x128xf32> -> vector<16x128xf32>
    %79 = vector.extract_strided_slice %78 {offsets = [1, 0], sizes = [1, 128], strides = [1, 1]} : vector<16x128xf32> to vector<1x128xf32>
    %80 = vector.extract_strided_slice %78 {offsets = [0, 0], sizes = [15, 128], strides = [1, 1]} : vector<16x128xf32> to vector<15x128xf32>
    %81 = tpu.concatenate %79, %80 in 0 : vector<1x128xf32>, vector<15x128xf32> -> vector<16x128xf32>
    %82 = vector.extract_strided_slice %78 {offsets = [1, 0], sizes = [15, 128], strides = [1, 1]} : vector<16x128xf32> to vector<15x128xf32>
    %83 = vector.extract_strided_slice %78 {offsets = [14, 0], sizes = [1, 128], strides = [1, 1]} : vector<16x128xf32> to vector<1x128xf32>
    %84 = tpu.concatenate %82, %83 in 0 : vector<15x128xf32>, vector<1x128xf32> -> vector<16x128xf32>
    %85 = tpu.concatenate %81, %78, %84 in 1 : vector<16x128xf32>, vector<16x128xf32>, vector<16x128xf32> -> vector<16x384xf32>
    %c0_39 = arith.constant 0 : index
    %c0_40 = arith.constant 0 : index
    %c0_41 = arith.constant 0 : index
    %86 = vector.load %arg8[%c0_39, %c0_40, %c0_41] : memref<2x384x256xbf16, #tpu.memory_space<vmem>>, vector<1x384x256xbf16>
    %87 = vector.shape_cast %86 : vector<1x384x256xbf16> to vector<384x256xbf16>
    %88 = arith.truncf %85 : vector<16x384xf32> to vector<16x384xbf16>
    %cst_42 = arith.constant dense<0.000000e+00> : vector<16x256xf32>
    %89 = tpu.matmul %88, %87, %cst_42 {dimension_numbers = #tpu.dot_dimension_numbers<[1], [0], [0], [1], [0, 0, 1, 1], [], []>} : vector<16x384xbf16>, vector<384x256xbf16>, vector<16x256xf32> -> vector<16x256xf32>
    %c0_43 = arith.constant 0 : index
    %c0_44 = arith.constant 0 : index
    %c0_45 = arith.constant 0 : index
    %90 = vector.load %arg9[%c0_43, %c0_44, %c0_45] : memref<2x1x256xf32, #tpu.memory_space<vmem>>, vector<1x1x256xf32>
    %91 = vector.shape_cast %90 : vector<1x1x256xf32> to vector<1x256xf32>
    %92 = vector.broadcast %91 : vector<1x256xf32> to vector<16x256xf32>
    %93 = arith.addf %89, %92 : vector<16x256xf32>
    %94 = arith.addf %66, %50 : vector<16x256xf32>
    %95 = arith.subf %94, %93 : vector<16x256xf32>
    %cst_46 = arith.constant 0.000000e+00 : f32
    %96 = vector.broadcast %cst_46 : f32 to vector<16x256xf32>
    %97 = arith.maximumf %95, %96 : vector<16x256xf32>
    %98 = vector.extract_strided_slice %67 {offsets = [1, 0], sizes = [1, 128], strides = [1, 1]} : vector<16x128xf32> to vector<1x128xf32>
    %99 = vector.extract_strided_slice %67 {offsets = [0, 0], sizes = [15, 128], strides = [1, 1]} : vector<16x128xf32> to vector<15x128xf32>
    %100 = tpu.concatenate %98, %99 in 0 : vector<1x128xf32>, vector<15x128xf32> -> vector<16x128xf32>
    %101 = vector.extract_strided_slice %67 {offsets = [1, 0], sizes = [15, 128], strides = [1, 1]} : vector<16x128xf32> to vector<15x128xf32>
    %102 = vector.extract_strided_slice %67 {offsets = [14, 0], sizes = [1, 128], strides = [1, 1]} : vector<16x128xf32> to vector<1x128xf32>
    %103 = tpu.concatenate %101, %102 in 0 : vector<15x128xf32>, vector<1x128xf32> -> vector<16x128xf32>
    %104 = tpu.concatenate %100, %67, %103 in 1 : vector<16x128xf32>, vector<16x128xf32>, vector<16x128xf32> -> vector<16x384xf32>
    %c1 = arith.constant 1 : index
    %c0_47 = arith.constant 0 : index
    %c0_48 = arith.constant 0 : index
    %105 = vector.load %arg5[%c1, %c0_47, %c0_48] : memref<2x384x384xbf16, #tpu.memory_space<vmem>>, vector<1x384x384xbf16>
    %106 = vector.shape_cast %105 : vector<1x384x384xbf16> to vector<384x384xbf16>
    %107 = arith.truncf %104 : vector<16x384xf32> to vector<16x384xbf16>
    %cst_49 = arith.constant dense<0.000000e+00> : vector<16x384xf32>
    %108 = tpu.matmul %107, %106, %cst_49 {dimension_numbers = #tpu.dot_dimension_numbers<[1], [0], [0], [1], [0, 0, 1, 1], [], []>} : vector<16x384xbf16>, vector<384x384xbf16>, vector<16x384xf32> -> vector<16x384xf32>
    %109 = vector.extract_strided_slice %108 {offsets = [0, 0], sizes = [16, 256], strides = [1, 1]} : vector<16x384xf32> to vector<16x256xf32>
    %c1_50 = arith.constant 1 : index
    %c0_51 = arith.constant 0 : index
    %c0_52 = arith.constant 0 : index
    %110 = vector.load %arg6[%c1_50, %c0_51, %c0_52] : memref<2x1x256xf32, #tpu.memory_space<vmem>>, vector<1x1x256xf32>
    %111 = vector.shape_cast %110 : vector<1x1x256xf32> to vector<1x256xf32>
    %112 = vector.broadcast %111 : vector<1x256xf32> to vector<16x256xf32>
    %113 = arith.addf %109, %112 : vector<16x256xf32>
    %114 = vector.extract_strided_slice %97 {offsets = [1, 0], sizes = [1, 256], strides = [1, 1]} : vector<16x256xf32> to vector<1x256xf32>
    %115 = vector.extract_strided_slice %97 {offsets = [0, 0], sizes = [15, 256], strides = [1, 1]} : vector<16x256xf32> to vector<15x256xf32>
    %116 = tpu.concatenate %114, %115 in 0 : vector<1x256xf32>, vector<15x256xf32> -> vector<16x256xf32>
    %117 = vector.extract_strided_slice %97 {offsets = [1, 0], sizes = [15, 256], strides = [1, 1]} : vector<16x256xf32> to vector<15x256xf32>
    %118 = vector.extract_strided_slice %97 {offsets = [14, 0], sizes = [1, 256], strides = [1, 1]} : vector<16x256xf32> to vector<1x256xf32>
    %119 = tpu.concatenate %117, %118 in 0 : vector<15x256xf32>, vector<1x256xf32> -> vector<16x256xf32>
    %120 = tpu.concatenate %116, %97, %119 in 1 : vector<16x256xf32>, vector<16x256xf32>, vector<16x256xf32> -> vector<16x768xf32>
    %c1_53 = arith.constant 1 : index
    %c0_54 = arith.constant 0 : index
    %c0_55 = arith.constant 0 : index
    %121 = vector.load %arg7[%c1_53, %c0_54, %c0_55] : memref<2x768x128xbf16, #tpu.memory_space<vmem>>, vector<1x768x128xbf16>
    %122 = vector.shape_cast %121 : vector<1x768x128xbf16> to vector<768x128xbf16>
    %123 = arith.truncf %120 : vector<16x768xf32> to vector<16x768xbf16>
    %cst_56 = arith.constant dense<0.000000e+00> : vector<16x128xf32>
    %124 = tpu.matmul %123, %122, %cst_56 {dimension_numbers = #tpu.dot_dimension_numbers<[1], [0], [0], [1], [0, 0, 1, 1], [], []>} : vector<16x768xbf16>, vector<768x128xbf16>, vector<16x128xf32> -> vector<16x128xf32>
    %125 = vector.extract_strided_slice %124 {offsets = [1, 0], sizes = [1, 128], strides = [1, 1]} : vector<16x128xf32> to vector<1x128xf32>
    %126 = vector.extract_strided_slice %124 {offsets = [0, 0], sizes = [15, 128], strides = [1, 1]} : vector<16x128xf32> to vector<15x128xf32>
    %127 = tpu.concatenate %125, %126 in 0 : vector<1x128xf32>, vector<15x128xf32> -> vector<16x128xf32>
    %128 = vector.extract_strided_slice %124 {offsets = [1, 0], sizes = [15, 128], strides = [1, 1]} : vector<16x128xf32> to vector<15x128xf32>
    %129 = vector.extract_strided_slice %124 {offsets = [14, 0], sizes = [1, 128], strides = [1, 1]} : vector<16x128xf32> to vector<1x128xf32>
    %130 = tpu.concatenate %128, %129 in 0 : vector<15x128xf32>, vector<1x128xf32> -> vector<16x128xf32>
    %131 = tpu.concatenate %127, %124, %130 in 1 : vector<16x128xf32>, vector<16x128xf32>, vector<16x128xf32> -> vector<16x384xf32>
    %c1_57 = arith.constant 1 : index
    %c0_58 = arith.constant 0 : index
    %c0_59 = arith.constant 0 : index
    %132 = vector.load %arg8[%c1_57, %c0_58, %c0_59] : memref<2x384x256xbf16, #tpu.memory_space<vmem>>, vector<1x384x256xbf16>
    %133 = vector.shape_cast %132 : vector<1x384x256xbf16> to vector<384x256xbf16>
    %134 = arith.truncf %131 : vector<16x384xf32> to vector<16x384xbf16>
    %cst_60 = arith.constant dense<0.000000e+00> : vector<16x256xf32>
    %135 = tpu.matmul %134, %133, %cst_60 {dimension_numbers = #tpu.dot_dimension_numbers<[1], [0], [0], [1], [0, 0, 1, 1], [], []>} : vector<16x384xbf16>, vector<384x256xbf16>, vector<16x256xf32> -> vector<16x256xf32>
    %c1_61 = arith.constant 1 : index
    %c0_62 = arith.constant 0 : index
    %c0_63 = arith.constant 0 : index
    %136 = vector.load %arg9[%c1_61, %c0_62, %c0_63] : memref<2x1x256xf32, #tpu.memory_space<vmem>>, vector<1x1x256xf32>
    %137 = vector.shape_cast %136 : vector<1x1x256xf32> to vector<1x256xf32>
    %138 = vector.broadcast %137 : vector<1x256xf32> to vector<16x256xf32>
    %139 = arith.addf %135, %138 : vector<16x256xf32>
    %140 = arith.addf %113, %97 : vector<16x256xf32>
    %141 = arith.subf %140, %139 : vector<16x256xf32>
    %cst_64 = arith.constant 0.000000e+00 : f32
    %142 = vector.broadcast %cst_64 : f32 to vector<16x256xf32>
    %143 = arith.maximumf %141, %142 : vector<16x256xf32>
    %c0_65 = arith.constant 0 : index
    %c0_66 = arith.constant 0 : index
    %c0_67 = arith.constant 0 : index
    %144 = vector.load %arg10[%c0_65, %c0_66, %c0_67] : memref<1x16x256xf32, #tpu.memory_space<vmem>>, vector<1x16x256xf32>
    %145 = vector.shape_cast %144 : vector<1x16x256xf32> to vector<16x256xf32>
    %146 = vector.shape_cast %143 : vector<16x256xf32> to vector<1x16x256xf32>
    tpu.vector_store %arg10[%c0_65, %c0_66, %c0_67], %146 {strides = array<i32>} : memref<1x16x256xf32, #tpu.memory_space<vmem>>, vector<1x16x256xf32>,
    return
  }
  func.func @transform_0(%arg0: i32) -> (i32, i32, i32) {
    %c0_i32 = arith.constant 0 : i32
    %c0_i32_0 = arith.constant 0 : i32
    %c0_i32_1 = arith.constant 0 : i32
    return %arg0, %c0_i32, %c0_i32_0 : i32, i32, i32
  }
  func.func @transform_1(%arg0: i32) -> (i32, i32) {
    %c0_i32 = arith.constant 0 : i32
    %c0_i32_0 = arith.constant 0 : i32
    %c0_i32_1 = arith.constant 0 : i32
    return %c0_i32, %c0_i32_0 : i32, i32
  }
  func.func @transform_2(%arg0: i32) -> (i32, i32) {
    %c0_i32 = arith.constant 0 : i32
    %c0_i32_0 = arith.constant 0 : i32
    %c0_i32_1 = arith.constant 0 : i32
    return %c0_i32, %c0_i32_0 : i32, i32
  }
  func.func @transform_3(%arg0: i32) -> (i32, i32) {
    %c0_i32 = arith.constant 0 : i32
    %c0_i32_0 = arith.constant 0 : i32
    %c0_i32_1 = arith.constant 0 : i32
    return %c0_i32, %c0_i32_0 : i32, i32
  }
  func.func @transform_4(%arg0: i32) -> (i32, i32, i32) {
    %c0_i32 = arith.constant 0 : i32
    %c0_i32_0 = arith.constant 0 : i32
    %c0_i32_1 = arith.constant 0 : i32
    %c0_i32_2 = arith.constant 0 : i32
    return %c0_i32, %c0_i32_0, %c0_i32_1 : i32, i32, i32
  }
  func.func @transform_5(%arg0: i32) -> (i32, i32, i32) {
    %c0_i32 = arith.constant 0 : i32
    %c0_i32_0 = arith.constant 0 : i32
    %c0_i32_1 = arith.constant 0 : i32
    %c0_i32_2 = arith.constant 0 : i32
    return %c0_i32, %c0_i32_0, %c0_i32_1 : i32, i32, i32
  }
  func.func @transform_6(%arg0: i32) -> (i32, i32, i32) {
    %c0_i32 = arith.constant 0 : i32
    %c0_i32_0 = arith.constant 0 : i32
    %c0_i32_1 = arith.constant 0 : i32
    %c0_i32_2 = arith.constant 0 : i32
    return %c0_i32, %c0_i32_0, %c0_i32_1 : i32, i32, i32
  }
  func.func @transform_7(%arg0: i32) -> (i32, i32, i32) {
    %c0_i32 = arith.constant 0 : i32
    %c0_i32_0 = arith.constant 0 : i32
    %c0_i32_1 = arith.constant 0 : i32
    %c0_i32_2 = arith.constant 0 : i32
    return %c0_i32, %c0_i32_0, %c0_i32_1 : i32, i32, i32
  }
  func.func @transform_8(%arg0: i32) -> (i32, i32, i32) {
    %c0_i32 = arith.constant 0 : i32
    %c0_i32_0 = arith.constant 0 : i32
    %c0_i32_1 = arith.constant 0 : i32
    %c0_i32_2 = arith.constant 0 : i32
    return %c0_i32, %c0_i32_0, %c0_i32_1 : i32, i32, i32
  }
  func.func @transform_9(%arg0: i32) -> (i32, i32, i32) {
    %c0_i32 = arith.constant 0 : i32
    %c0_i32_0 = arith.constant 0 : i32
    %c0_i32_1 = arith.constant 0 : i32
    return %arg0, %c0_i32, %c0_i32_0 : i32, i32, i32
  }
}

</mosaic_0001>

<llo_original>
// kernel: invrs_forward.1
$region0: #{invrs_forward.1}
  #allocation0 [shape = 'u32[]', space=smem, size = 0x4, offset = 0x4, fixed_abs, tag = 'smem constant byte address 0x4 - core index']
  #allocation1 [shape = 'u32[144,128]{1,0:T(1,128)}', space=vmem, size = 0x12000, scoped, tag = 'internal scratch']
  #allocation2 [shape = 'f32[16,1920]{1,0:T(8,128)}', space=vmem, size = 0x1e000, scoped, tag = 'scratch operand']
  %s0 = inlined_call_operand.vmem [shape: f32[2,30,128], index: 0, kind: input, shape index: {}]
  %s1 = inlined_call_operand.vmem [shape: bf16[1920,128], index: 1, kind: input, shape index: {}]
  %s2 = inlined_call_operand.hbm [shape: bf16[384,256], index: 2, kind: input, shape index: {}]
  %s3 = inlined_call_operand.vmem [shape: f32[1,256], index: 3, kind: input, shape index: {}]
  %s4 = inlined_call_operand.hbm [shape: bf16[2,384,384], index: 4, kind: input, shape index: {}]
  %s5 = inlined_call_operand.vmem [shape: f32[2,1,256], index: 5, kind: input, shape index: {}]
  %s6 = inlined_call_operand.hbm [shape: bf16[2,768,128], index: 6, kind: input, shape index: {}]
  %s7 = inlined_call_operand.hbm [shape: bf16[2,384,256], index: 7, kind: input, shape index: {}]
  %s8 = inlined_call_operand.vmem [shape: f32[2,1,256], index: 8, kind: input, shape index: {}]
  %s9 = inlined_call_operand.vmem [shape: f32[2,16,256], index: 9, kind: output, shape index: {}]
  %s10 = sld [smem:[#allocation0]]
  $region85: #{invrs_forward.1} parent=0
    _
  %s12 = ssub.s32 1, %s10
  %s13 = scalar_select 0, %s12, %s10
  $region1: #{invrs_forward.1} parent=0
    #allocation3 [shape = 'u8[196608]{0}', space=vmem, size = 0x30000, scoped, tag = 'input window, operand 2, single buffered']
    #allocation4 [shape = 's32[2]{0}', space=sflag, size = 0x8, scoped, tag = 'scoped memory for invrs_forward.1']
    #allocation5 [shape = 'u8[589824]{0}', space=vmem, size = 0x90000, scoped, tag = 'input window, operand 4, single buffered']
    #allocation6 [shape = 's32[1]{0}', space=sflag, size = 0x4, scoped, tag = 'scoped memory for invrs_forward.1']
    #allocation7 [shape = 'u8[393216]{0}', space=vmem, size = 0x60000, scoped, tag = 'input window, operand 6, single buffered']
    #allocation8 [shape = 'u8[393216]{0}', space=vmem, size = 0x60000, scoped, tag = 'input window, operand 7, single buffered']
    #allocation9 [shape = 's32[1]{0}', space=sflag, size = 0x4, scoped, tag = 'scoped memory for invrs_forward.1']
    %14 = vsyncpa [#allocation4], 0
    %15 = vsyncpa [#allocation6], 0
    %16 = vsyncpa [#allocation9], 0
    loop: start=0, step=1, limit=4
    $region2: #{invrs_forward.1} parent=1 // loop_pre_header
      _
    $region3: #{invrs_forward.1} parent=1 // loop_header
      %s18 = sphi 0, %s22
      %p19 = scmp.ge.s32.totalorder %s18, 4
      %s28 = sphi 0, %s30
      %s31 = sphi 0, %s28
      %s32 = sphi 0, %s31
      %s48 = sphi 0, %s32
      %s52 = sphi 0, %s52
      %s54 = sphi 0, %s52
      %s55 = sphi 0, %s54
      %s69 = sphi 0, %s55
      %s73 = sphi 0, %s73
      %s75 = sphi 0, %s73
      %s76 = sphi 0, %s75
      %s90 = sphi 0, %s76
      %s94 = sphi 0, %s94
      %s96 = sphi 0, %s94
      %s97 = sphi 0, %s96
      %s111 = sphi 0, %s97
      %s115 = sphi 0, %s115
      %s117 = sphi 0, %s115
      %s118 = sphi 0, %s117
      %s132 = sphi 0, %s118
      %s136 = sphi 0, %s136
      %s138 = sphi 0, %s136
      %s139 = sphi 0, %s138
      %s153 = sphi 0, %s139
      %s157 = sphi 0, %s157
      %s159 = sphi 0, %s157
      %s160 = sphi 0, %s159
      %s174 = sphi 0, %s160
      %s178 = sphi 0, %s178
      %s180 = sphi 0, %s178
      %s181 = sphi 0, %s180
      %s195 = sphi 0, %s181
      %s199 = sphi 0, %s199
      %s201 = sphi 0, %s199
      %s202 = sphi 0, %s201
      %s216 = sphi 0, %s202
      %s222 = sphi 0, %s224
      %s225 = sphi 0, %s222
      %s226 = sphi 0, %s225
      %s242 = sphi 0, %s226
    $region4: #{invrs_forward.1} parent=1 // loop_header_branch
      %21 = sbr.rel (%p19) target = $region8
    $region5: #{invrs_forward.1} parent=1 // loop_body
      %s23 = ssub.s32 %s18, 1
      %s24 = ssub.s32 %s18, 2
      %s25 = sadd.s32 %s18, 1
      %s26 = ssub.s32 %s18, %s25
      %p27 = scmp.eq.s32.totalorder %s26, 0
      %s29 = sadd.s32 %s28, 1
      %s30 = scalar_select %p27, %s28, %s29
      %p33 = pneg %p27
      %p34 = scmp.eq.s32.totalorder %s18, 1
      %p35 = por %p33, %p34
      %p36 = scmp.ne.s32.totalorder %s28, %s31
      %p37 = scmp.eq.s32.totalorder %s18, 0
      %p38 = por %p36, %p37
      %p39 = scmp.ne.s32.totalorder %s28, %s31
      %p40 = scmp.eq.s32.totalorder %s23, 1
      %p41 = por %p39, %p40
      %p42 = scmp.ne.s32.totalorder %s31, %s32
      %p43 = scmp.eq.s32.totalorder %s23, 0
      %p44 = por %p42, %p43
      %p45 = scmp.ne.s32.totalorder %s31, %s32
      %p46 = scmp.eq.s32.totalorder %s24, 1
      %p47 = por %p45, %p46
      %p49 = scmp.ne.s32.totalorder %s32, %s48
      %p50 = scmp.eq.s32.totalorder %s24, 0
      %p51 = por %p49, %p50
      %s53 = sadd.s32 %s52, 1
      %p56 = scmp.eq.s32.totalorder %s18, 1
      %p57 = scmp.ne.s32.totalorder %s52, %s54
      %p58 = scmp.eq.s32.totalorder %s18, 0
      %p59 = por %p57, %p58
      %p60 = scmp.ne.s32.totalorder %s52, %s54
      %p61 = scmp.eq.s32.totalorder %s23, 1
      %p62 = por %p60, %p61
      %p63 = scmp.ne.s32.totalorder %s54, %s55
      %p64 = scmp.eq.s32.totalorder %s23, 0
      %p65 = por %p63, %p64
      %p66 = scmp.ne.s32.totalorder %s54, %s55
      %p67 = scmp.eq.s32.totalorder %s24, 1
      %p68 = por %p66, %p67
      %p70 = scmp.ne.s32.totalorder %s55, %s69
      %p71 = scmp.eq.s32.totalorder %s24, 0
      %p72 = por %p70, %p71
      %s74 = sadd.s32 %s73, 1
      %p77 = scmp.eq.s32.totalorder %s18, 1
      %p78 = scmp.ne.s32.totalorder %s73, %s75
      %p79 = scmp.eq.s32.totalorder %s18, 0
      %p80 = por %p78, %p79
      %p81 = scmp.ne.s32.totalorder %s73, %s75
      %p82 = scmp.eq.s32.totalorder %s23, 1
      %p83 = por %p81, %p82
      %p84 = scmp.ne.s32.totalorder %s75, %s76
      %p85 = scmp.eq.s32.totalorder %s23, 0
      %p86 = por %p84, %p85
      %p87 = scmp.ne.s32.totalorder %s75, %s76
      %p88 = scmp.eq.s32.totalorder %s24, 1
      %p89 = por %p87, %p88
      %p91 = scmp.ne.s32.totalorder %s76, %s90
      %p92 = scmp.eq.s32.totalorder %s24, 0
      %p93 = por %p91, %p92
      %s95 = sadd.s32 %s94, 1
      %p98 = scmp.eq.s32.totalorder %s18, 1
      %p99 = scmp.ne.s32.totalorder %s94, %s96
      %p100 = scmp.eq.s32.totalorder %s18, 0
      %p101 = por %p99, %p100
      %p102 = scmp.ne.s32.totalorder %s94, %s96
      %p103 = scmp.eq.s32.totalorder %s23, 1
      %p104 = por %p102, %p103
      %p105 = scmp.ne.s32.totalorder %s96, %s97
      %p106 = scmp.eq.s32.totalorder %s23, 0
      %p107 = por %p105, %p106
      %p108 = scmp.ne.s32.totalorder %s96, %s97
      %p109 = scmp.eq.s32.totalorder %s24, 1
      %p110 = por %p108, %p109
      %p112 = scmp.ne.s32.totalorder %s97, %s111
      %p113 = scmp.eq.s32.totalorder %s24, 0
      %p114 = por %p112, %p113
      %s116 = sadd.s32 %s115, 1
      %p119 = scmp.eq.s32.totalorder %s18, 1
      %p120 = scmp.ne.s32.totalorder %s115, %s117
      %p121 = scmp.eq.s32.totalorder %s18, 0
      %p122 = por %p120, %p121
      %p123 = scmp.ne.s32.totalorder %s115, %s117
      %p124 = scmp.eq.s32.totalorder %s23, 1
      %p125 = por %p123, %p124
      %p126 = scmp.ne.s32.totalorder %s117, %s118
      %p127 = scmp.eq.s32.totalorder %s23, 0
      %p128 = por %p126, %p127
      %p129 = scmp.ne.s32.totalorder %s117, %s118
      %p130 = scmp.eq.s32.totalorder %s24, 1
      %p131 = por %p129, %p130
      %p133 = scmp.ne.s32.totalorder %s118, %s132
      %p134 = scmp.eq.s32.totalorder %s24, 0
      %p135 = por %p133, %p134
      %s137 = sadd.s32 %s136, 1
      %p140 = scmp.eq.s32.totalorder %s18, 1
      %p141 = scmp.ne.s32.totalorder %s136, %s138
      %p142 = scmp.eq.s32.totalorder %s18, 0
      %p143 = por %p141, %p142
      %p144 = scmp.ne.s32.totalorder %s136, %s138
      %p145 = scmp.eq.s32.totalorder %s23, 1
      %p146 = por %p144, %p145
      %p147 = scmp.ne.s32.totalorder %s138, %s139
      %p148 = scmp.eq.s32.totalorder %s23, 0
      %p149 = por %p147, %p148
      %p150 = scmp.ne.s32.totalorder %s138, %s139
      %p151 = scmp.eq.s32.totalorder %s24, 1
      %p152 = por %p150, %p151
      %p154 = scmp.ne.s32.totalorder %s139, %s153
      %p155 = scmp.eq.s32.totalorder %s24, 0
      %p156 = por %p154, %p155
      %s158 = sadd.s32 %s157, 1
      %p161 = scmp.eq.s32.totalorder %s18, 1
      %p162 = scmp.ne.s32.totalorder %s157, %s159
      %p163 = scmp.eq.s32.totalorder %s18, 0
      %p164 = por %p162, %p163
      %p165 = scmp.ne.s32.totalorder %s157, %s159
      %p166 = scmp.eq.s32.totalorder %s23, 1
      %p167 = por %p165, %p166
      %p168 = scmp.ne.s32.totalorder %s159, %s160
      %p169 = scmp.eq.s32.totalorder %s23, 0
      %p170 = por %p168, %p169
      %p171 = scmp.ne.s32.totalorder %s159, %s160
      %p172 = scmp.eq.s32.totalorder %s24, 1
      %p173 = por %p171, %p172
      %p175 = scmp.ne.s32.totalorder %s160, %s174
      %p176 = scmp.eq.s32.totalorder %s24, 0
      %p177 = por %p175, %p176
      %s179 = sadd.s32 %s178, 1
      %p182 = scmp.eq.s32.totalorder %s18, 1
      %p183 = scmp.ne.s32.totalorder %s178, %s180
      %p184 = scmp.eq.s32.totalorder %s18, 0
      %p185 = por %p183, %p184
      %p186 = scmp.ne.s32.totalorder %s178, %s180
      %p187 = scmp.eq.s32.totalorder %s23, 1
      %p188 = por %p186, %p187
      %p189 = scmp.ne.s32.totalorder %s180, %s181
      %p190 = scmp.eq.s32.totalorder %s23, 0
      %p191 = por %p189, %p190
      %p192 = scmp.ne.s32.totalorder %s180, %s181
      %p193 = scmp.eq.s32.totalorder %s24, 1
      %p194 = por %p192, %p193
      %p196 = scmp.ne.s32.totalorder %s181, %s195
      %p197 = scmp.eq.s32.totalorder %s24, 0
      %p198 = por %p196, %p197
      %s200 = sadd.s32 %s199, 1
      %p203 = scmp.eq.s32.totalorder %s18, 1
      %p204 = scmp.ne.s32.totalorder %s199, %s201
      %p205 = scmp.eq.s32.totalorder %s18, 0
      %p206 = por %p204, %p205
      %p207 = scmp.ne.s32.totalorder %s199, %s201
      %p208 = scmp.eq.s32.totalorder %s23, 1
      %p209 = por %p207, %p208
      %p210 = scmp.ne.s32.totalorder %s201, %s202
      %p211 = scmp.eq.s32.totalorder %s23, 0
      %p212 = por %p210, %p211
      %p213 = scmp.ne.s32.totalorder %s201, %s202
      %p214 = scmp.eq.s32.totalorder %s24, 1
      %p215 = por %p213, %p214
      %p217 = scmp.ne.s32.totalorder %s202, %s216
      %p218 = scmp.eq.s32.totalorder %s24, 0
      %p219 = por %p217, %p218
      %s220 = ssub.s32 %s18, %s25
      %p221 = scmp.eq.s32.totalorder %s220, 0
      %s223 = sadd.s32 %s222, 1
      %s224 = scalar_select %p221, %s222, %s223
      %p227 = pneg %p221
      %p228 = scmp.eq.s32.totalorder %s18, 1
      %p229 = por %p227, %p228
      %p230 = scmp.ne.s32.totalorder %s222, %s225
      %p231 = scmp.eq.s32.totalorder %s18, 0
      %p232 = por %p230, %p231
      %p233 = scmp.ne.s32.totalorder %s222, %s225
      %p234 = scmp.eq.s32.totalorder %s23, 1
      %p235 = por %p233, %p234
      %p236 = scmp.ne.s32.totalorder %s225, %s226
      %p237 = scmp.eq.s32.totalorder %s23, 0
      %p238 = por %p236, %p237
      %p239 = scmp.ne.s32.totalorder %s225, %s226
      %p240 = scmp.eq.s32.totalorder %s24, 1
      %p241 = por %p239, %p240
      %p243 = scmp.ne.s32.totalorder %s226, %s242
      %p244 = scmp.eq.s32.totalorder %s24, 0
      %p245 = por %p243, %p244
      %p246 = scmp.le.s32.totalorder 1, %s18
      %p247 = scmp.lt.s32.totalorder %s18, 3
      %p248 = pnand %p246, %p247
      %p249 = pneg %p248
      // Predicated region
      $region9: #{invrs_forward.1} parent=5 // pred_check
        _
      $region10: #{invrs_forward.1} parent=5 // pred_check_branch
        %251 = sbr.rel (%p248) target = $region12
      $region11: #{invrs_forward.1} parent=5 // pred_region
        %s252 = ssub.s32 %s18, 1
        // Predicated region
        $region13: #{invrs_forward.1} parent=11 // pred_check
          %p253 = pneg %p65
        $region14: #{invrs_forward.1} parent=11 // pred_check_branch
          %255 = sbr.rel (%p253) target = $region16
        $region15: #{invrs_forward.1} parent=11 // pred_region
          _
        $region16: #{invrs_forward.1} parent=11 // pred_fallthru
          _
        // Predicated region
        $region17: #{invrs_forward.1} parent=11 // pred_check
          %p256 = pneg %p86
        $region18: #{invrs_forward.1} parent=11 // pred_check_branch
          %258 = sbr.rel (%p256) target = $region20
        $region19: #{invrs_forward.1} parent=11 // pred_region
          %s260 = ssub.s32 6144, 6144
          %261 = vsyncadd [#allocation4], %s260
          %s262 = sshll.u32 [#allocation3], 4
          %s263 = int_to_ptr.vmem [resolvable:$true] %s262
          %268 = dma.hbm_to_vmem [thread:$0]  %s2, 6144, %s263, [#allocation4], 128, 128, 8
        $region20: #{invrs_forward.1} parent=11 // pred_fallthru
          _
        // Predicated region
        $region21: #{invrs_forward.1} parent=11 // pred_check
          %p269 = pneg %p107
        $region22: #{invrs_forward.1} parent=11 // pred_check_branch
          %271 = sbr.rel (%p269) target = $region24
        $region23: #{invrs_forward.1} parent=11 // pred_region
          _
        $region24: #{invrs_forward.1} parent=11 // pred_fallthru
          _
        // Predicated region
        $region25: #{invrs_forward.1} parent=11 // pred_check
          %p272 = pneg %p128
        $region26: #{invrs_forward.1} parent=11 // pred_check_branch
          %274 = sbr.rel (%p272) target = $region28
        $region27: #{invrs_forward.1} parent=11 // pred_region
          %s276 = ssub.s32 18432, 18432
          %277 = vsyncadd [#allocation6], %s276
          %s278 = sshll.u32 [#allocation5], 4
          %s279 = int_to_ptr.vmem [resolvable:$true] %s278
          %284 = dma.hbm_to_vmem [thread:$0]  %s4, 18432, %s279, [#allocation6], 192, 192, 12
        $region28: #{invrs_forward.1} parent=11 // pred_fallthru
          _
        // Predicated region
        $region29: #{invrs_forward.1} parent=11 // pred_check
          %p285 = pneg %p149
        $region30: #{invrs_forward.1} parent=11 // pred_check_branch
          %287 = sbr.rel (%p285) target = $region32
        $region31: #{invrs_forward.1} parent=11 // pred_region
          _
        $region32: #{invrs_forward.1} parent=11 // pred_fallthru
          _
        // Predicated region
        $region33: #{invrs_forward.1} parent=11 // pred_check
          %p288 = pneg %p170
        $region34: #{invrs_forward.1} parent=11 // pred_check_branch
          %290 = sbr.rel (%p288) target = $region36
        $region35: #{invrs_forward.1} parent=11 // pred_region
          %s292 = ssub.s32 12288, 12288
          %293 = vsyncadd [#allocation6], %s292
          %s294 = sshll.u32 [#allocation7], 4
          %s295 = int_to_ptr.vmem [resolvable:$true] %s294
          %300 = dma.hbm_to_vmem [thread:$0]  %s6, 12288, %s295, [#allocation6], 64, 64, 4
        $region36: #{invrs_forward.1} parent=11 // pred_fallthru
          _
        // Predicated region
        $region37: #{invrs_forward.1} parent=11 // pred_check
          %p301 = pneg %p191
        $region38: #{invrs_forward.1} parent=11 // pred_check_branch
          %303 = sbr.rel (%p301) target = $region40
        $region39: #{invrs_forward.1} parent=11 // pred_region
          %s305 = ssub.s32 12288, 12288
          %306 = vsyncadd [#allocation9], %s305
          %s307 = sshll.u32 [#allocation8], 4
          %s308 = int_to_ptr.vmem [resolvable:$true] %s307
          %313 = dma.hbm_to_vmem [thread:$0]  %s7, 12288, %s308, [#allocation9], 128, 128, 8
        $region40: #{invrs_forward.1} parent=11 // pred_fallthru
          _
        // Predicated region
        $region41: #{invrs_forward.1} parent=11 // pred_check
          %p314 = pneg %p212
        $region42: #{invrs_forward.1} parent=11 // pred_check_branch
          %316 = sbr.rel (%p314) target = $region44
        $region43: #{invrs_forward.1} parent=11 // pred_region
          _
        $region44: #{invrs_forward.1} parent=11 // pred_fallthru
          _
      $region12: #{invrs_forward.1} parent=5 // pred_fallthru
        _
      %p317 = scmp.lt.s32.totalorder %s18, 2
      // Predicated region
      $region45: #{invrs_forward.1} parent=5 // pred_check
        %p318 = pneg %p317
      $region46: #{invrs_forward.1} parent=5 // pred_check_branch
        %320 = sbr.rel (%p318) target = $region48
      $region47: #{invrs_forward.1} parent=5 // pred_region
        // Predicated region
        $region49: #{invrs_forward.1} parent=47 // pred_check
          %p321 = pneg %p38
        $region50: #{invrs_forward.1} parent=47 // pred_check_branch
          %323 = sbr.rel (%p321) target = $region52
        $region51: #{invrs_forward.1} parent=47 // pred_region
          %p324 = scmp.lt.s32.totalorder %s18, 1
          %s325 = scalar_select %p324, %s18, 1
          %s326 = smul.addr %s325, 4
          %s327 = smul.addr %s326, 8
          %s328 = scalar_lea.vmem %s0, %s327
        $region52: #{invrs_forward.1} parent=47 // pred_fallthru
          _
      $region48: #{invrs_forward.1} parent=5 // pred_fallthru
        _
      %p329 = scmp.le.s32.totalorder 1, %s18
      %p330 = scmp.lt.s32.totalorder %s18, 3
      %p331 = pnand %p329, %p330
      %p332 = pneg %p331
      // Predicated region
      $region53: #{invrs_forward.1} parent=5 // pred_check
        _
      $region54: #{invrs_forward.1} parent=5 // pred_check_branch
        %334 = sbr.rel (%p331) target = $region56
      $region55: #{invrs_forward.1} parent=5 // pred_region
        %s335 = ssub.s32 %s18, 1
        // Predicated region
        $region57: #{invrs_forward.1} parent=55 // pred_check
          %p336 = pneg %p86
        $region58: #{invrs_forward.1} parent=55 // pred_check_branch
          %338 = sbr.rel (%p336) target = $region60
        $region59: #{invrs_forward.1} parent=55 // pred_region
          %339 = dma.done [#allocation4], 6144
        $region60: #{invrs_forward.1} parent=55 // pred_fallthru
          _
        // Predicated region
        $region61: #{invrs_forward.1} parent=55 // pred_check
          %p340 = pneg %p128
        $region62: #{invrs_forward.1} parent=55 // pred_check_branch
          %342 = sbr.rel (%p340) target = $region64
        $region63: #{invrs_forward.1} parent=55 // pred_region
          %343 = dma.done [#allocation6], 18432
        $region64: #{invrs_forward.1} parent=55 // pred_fallthru
          _
        // Predicated region
        $region65: #{invrs_forward.1} parent=55 // pred_check
          %p344 = pneg %p170
        $region66: #{invrs_forward.1} parent=55 // pred_check_branch
          %346 = sbr.rel (%p344) target = $region68
        $region67: #{invrs_forward.1} parent=55 // pred_region
          %347 = dma.done [#allocation6], 12288
        $region68: #{invrs_forward.1} parent=55 // pred_fallthru
          _
        // Predicated region
        $region69: #{invrs_forward.1} parent=55 // pred_check
          %p348 = pneg %p191
        $region70: #{invrs_forward.1} parent=55 // pred_check_branch
          %350 = sbr.rel (%p348) target = $region72
        $region71: #{invrs_forward.1} parent=55 // pred_region
          %351 = dma.done [#allocation9], 12288
        $region72: #{invrs_forward.1} parent=55 // pred_fallthru
          _
        %p352 = scmp.lt.s32.totalorder %s23, 1
        %s353 = scalar_select %p352, %s23, 1
        %s354 = smul.addr %s353, 4
        %s355 = smul.addr %s354, 8
        %s356 = scalar_lea.vmem %s0, %s355
        %p357 = pneg %p44
        %p358 = pneg %p41
        %p359 = pneg %p65
        %p360 = pneg %p62
        %p361 = pneg %p86
        %p362 = pneg %p83
        %p363 = pneg %p107
        %p364 = pneg %p104
        %p365 = pneg %p128
        %p366 = pneg %p125
        %p367 = pneg %p149
        %p368 = pneg %p146
        %p369 = pneg %p170
        %p370 = pneg %p167
        %p371 = pneg %p191
        %p372 = pneg %p188
        %p373 = pneg %p212
        %p374 = pneg %p209
        %p375 = pneg %p238
        %p376 = pneg %p235
        %p377 = scmp.lt.s32.totalorder %s23, 1
        %s378 = scalar_select %p377, %s23, 1
        %s379 = smul.addr %s378, 4
        %s380 = smul.addr %s379, 8
        %s381 = scalar_lea.vmem %s9, %s380
        %p382 = scmp.lt.s32.totalorder %s23, 1
        %s383 = scalar_select %p382, %s23, 1
        %s384 = smul.addr %s383, 4
        %s385 = smul.addr %s384, 8
        %s386 = scalar_lea.vmem %s0, %s385
        %p387 = scmp.lt.s32.totalorder %s23, 1
        %s388 = scalar_select %p387, %s23, 1
        %s389 = smul.addr %s388, 4
        %s390 = smul.addr %s389, 8
        %s391 = scalar_lea.vmem %s9, %s390
        %v393 = vld [vmem:[%s386] sm:$0xff]
        %v394 = vld [vmem:[%s386 + $0x8] sm:$0xff]
        %v395 = vld [vmem:[%s386 + $0x10] sm:$0xff]
        %v396 = vld [vmem:[%s386 + $0x18] sm:$0x3f]
        %397 = vst [vmem:[#allocation2] sm:$0xff] %v393
        %398 = vst [vmem:[#allocation2 + $0x78] sm:$0xff] %v394
        %vm402 = vcmask 1046528
        %v403 = vrot.slane %v393, 1
        %v404 = vrot.slane %v394, 1
        %v405 = vsel %vm402, %v403, %v404
        %v406 = vrot.slane %v395, 1
        %v407 = vsel %vm402, %v404, %v406
        %410 = vst [vmem:[#allocation2 + $0x8] sm:$0xff] %v405
        %411 = vst [vmem:[#allocation2 + $0x80] sm:$0xff] %v407
        %vm412 = vcmask 1045504
        %v413 = vrot.slane %v393, 2
        %v414 = vrot.slane %v394, 2
        %v415 = vsel %vm412, %v413, %v414
        %v416 = vrot.slane %v395, 2
        %v417 = vsel %vm412, %v414, %v416
        %420 = vst [vmem:[#allocation2 + $0x10] sm:$0xff] %v415
        %421 = vst [vmem:[#allocation2 + $0x88] sm:$0xff] %v417
        %vm422 = vcmask 1044480
        %v423 = vrot.slane %v393, 3
        %v424 = vrot.slane %v394, 3
        %v425 = vsel %vm422, %v423, %v424
        %v426 = vrot.slane %v395, 3
        %v427 = vsel %vm422, %v424, %v426
        %430 = vst [vmem:[#allocation2 + $0x18] sm:$0xff] %v425
        %431 = vst [vmem:[#allocation2 + $0x90] sm:$0xff] %v427
        %vm432 = vcmask 1043456
        %v433 = vrot.slane %v393, 4
        %v434 = vrot.slane %v394, 4
        %v435 = vsel %vm432, %v433, %v434
        %v436 = vrot.slane %v395, 4
        %v437 = vsel %vm432, %v434, %v436
        %440 = vst [vmem:[#allocation2 + $0x20] sm:$0xff] %v435
        %441 = vst [vmem:[#allocation2 + $0x98] sm:$0xff] %v437
        %vm442 = vcmask 1042432
        %v443 = vrot.slane %v393, 5
        %v444 = vrot.slane %v394, 5
        %v445 = vsel %vm442, %v443, %v444
        %v446 = vrot.slane %v395, 5
        %v447 = vsel %vm442, %v444, %v446
        %450 = vst [vmem:[#allocation2 + $0x28] sm:$0xff] %v445
        %451 = vst [vmem:[#allocation2 + $0xa0] sm:$0xff] %v447
        %vm452 = vcmask 1041408
        %v453 = vrot.slane %v393, 6
        %v454 = vrot.slane %v394, 6
        %v455 = vsel %vm452, %v453, %v454
        %v456 = vrot.slane %v395, 6
        %v457 = vsel %vm452, %v454, %v456
        %460 = vst [vmem:[#allocation2 + $0x30] sm:$0xff] %v455
        %461 = vst [vmem:[#allocation2 + $0xa8] sm:$0xff] %v457
        %vm462 = vcmask 1040384
        %v463 = vrot.slane %v393, 7
        %v464 = vrot.slane %v394, 7
        %v465 = vsel %vm462, %v463, %v464
        %v466 = vrot.slane %v395, 7
        %v467 = vsel %vm462, %v464, %v466
        %470 = vst [vmem:[#allocation2 + $0x38] sm:$0xff] %v465
        %471 = vst [vmem:[#allocation2 + $0xb0] sm:$0xff] %v467
        %472 = vst [vmem:[#allocation2 + $0x40] sm:$0xff] %v394
        %473 = vst [vmem:[#allocation2 + $0xb8] sm:$0xff] %v395
        %v475 = vrot.slane %v396, 1
        %v476 = vsel %vm402, %v406, %v475
        %478 = vst [vmem:[#allocation2 + $0x48] sm:$0xff] %v407
        %479 = vst [vmem:[#allocation2 + $0xc0] sm:$0xff] %v476
        %v480 = vrot.slane %v396, 2
        %v481 = vsel %vm412, %v416, %v480
        %483 = vst [vmem:[#allocation2 + $0x50] sm:$0xff] %v417
        %484 = vst [vmem:[#allocation2 + $0xc8] sm:$0xff] %v481
        %v485 = vrot.slane %v396, 3
        %v486 = vsel %vm422, %v426, %v485
        %488 = vst [vmem:[#allocation2 + $0x58] sm:$0xff] %v427
        %489 = vst [vmem:[#allocation2 + $0xd0] sm:$0xff] %v486
        %v490 = vrot.slane %v396, 4
        %v491 = vsel %vm432, %v436, %v490
        %493 = vst [vmem:[#allocation2 + $0x60] sm:$0xff] %v437
        %494 = vst [vmem:[#allocation2 + $0xd8] sm:$0xff] %v491
        %v495 = vrot.slane %v396, 5
        %v496 = vsel %vm442, %v446, %v495
        %498 = vst [vmem:[#allocation2 + $0x68] sm:$0xff] %v447
        %499 = vst [vmem:[#allocation2 + $0xe0] sm:$0xff] %v496
        %v500 = vrot.slane %v396, 6
        %v501 = vsel %vm452, %v456, %v500
        %503 = vst [vmem:[#allocation2 + $0x70] sm:$0xff] %v457
        %504 = vst [vmem:[#allocation2 + $0xe8] sm:$0xff] %v501
        %v505 = vld [vmem:[#allocation2] sm:$0xff]
        %v506 = vld [vmem:[#allocation2 + $0x8] sm:$0xff]
        %v507 = vld [vmem:[#allocation2 + $0x10] sm:$0xff]
        %v508 = vld [vmem:[#allocation2 + $0x18] sm:$0xff]
        %v509 = vld [vmem:[#allocation2 + $0x20] sm:$0xff]
        %v510 = vld [vmem:[#allocation2 + $0x28] sm:$0xff]
        %v511 = vld [vmem:[#allocation2 + $0x30] sm:$0xff]
        %v512 = vld [vmem:[#allocation2 + $0x38] sm:$0xff]
        %v513 = vld [vmem:[#allocation2 + $0x40] sm:$0xff]
        %v514 = vld [vmem:[#allocation2 + $0x48] sm:$0xff]
        %v515 = vld [vmem:[#allocation2 + $0x50] sm:$0xff]
        %v516 = vld [vmem:[#allocation2 + $0x58] sm:$0xff]
        %v517 = vld [vmem:[#allocation2 + $0x60] sm:$0xff]
        %v518 = vld [vmem:[#allocation2 + $0x68] sm:$0xff]
        %v519 = vld [vmem:[#allocation2 + $0x70] sm:$0xff]
        %v520 = vld [vmem:[#allocation2 + $0x78] sm:$0xff]
        %v521 = vld [vmem:[#allocation2 + $0x80] sm:$0xff]
        %v522 = vld [vmem:[#allocation2 + $0x88] sm:$0xff]
        %v523 = vld [vmem:[#allocation2 + $0x90] sm:$0xff]
        %v524 = vld [vmem:[#allocation2 + $0x98] sm:$0xff]
        %v525 = vld [vmem:[#allocation2 + $0xa0] sm:$0xff]
        %v526 = vld [vmem:[#allocation2 + $0xa8] sm:$0xff]
        %v527 = vld [vmem:[#allocation2 + $0xb0] sm:$0xff]
        %v528 = vld [vmem:[#allocation2 + $0xb8] sm:$0xff]
        %v529 = vld [vmem:[#allocation2 + $0xc0] sm:$0xff]
        %v530 = vld [vmem:[#allocation2 + $0xc8] sm:$0xff]
        %v531 = vld [vmem:[#allocation2 + $0xd0] sm:$0xff]
        %v532 = vld [vmem:[#allocation2 + $0xd8] sm:$0xff]
        %v533 = vld [vmem:[#allocation2 + $0xe0] sm:$0xff]
        %v534 = vld [vmem:[#allocation2 + $0xe8] sm:$0xff]
        %v535 = vld [vmem:[%s1] sm:$0xf]
        %v536 = vld [vmem:[%s1 + $0x4] sm:$0xf]
        %v537 = vld [vmem:[%s1 + $0x8] sm:$0xf]
        %v538 = vld [vmem:[%s1 + $0xc] sm:$0xf]
        %v539 = vld [vmem:[%s1 + $0x10] sm:$0xf]
        %v540 = vld [vmem:[%s1 + $0x14] sm:$0xf]
        %v541 = vld [vmem:[%s1 + $0x18] sm:$0xf]
        %v542 = vld [vmem:[%s1 + $0x1c] sm:$0xf]
        %v543 = vld [vmem:[%s1 + $0x20] sm:$0xf]
        %v544 = vld [vmem:[%s1 + $0x24] sm:$0xf]
        %v545 = vld [vmem:[%s1 + $0x28] sm:$0xf]
        %v546 = vld [vmem:[%s1 + $0x2c] sm:$0xf]
        %v547 = vld [vmem:[%s1 + $0x30] sm:$0xf]
        %v548 = vld [vmem:[%s1 + $0x34] sm:$0xf]
        %v549 = vld [vmem:[%s1 + $0x38] sm:$0xf]
        %v550 = vld [vmem:[%s1 + $0x3c] sm:$0xf]
        %v551 = vld [vmem:[%s1 + $0x40] sm:$0xf]
        %v552 = vld [vmem:[%s1 + $0x44] sm:$0xf]
        %v553 = vld [vmem:[%s1 + $0x48] sm:$0xf]
        %v554 = vld [vmem:[%s1 + $0x4c] sm:$0xf]
        %v555 = vld [vmem:[%s1 + $0x50] sm:$0xf]
        %v556 = vld [vmem:[%s1 + $0x54] sm:$0xf]
        %v557 = vld [vmem:[%s1 + $0x58] sm:$0xf]
        %v558 = vld [vmem:[%s1 + $0x5c] sm:$0xf]
        %v559 = vld [vmem:[%s1 + $0x60] sm:$0xf]
        %v560 = vld [vmem:[%s1 + $0x64] sm:$0xf]
        %v561 = vld [vmem:[%s1 + $0x68] sm:$0xf]
        %v562 = vld [vmem:[%s1 + $0x6c] sm:$0xf]
        %v563 = vld [vmem:[%s1 + $0x70] sm:$0xf]
        %v564 = vld [vmem:[%s1 + $0x74] sm:$0xf]
        %v565 = vld [vmem:[%s1 + $0x78] sm:$0xf]
        %v566 = vld [vmem:[%s1 + $0x7c] sm:$0xf]
        %v567 = vld [vmem:[%s1 + $0x80] sm:$0xf]
        %v568 = vld [vmem:[%s1 + $0x84] sm:$0xf]
        %v569 = vld [vmem:[%s1 + $0x88] sm:$0xf]
        %v570 = vld [vmem:[%s1 + $0x8c] sm:$0xf]
        %v571 = vld [vmem:[%s1 + $0x90] sm:$0xf]
        %v572 = vld [vmem:[%s1 + $0x94] sm:$0xf]
        %v573 = vld [vmem:[%s1 + $0x98] sm:$0xf]
        %v574 = vld [vmem:[%s1 + $0x9c] sm:$0xf]
        %v575 = vld [vmem:[%s1 + $0xa0] sm:$0xf]
        %v576 = vld [vmem:[%s1 + $0xa4] sm:$0xf]
        %v577 = vld [vmem:[%s1 + $0xa8] sm:$0xf]
        %v578 = vld [vmem:[%s1 + $0xac] sm:$0xf]
        %v579 = vld [vmem:[%s1 + $0xb0] sm:$0xf]
        %v580 = vld [vmem:[%s1 + $0xb4] sm:$0xf]
        %v581 = vld [vmem:[%s1 + $0xb8] sm:$0xf]
        %v582 = vld [vmem:[%s1 + $0xbc] sm:$0xf]
        %v583 = vld [vmem:[%s1 + $0xc0] sm:$0xf]
        %v584 = vld [vmem:[%s1 + $0xc4] sm:$0xf]
        %v585 = vld [vmem:[%s1 + $0xc8] sm:$0xf]
        %v586 = vld [vmem:[%s1 + $0xcc] sm:$0xf]
        %v587 = vld [vmem:[%s1 + $0xd0] sm:$0xf]
        %v588 = vld [vmem:[%s1 + $0xd4] sm:$0xf]
        %v589 = vld [vmem:[%s1 + $0xd8] sm:$0xf]
        %v590 = vld [vmem:[%s1 + $0xdc] sm:$0xf]
        %v591 = vld [vmem:[%s1 + $0xe0] sm:$0xf]
        %v592 = vld [vmem:[%s1 + $0xe4] sm:$0xf]
        %v593 = vld [vmem:[%s1 + $0xe8] sm:$0xf]
        %v594 = vld [vmem:[%s1 + $0xec] sm:$0xf]
        %v595 = vld [vmem:[%s1 + $0xf0] sm:$0xf]
        %v596 = vld [vmem:[%s1 + $0xf4] sm:$0xf]
        %v597 = vld [vmem:[%s1 + $0xf8] sm:$0xf]
        %v598 = vld [vmem:[%s1 + $0xfc] sm:$0xf]
        %v599 = vld [vmem:[%s1 + $0x100] sm:$0xf]
        %v600 = vld [vmem:[%s1 + $0x104] sm:$0xf]
        %v601 = vld [vmem:[%s1 + $0x108] sm:$0xf]
        %v602 = vld [vmem:[%s1 + $0x10c] sm:$0xf]
        %v603 = vld [vmem:[%s1 + $0x110] sm:$0xf]
        %v604 = vld [vmem:[%s1 + $0x114] sm:$0xf]
        %v605 = vld [vmem:[%s1 + $0x118] sm:$0xf]
        %v606 = vld [vmem:[%s1 + $0x11c] sm:$0xf]
        %v607 = vld [vmem:[%s1 + $0x120] sm:$0xf]
        %v608 = vld [vmem:[%s1 + $0x124] sm:$0xf]
        %v609 = vld [vmem:[%s1 + $0x128] sm:$0xf]
        %v610 = vld [vmem:[%s1 + $0x12c] sm:$0xf]
        %v611 = vld [vmem:[%s1 + $0x130] sm:$0xf]
        %v612 = vld [vmem:[%s1 + $0x134] sm:$0xf]
        %v613 = vld [vmem:[%s1 + $0x138] sm:$0xf]
        %v614 = vld [vmem:[%s1 + $0x13c] sm:$0xf]
        %v615 = vld [vmem:[%s1 + $0x140] sm:$0xf]
        %v616 = vld [vmem:[%s1 + $0x144] sm:$0xf]
        %v617 = vld [vmem:[%s1 + $0x148] sm:$0xf]
        %v618 = vld [vmem:[%s1 + $0x14c] sm:$0xf]
        %v619 = vld [vmem:[%s1 + $0x150] sm:$0xf]
        %v620 = vld [vmem:[%s1 + $0x154] sm:$0xf]
        %v621 = vld [vmem:[%s1 + $0x158] sm:$0xf]
        %v622 = vld [vmem:[%s1 + $0x15c] sm:$0xf]
        %v623 = vld [vmem:[%s1 + $0x160] sm:$0xf]
        %v624 = vld [vmem:[%s1 + $0x164] sm:$0xf]
        %v625 = vld [vmem:[%s1 + $0x168] sm:$0xf]
        %v626 = vld [vmem:[%s1 + $0x16c] sm:$0xf]
        %v627 = vld [vmem:[%s1 + $0x170] sm:$0xf]
        %v628 = vld [vmem:[%s1 + $0x174] sm:$0xf]
        %v629 = vld [vmem:[%s1 + $0x178] sm:$0xf]
        %v630 = vld [vmem:[%s1 + $0x17c] sm:$0xf]
        %v631 = vld [vmem:[%s1 + $0x180] sm:$0xf]
        %v632 = vld [vmem:[%s1 + $0x184] sm:$0xf]
        %v633 = vld [vmem:[%s1 + $0x188] sm:$0xf]
        %v634 = vld [vmem:[%s1 + $0x18c] sm:$0xf]
        %v635 = vld [vmem:[%s1 + $0x190] sm:$0xf]
        %v636 = vld [vmem:[%s1 + $0x194] sm:$0xf]
        %v637 = vld [vmem:[%s1 + $0x198] sm:$0xf]
        %v638 = vld [vmem:[%s1 + $0x19c] sm:$0xf]
        %v639 = vld [vmem:[%s1 + $0x1a0] sm:$0xf]
        %v640 = vld [vmem:[%s1 + $0x1a4] sm:$0xf]
        %v641 = vld [vmem:[%s1 + $0x1a8] sm:$0xf]
        %v642 = vld [vmem:[%s1 + $0x1ac] sm:$0xf]
        %v643 = vld [vmem:[%s1 + $0x1b0] sm:$0xf]
        %v644 = vld [vmem:[%s1 + $0x1b4] sm:$0xf]
        %v645 = vld [vmem:[%s1 + $0x1b8] sm:$0xf]
        %v646 = vld [vmem:[%s1 + $0x1bc] sm:$0xf]
        %v647 = vld [vmem:[%s1 + $0x1c0] sm:$0xf]
        %v648 = vld [vmem:[%s1 + $0x1c4] sm:$0xf]
        %v649 = vld [vmem:[%s1 + $0x1c8] sm:$0xf]
        %v650 = vld [vmem:[%s1 + $0x1cc] sm:$0xf]
        %v651 = vld [vmem:[%s1 + $0x1d0] sm:$0xf]
        %v652 = vld [vmem:[%s1 + $0x1d4] sm:$0xf]
        %v653 = vld [vmem:[%s1 + $0x1d8] sm:$0xf]
        %v654 = vld [vmem:[%s1 + $0x1dc] sm:$0xf]
        %v655 = vld [vmem:[%s1 + $0x1e0] sm:$0xf]
        %v656 = vld [vmem:[%s1 + $0x1e4] sm:$0xf]
        %v657 = vld [vmem:[%s1 + $0x1e8] sm:$0xf]
        %v658 = vld [vmem:[%s1 + $0x1ec] sm:$0xf]
        %v659 = vld [vmem:[%s1 + $0x1f0] sm:$0xf]
        %v660 = vld [vmem:[%s1 + $0x1f4] sm:$0xf]
        %v661 = vld [vmem:[%s1 + $0x1f8] sm:$0xf]
        %v662 = vld [vmem:[%s1 + $0x1fc] sm:$0xf]
        %v663 = vld [vmem:[%s1 + $0x200] sm:$0xf]
        %v664 = vld [vmem:[%s1 + $0x204] sm:$0xf]
        %v665 = vld [vmem:[%s1 + $0x208] sm:$0xf]
        %v666 = vld [vmem:[%s1 + $0x20c] sm:$0xf]
        %v667 = vld [vmem:[%s1 + $0x210] sm:$0xf]
        %v668 = vld [vmem:[%s1 + $0x214] sm:$0xf]
        %v669 = vld [vmem:[%s1 + $0x218] sm:$0xf]
        %v670 = vld [vmem:[%s1 + $0x21c] sm:$0xf]
        %v671 = vld [vmem:[%s1 + $0x220] sm:$0xf]
        %v672 = vld [vmem:[%s1 + $0x224] sm:$0xf]
        %v673 = vld [vmem:[%s1 + $0x228] sm:$0xf]
        %v674 = vld [vmem:[%s1 + $0x22c] sm:$0xf]
        %v675 = vld [vmem:[%s1 + $0x230] sm:$0xf]
        %v676 = vld [vmem:[%s1 + $0x234] sm:$0xf]
        %v677 = vld [vmem:[%s1 + $0x238] sm:$0xf]
        %v678 = vld [vmem:[%s1 + $0x23c] sm:$0xf]
        %v679 = vld [vmem:[%s1 + $0x240] sm:$0xf]
        %v680 = vld [vmem:[%s1 + $0x244] sm:$0xf]
        %v681 = vld [vmem:[%s1 + $0x248] sm:$0xf]
        %v682 = vld [vmem:[%s1 + $0x24c] sm:$0xf]
        %v683 = vld [vmem:[%s1 + $0x250] sm:$0xf]
        %v684 = vld [vmem:[%s1 + $0x254] sm:$0xf]
        %v685 = vld [vmem:[%s1 + $0x258] sm:$0xf]
        %v686 = vld [vmem:[%s1 + $0x25c] sm:$0xf]
        %v687 = vld [vmem:[%s1 + $0x260] sm:$0xf]
        %v688 = vld [vmem:[%s1 + $0x264] sm:$0xf]
        %v689 = vld [vmem:[%s1 + $0x268] sm:$0xf]
        %v690 = vld [vmem:[%s1 + $0x26c] sm:$0xf]
        %v691 = vld [vmem:[%s1 + $0x270] sm:$0xf]
        %v692 = vld [vmem:[%s1 + $0x274] sm:$0xf]
        %v693 = vld [vmem:[%s1 + $0x278] sm:$0xf]
        %v694 = vld [vmem:[%s1 + $0x27c] sm:$0xf]
        %v695 = vld [vmem:[%s1 + $0x280] sm:$0xf]
        %v696 = vld [vmem:[%s1 + $0x284] sm:$0xf]
        %v697 = vld [vmem:[%s1 + $0x288] sm:$0xf]
        %v698 = vld [vmem:[%s1 + $0x28c] sm:$0xf]
        %v699 = vld [vmem:[%s1 + $0x290] sm:$0xf]
        %v700 = vld [vmem:[%s1 + $0x294] sm:$0xf]
        %v701 = vld [vmem:[%s1 + $0x298] sm:$0xf]
        %v702 = vld [vmem:[%s1 + $0x29c] sm:$0xf]
        %v703 = vld [vmem:[%s1 + $0x2a0] sm:$0xf]
        %v704 = vld [vmem:[%s1 + $0x2a4] sm:$0xf]
        %v705 = vld [vmem:[%s1 + $0x2a8] sm:$0xf]
        %v706 = vld [vmem:[%s1 + $0x2ac] sm:$0xf]
        %v707 = vld [vmem:[%s1 + $0x2b0] sm:$0xf]
        %v708 = vld [vmem:[%s1 + $0x2b4] sm:$0xf]
        %v709 = vld [vmem:[%s1 + $0x2b8] sm:$0xf]
        %v710 = vld [vmem:[%s1 + $0x2bc] sm:$0xf]
        %v711 = vld [vmem:[%s1 + $0x2c0] sm:$0xf]
        %v712 = vld [vmem:[%s1 + $0x2c4] sm:$0xf]
        %v713 = vld [vmem:[%s1 + $0x2c8] sm:$0xf]
        %v714 = vld [vmem:[%s1 + $0x2cc] sm:$0xf]
        %v715 = vld [vmem:[%s1 + $0x2d0] sm:$0xf]
        %v716 = vld [vmem:[%s1 + $0x2d4] sm:$0xf]
        %v717 = vld [vmem:[%s1 + $0x2d8] sm:$0xf]
        %v718 = vld [vmem:[%s1 + $0x2dc] sm:$0xf]
        %v719 = vld [vmem:[%s1 + $0x2e0] sm:$0xf]
        %v720 = vld [vmem:[%s1 + $0x2e4] sm:$0xf]
        %v721 = vld [vmem:[%s1 + $0x2e8] sm:$0xf]
        %v722 = vld [vmem:[%s1 + $0x2ec] sm:$0xf]
        %v723 = vld [vmem:[%s1 + $0x2f0] sm:$0xf]
        %v724 = vld [vmem:[%s1 + $0x2f4] sm:$0xf]
        %v725 = vld [vmem:[%s1 + $0x2f8] sm:$0xf]
        %v726 = vld [vmem:[%s1 + $0x2fc] sm:$0xf]
        %v727 = vld [vmem:[%s1 + $0x300] sm:$0xf]
        %v728 = vld [vmem:[%s1 + $0x304] sm:$0xf]
        %v729 = vld [vmem:[%s1 + $0x308] sm:$0xf]
        %v730 = vld [vmem:[%s1 + $0x30c] sm:$0xf]
        %v731 = vld [vmem:[%s1 + $0x310] sm:$0xf]
        %v732 = vld [vmem:[%s1 + $0x314] sm:$0xf]
        %v733 = vld [vmem:[%s1 + $0x318] sm:$0xf]
        %v734 = vld [vmem:[%s1 + $0x31c] sm:$0xf]
        %v735 = vld [vmem:[%s1 + $0x320] sm:$0xf]
        %v736 = vld [vmem:[%s1 + $0x324] sm:$0xf]
        %v737 = vld [vmem:[%s1 + $0x328] sm:$0xf]
        %v738 = vld [vmem:[%s1 + $0x32c] sm:$0xf]
        %v739 = vld [vmem:[%s1 + $0x330] sm:$0xf]
        %v740 = vld [vmem:[%s1 + $0x334] sm:$0xf]
        %v741 = vld [vmem:[%s1 + $0x338] sm:$0xf]
        %v742 = vld [vmem:[%s1 + $0x33c] sm:$0xf]
        %v743 = vld [vmem:[%s1 + $0x340] sm:$0xf]
        %v744 = vld [vmem:[%s1 + $0x344] sm:$0xf]
        %v745 = vld [vmem:[%s1 + $0x348] sm:$0xf]
        %v746 = vld [vmem:[%s1 + $0x34c] sm:$0xf]
        %v747 = vld [vmem:[%s1 + $0x350] sm:$0xf]
        %v748 = vld [vmem:[%s1 + $0x354] sm:$0xf]
        %v749 = vld [vmem:[%s1 + $0x358] sm:$0xf]
        %v750 = vld [vmem:[%s1 + $0x35c] sm:$0xf]
        %v751 = vld [vmem:[%s1 + $0x360] sm:$0xf]
        %v752 = vld [vmem:[%s1 + $0x364] sm:$0xf]
        %v753 = vld [vmem:[%s1 + $0x368] sm:$0xf]
        %v754 = vld [vmem:[%s1 + $0x36c] sm:$0xf]
        %v755 = vld [vmem:[%s1 + $0x370] sm:$0xf]
        %v756 = vld [vmem:[%s1 + $0x374] sm:$0xf]
        %v757 = vld [vmem:[%s1 + $0x378] sm:$0xf]
        %v758 = vld [vmem:[%s1 + $0x37c] sm:$0xf]
        %v759 = vld [vmem:[%s1 + $0x380] sm:$0xf]
        %v760 = vld [vmem:[%s1 + $0x384] sm:$0xf]
        %v761 = vld [vmem:[%s1 + $0x388] sm:$0xf]
        %v762 = vld [vmem:[%s1 + $0x38c] sm:$0xf]
        %v763 = vld [vmem:[%s1 + $0x390] sm:$0xf]
        %v764 = vld [vmem:[%s1 + $0x394] sm:$0xf]
        %v765 = vld [vmem:[%s1 + $0x398] sm:$0xf]
        %v766 = vld [vmem:[%s1 + $0x39c] sm:$0xf]
        %v767 = vld [vmem:[%s1 + $0x3a0] sm:$0xf]
        %v768 = vld [vmem:[%s1 + $0x3a4] sm:$0xf]
        %v769 = vld [vmem:[%s1 + $0x3a8] sm:$0xf]
        %v770 = vld [vmem:[%s1 + $0x3ac] sm:$0xf]
        %v771 = vld [vmem:[%s1 + $0x3b0] sm:$0xf]
        %v772 = vld [vmem:[%s1 + $0x3b4] sm:$0xf]
        %v773 = vld [vmem:[%s1 + $0x3b8] sm:$0xf]
        %v774 = vld [vmem:[%s1 + $0x3bc] sm:$0xf]
        %v775 = vpack.c.bf16 %v520, %v505
        %v776 = vpack.c.bf16 %v521, %v506
        %v777 = vpack.c.bf16 %v522, %v507
        %v778 = vpack.c.bf16 %v523, %v508
        %v779 = vpack.c.bf16 %v524, %v509
        %v780 = vpack.c.bf16 %v525, %v510
        %v781 = vpack.c.bf16 %v526, %v511
        %v782 = vpack.c.bf16 %v527, %v512
        %v783 = vpack.c.bf16 %v528, %v513
        %v784 = vpack.c.bf16 %v529, %v514
        %v785 = vpack.c.bf16 %v530, %v515
        %v786 = vpack.c.bf16 %v531, %v516
        %v787 = vpack.c.bf16 %v532, %v517
        %v788 = vpack.c.bf16 %v533, %v518
        %v789 = vpack.c.bf16 %v534, %v519
        %v1030 = vunpack.c.l.b16 %v535
        %v1031 = vunpack.c.l.b16 %v536
        %v1032 = vunpack.c.l.b16 %v537
        %v1033 = vunpack.c.l.b16 %v538
        %v1034 = vunpack.c.l.b16 %v539
        %v1035 = vunpack.c.l.b16 %v540
        %v1036 = vunpack.c.l.b16 %v541
        %v1037 = vunpack.c.l.b16 %v542
        %v1038 = vunpack.c.l.b16 %v543
        %v1039 = vunpack.c.l.b16 %v544
        %v1040 = vunpack.c.l.b16 %v545
        %v1041 = vunpack.c.l.b16 %v546
        %v1042 = vunpack.c.l.b16 %v547
        %v1043 = vunpack.c.l.b16 %v548
        %v1044 = vunpack.c.l.b16 %v549
        %v1045 = vunpack.c.l.b16 %v550
        %v1046 = vunpack.c.l.b16 %v551
        %v1047 = vunpack.c.l.b16 %v552
        %v1048 = vunpack.c.l.b16 %v553
        %v1049 = vunpack.c.l.b16 %v554
        %v1050 = vunpack.c.l.b16 %v555
        %v1051 = vunpack.c.l.b16 %v556
        %v1052 = vunpack.c.l.b16 %v557
        %v1053 = vunpack.c.l.b16 %v558
        %v1054 = vunpack.c.l.b16 %v559
        %v1055 = vunpack.c.l.b16 %v560
        %v1056 = vunpack.c.l.b16 %v561
        %v1057 = vunpack.c.l.b16 %v562
        %v1058 = vunpack.c.l.b16 %v563
        %v1059 = vunpack.c.l.b16 %v564
        %v1060 = vunpack.c.l.b16 %v565
        %v1061 = vunpack.c.l.b16 %v566
        %v1062 = vunpack.c.l.b16 %v567
        %v1063 = vunpack.c.l.b16 %v568
        %v1064 = vunpack.c.l.b16 %v569
        %v1065 = vunpack.c.l.b16 %v570
        %v1066 = vunpack.c.l.b16 %v571
        %v1067 = vunpack.c.l.b16 %v572
        %v1068 = vunpack.c.l.b16 %v573
        %v1069 = vunpack.c.l.b16 %v574
        %v1070 = vunpack.c.l.b16 %v575
        %v1071 = vunpack.c.l.b16 %v576
        %v1072 = vunpack.c.l.b16 %v577
        %v1073 = vunpack.c.l.b16 %v578
        %v1074 = vunpack.c.l.b16 %v579
        %v1075 = vunpack.c.l.b16 %v580
        %v1076 = vunpack.c.l.b16 %v581
        %v1077 = vunpack.c.l.b16 %v582
        %v1078 = vunpack.c.l.b16 %v583
        %v1079 = vunpack.c.l.b16 %v584
        %v1080 = vunpack.c.l.b16 %v585
        %v1081 = vunpack.c.l.b16 %v586
        %v1082 = vunpack.c.l.b16 %v587
        %v1083 = vunpack.c.l.b16 %v588
        %v1084 = vunpack.c.l.b16 %v589
        %v1085 = vunpack.c.l.b16 %v590
        %v1086 = vunpack.c.l.b16 %v591
        %v1087 = vunpack.c.l.b16 %v592
        %v1088 = vunpack.c.l.b16 %v593
        %v1089 = vunpack.c.l.b16 %v594
        %v1090 = vunpack.c.l.b16 %v595
        %v1091 = vunpack.c.l.b16 %v596
        %v1092 = vunpack.c.l.b16 %v597
        %v1093 = vunpack.c.l.b16 %v598
        %v1094 = vunpack.c.l.b16 %v599
        %v1095 = vunpack.c.l.b16 %v600
        %v1096 = vunpack.c.l.b16 %v601
        %v1097 = vunpack.c.l.b16 %v602
        %v1098 = vunpack.c.l.b16 %v603
        %v1099 = vunpack.c.l.b16 %v604
        %v1100 = vunpack.c.l.b16 %v605
        %v1101 = vunpack.c.l.b16 %v606
        %v1102 = vunpack.c.l.b16 %v607
        %v1103 = vunpack.c.l.b16 %v608
        %v1104 = vunpack.c.l.b16 %v609
        %v1105 = vunpack.c.l.b16 %v610
        %v1106 = vunpack.c.l.b16 %v611
        %v1107 = vunpack.c.l.b16 %v612
        %v1108 = vunpack.c.l.b16 %v613
        %v1109 = vunpack.c.l.b16 %v614
        %v1110 = vunpack.c.l.b16 %v615
        %v1111 = vunpack.c.l.b16 %v616
        %v1112 = vunpack.c.l.b16 %v617
        %v1113 = vunpack.c.l.b16 %v618
        %v1114 = vunpack.c.l.b16 %v619
        %v1115 = vunpack.c.l.b16 %v620
        %v1116 = vunpack.c.l.b16 %v621
        %v1117 = vunpack.c.l.b16 %v622
        %v1118 = vunpack.c.l.b16 %v623
        %v1119 = vunpack.c.l.b16 %v624
        %v1120 = vunpack.c.l.b16 %v625
        %v1121 = vunpack.c.l.b16 %v626
        %v1122 = vunpack.c.l.b16 %v627
        %v1123 = vunpack.c.l.b16 %v628
        %v1124 = vunpack.c.l.b16 %v629
        %v1125 = vunpack.c.l.b16 %v630
        %v1126 = vunpack.c.l.b16 %v631
        %v1127 = vunpack.c.l.b16 %v632
        %v1128 = vunpack.c.l.b16 %v633
        %v1129 = vunpack.c.l.b16 %v634
        %v1130 = vunpack.c.l.b16 %v635
        %v1131 = vunpack.c.l.b16 %v636
        %v1132 = vunpack.c.l.b16 %v637
        %v1133 = vunpack.c.l.b16 %v638
        %v1134 = vunpack.c.l.b16 %v639
        %v1135 = vunpack.c.l.b16 %v640
        %v1136 = vunpack.c.l.b16 %v641
        %v1137 = vunpack.c.l.b16 %v642
        %v1138 = vunpack.c.l.b16 %v643
        %v1139 = vunpack.c.l.b16 %v644
        %v1140 = vunpack.c.l.b16 %v645
        %v1141 = vunpack.c.l.b16 %v646
        %v1142 = vunpack.c.l.b16 %v647
        %v1143 = vunpack.c.l.b16 %v648
        %v1144 = vunpack.c.l.b16 %v649
        %v1145 = vunpack.c.l.b16 %v650
        %v1146 = vunpack.c.l.b16 %v651
        %v1147 = vunpack.c.l.b16 %v652
        %v1148 = vunpack.c.l.b16 %v653
        %v1149 = vunpack.c.l.b16 %v654
        %v1150 = vunpack.c.l.b16 %v655
        %v1151 = vunpack.c.l.b16 %v656
        %v1152 = vunpack.c.l.b16 %v657
        %v1153 = vunpack.c.l.b16 %v658
        %v1154 = vunpack.c.l.b16 %v659
        %v1155 = vunpack.c.l.b16 %v660
        %v1156 = vunpack.c.l.b16 %v661
        %v1157 = vunpack.c.l.b16 %v662
        %v1158 = vunpack.c.l.b16 %v663
        %v1159 = vunpack.c.l.b16 %v664
        %v1160 = vunpack.c.l.b16 %v665
        %v1161 = vunpack.c.l.b16 %v666
        %v1162 = vunpack.c.l.b16 %v667
        %v1163 = vunpack.c.l.b16 %v668
        %v1164 = vunpack.c.l.b16 %v669
        %v1165 = vunpack.c.l.b16 %v670
        %v1166 = vunpack.c.l.b16 %v671
        %v1167 = vunpack.c.l.b16 %v672
        %v1168 = vunpack.c.l.b16 %v673
        %v1169 = vunpack.c.l.b16 %v674
        %v1170 = vunpack.c.l.b16 %v675
        %v1171 = vunpack.c.l.b16 %v676
        %v1172 = vunpack.c.l.b16 %v677
        %v1173 = vunpack.c.l.b16 %v678
        %v1174 = vunpack.c.l.b16 %v679
        %v1175 = vunpack.c.l.b16 %v680
        %v1176 = vunpack.c.l.b16 %v681
        %v1177 = vunpack.c.l.b16 %v682
        %v1178 = vunpack.c.l.b16 %v683
        %v1179 = vunpack.c.l.b16 %v684
        %v1180 = vunpack.c.l.b16 %v685
        %v1181 = vunpack.c.l.b16 %v686
        %v1182 = vunpack.c.l.b16 %v687
        %v1183 = vunpack.c.l.b16 %v688
        %v1184 = vunpack.c.l.b16 %v689
        %v1185 = vunpack.c.l.b16 %v690
        %v1186 = vunpack.c.l.b16 %v691
        %v1187 = vunpack.c.l.b16 %v692
        %v1188 = vunpack.c.l.b16 %v693
        %v1189 = vunpack.c.l.b16 %v694
        %v1190 = vunpack.c.l.b16 %v695
        %v1191 = vunpack.c.l.b16 %v696
        %v1192 = vunpack.c.l.b16 %v697
        %v1193 = vunpack.c.l.b16 %v698
        %v1194 = vunpack.c.l.b16 %v699
        %v1195 = vunpack.c.l.b16 %v700
        %v1196 = vunpack.c.l.b16 %v701
        %v1197 = vunpack.c.l.b16 %v702
        %v1198 = vunpack.c.l.b16 %v703
        %v1199 = vunpack.c.l.b16 %v704
        %v1200 = vunpack.c.l.b16 %v705
        %v1201 = vunpack.c.l.b16 %v706
        %v1202 = vunpack.c.l.b16 %v707
        %v1203 = vunpack.c.l.b16 %v708
        %v1204 = vunpack.c.l.b16 %v709
        %v1205 = vunpack.c.l.b16 %v710
        %v1206 = vunpack.c.l.b16 %v711
        %v1207 = vunpack.c.l.b16 %v712
        %v1208 = vunpack.c.l.b16 %v713
        %v1209 = vunpack.c.l.b16 %v714
        %v1210 = vunpack.c.l.b16 %v715
        %v1211 = vunpack.c.l.b16 %v716
        %v1212 = vunpack.c.l.b16 %v717
        %v1213 = vunpack.c.l.b16 %v718
        %v1214 = vunpack.c.l.b16 %v719
        %v1215 = vunpack.c.l.b16 %v720
        %v1216 = vunpack.c.l.b16 %v721
        %v1217 = vunpack.c.l.b16 %v722
        %v1218 = vunpack.c.l.b16 %v723
        %v1219 = vunpack.c.l.b16 %v724
        %v1220 = vunpack.c.l.b16 %v725
        %v1221 = vunpack.c.l.b16 %v726
        %v1222 = vunpack.c.l.b16 %v727
        %v1223 = vunpack.c.l.b16 %v728
        %v1224 = vunpack.c.l.b16 %v729
        %v1225 = vunpack.c.l.b16 %v730
        %v1226 = vunpack.c.l.b16 %v731
        %v1227 = vunpack.c.l.b16 %v732
        %v1228 = vunpack.c.l.b16 %v733
        %v1229 = vunpack.c.l.b16 %v734
        %v1230 = vunpack.c.l.b16 %v735
        %v1231 = vunpack.c.l.b16 %v736
        %v1232 = vunpack.c.l.b16 %v737
        %v1233 = vunpack.c.l.b16 %v738
        %v1234 = vunpack.c.l.b16 %v739
        %v1235 = vunpack.c.l.b16 %v740
        %v1236 = vunpack.c.l.b16 %v741
        %v1237 = vunpack.c.l.b16 %v742
        %v1238 = vunpack.c.l.b16 %v743
        %v1239 = vunpack.c.l.b16 %v744
        %v1240 = vunpack.c.l.b16 %v745
        %v1241 = vunpack.c.l.b16 %v746
        %v1242 = vunpack.c.l.b16 %v747
        %v1243 = vunpack.c.l.b16 %v748
        %v1244 = vunpack.c.l.b16 %v749
        %v1245 = vunpack.c.l.b16 %v750
        %v1246 = vunpack.c.l.b16 %v751
        %v1247 = vunpack.c.l.b16 %v752
        %v1248 = vunpack.c.l.b16 %v753
        %v1249 = vunpack.c.l.b16 %v754
        %v1250 = vunpack.c.l.b16 %v755
        %v1251 = vunpack.c.l.b16 %v756
        %v1252 = vunpack.c.l.b16 %v757
        %v1253 = vunpack.c.l.b16 %v758
        %v1254 = vunpack.c.l.b16 %v759
        %v1255 = vunpack.c.l.b16 %v760
        %v1256 = vunpack.c.l.b16 %v761
        %v1257 = vunpack.c.l.b16 %v762
        %v1258 = vunpack.c.l.b16 %v763
        %v1259 = vunpack.c.l.b16 %v764
        %v1260 = vunpack.c.l.b16 %v765
        %v1261 = vunpack.c.l.b16 %v766
        %v1262 = vunpack.c.l.b16 %v767
        %v1263 = vunpack.c.l.b16 %v768
        %v1264 = vunpack.c.l.b16 %v769
        %v1265 = vunpack.c.l.b16 %v770
        %v1266 = vunpack.c.l.b16 %v771
        %v1267 = vunpack.c.l.b16 %v772
        %v1268 = vunpack.c.l.b16 %v773
        %v1269 = vunpack.c.l.b16 %v774
        %v1270 = vpack.c.b16 %v1031, %v1030
        %v1271 = vpack.c.b16 %v1033, %v1032
        %v1272 = vpack.c.b16 %v1035, %v1034
        %v1273 = vpack.c.b16 %v1037, %v1036
        %v1274 = vpack.c.b16 %v1039, %v1038
        %v1275 = vpack.c.b16 %v1041, %v1040
        %v1276 = vpack.c.b16 %v1043, %v1042
        %v1277 = vpack.c.b16 %v1045, %v1044
        %v1278 = vpack.c.b16 %v1047, %v1046
        %v1279 = vpack.c.b16 %v1049, %v1048
        %v1280 = vpack.c.b16 %v1051, %v1050
        %v1281 = vpack.c.b16 %v1053, %v1052
        %v1282 = vpack.c.b16 %v1055, %v1054
        %v1283 = vpack.c.b16 %v1057, %v1056
        %v1284 = vpack.c.b16 %v1059, %v1058
        %v1285 = vpack.c.b16 %v1061, %v1060
        %v1286 = vpack.c.b16 %v1063, %v1062
        %v1287 = vpack.c.b16 %v1065, %v1064
        %v1288 = vpack.c.b16 %v1067, %v1066
        %v1289 = vpack.c.b16 %v1069, %v1068
        %v1290 = vpack.c.b16 %v1071, %v1070
        %v1291 = vpack.c.b16 %v1073, %v1072
        %v1292 = vpack.c.b16 %v1075, %v1074
        %v1293 = vpack.c.b16 %v1077, %v1076
        %v1294 = vpack.c.b16 %v1079, %v1078
        %v1295 = vpack.c.b16 %v1081, %v1080
        %v1296 = vpack.c.b16 %v1083, %v1082
        %v1297 = vpack.c.b16 %v1085, %v1084
        %v1298 = vpack.c.b16 %v1087, %v1086
        %v1299 = vpack.c.b16 %v1089, %v1088
        %v1300 = vpack.c.b16 %v1091, %v1090
        %v1301 = vpack.c.b16 %v1093, %v1092
        %v1302 = vpack.c.b16 %v1095, %v1094
        %v1303 = vpack.c.b16 %v1097, %v1096
        %v1304 = vpack.c.b16 %v1099, %v1098
        %v1305 = vpack.c.b16 %v1101, %v1100
        %v1306 = vpack.c.b16 %v1103, %v1102
        %v1307 = vpack.c.b16 %v1105, %v1104
        %v1308 = vpack.c.b16 %v1107, %v1106
        %v1309 = vpack.c.b16 %v1109, %v1108
        %v1310 = vpack.c.b16 %v1111, %v1110
        %v1311 = vpack.c.b16 %v1113, %v1112
        %v1312 = vpack.c.b16 %v1115, %v1114
        %v1313 = vpack.c.b16 %v1117, %v1116
        %v1314 = vpack.c.b16 %v1119, %v1118
        %v1315 = vpack.c.b16 %v1121, %v1120
        %v1316 = vpack.c.b16 %v1123, %v1122
        %v1317 = vpack.c.b16 %v1125, %v1124
        %v1318 = vpack.c.b16 %v1127, %v1126
        %v1319 = vpack.c.b16 %v1129, %v1128
        %v1320 = vpack.c.b16 %v1131, %v1130
        %v1321 = vpack.c.b16 %v1133, %v1132
        %v1322 = vpack.c.b16 %v1135, %v1134
        %v1323 = vpack.c.b16 %v1137, %v1136
        %v1324 = vpack.c.b16 %v1139, %v1138
        %v1325 = vpack.c.b16 %v1141, %v1140
        %v1326 = vpack.c.b16 %v1143, %v1142
        %v1327 = vpack.c.b16 %v1145, %v1144
        %v1328 = vpack.c.b16 %v1147, %v1146
        %v1329 = vpack.c.b16 %v1149, %v1148
        %v1330 = vpack.c.b16 %v1151, %v1150
        %v1331 = vpack.c.b16 %v1153, %v1152
        %v1332 = vpack.c.b16 %v1155, %v1154
        %v1333 = vpack.c.b16 %v1157, %v1156
        %v1334 = vpack.c.b16 %v1159, %v1158
        %v1335 = vpack.c.b16 %v1161, %v1160
        %v1336 = vpack.c.b16 %v1163, %v1162
        %v1337 = vpack.c.b16 %v1165, %v1164
        %v1338 = vpack.c.b16 %v1167, %v1166
        %v1339 = vpack.c.b16 %v1169, %v1168
        %v1340 = vpack.c.b16 %v1171, %v1170
        %v1341 = vpack.c.b16 %v1173, %v1172
        %v1342 = vpack.c.b16 %v1175, %v1174
        %v1343 = vpack.c.b16 %v1177, %v1176
        %v1344 = vpack.c.b16 %v1179, %v1178
        %v1345 = vpack.c.b16 %v1181, %v1180
        %v1346 = vpack.c.b16 %v1183, %v1182
        %v1347 = vpack.c.b16 %v1185, %v1184
        %v1348 = vpack.c.b16 %v1187, %v1186
        %v1349 = vpack.c.b16 %v1189, %v1188
        %v1350 = vpack.c.b16 %v1191, %v1190
        %v1351 = vpack.c.b16 %v1193, %v1192
        %v1352 = vpack.c.b16 %v1195, %v1194
        %v1353 = vpack.c.b16 %v1197, %v1196
        %v1354 = vpack.c.b16 %v1199, %v1198
        %v1355 = vpack.c.b16 %v1201, %v1200
        %v1356 = vpack.c.b16 %v1203, %v1202
        %v1357 = vpack.c.b16 %v1205, %v1204
        %v1358 = vpack.c.b16 %v1207, %v1206
        %v1359 = vpack.c.b16 %v1209, %v1208
        %v1360 = vpack.c.b16 %v1211, %v1210
        %v1361 = vpack.c.b16 %v1213, %v1212
        %v1362 = vpack.c.b16 %v1215, %v1214
        %v1363 = vpack.c.b16 %v1217, %v1216
        %v1364 = vpack.c.b16 %v1219, %v1218
        %v1365 = vpack.c.b16 %v1221, %v1220
        %v1366 = vpack.c.b16 %v1223, %v1222
        %v1367 = vpack.c.b16 %v1225, %v1224
        %v1368 = vpack.c.b16 %v1227, %v1226
        %v1369 = vpack.c.b16 %v1229, %v1228
        %v1370 = vpack.c.b16 %v1231, %v1230
        %v1371 = vpack.c.b16 %v1233, %v1232
        %v1372 = vpack.c.b16 %v1235, %v1234
        %v1373 = vpack.c.b16 %v1237, %v1236
        %v1374 = vpack.c.b16 %v1239, %v1238
        %v1375 = vpack.c.b16 %v1241, %v1240
        %v1376 = vpack.c.b16 %v1243, %v1242
        %v1377 = vpack.c.b16 %v1245, %v1244
        %v1378 = vpack.c.b16 %v1247, %v1246
        %v1379 = vpack.c.b16 %v1249, %v1248
        %v1380 = vpack.c.b16 %v1251, %v1250
        %v1381 = vpack.c.b16 %v1253, %v1252
        %v1382 = vpack.c.b16 %v1255, %v1254
        %v1383 = vpack.c.b16 %v1257, %v1256
        %v1384 = vpack.c.b16 %v1259, %v1258
        %v1385 = vpack.c.b16 %v1261, %v1260
        %v1386 = vpack.c.b16 %v1263, %v1262
        %v1387 = vpack.c.b16 %v1265, %v1264
        %v1388 = vpack.c.b16 %v1267, %v1266
        %v1389 = vpack.c.b16 %v1269, %v1268
        %1510 = vmatprep.subr.bf16.mxu0 0
        %1511 = vmatpush1.bf16.msra.mxu0 %v1277
        %1512 = vmatprep.subr.bf16.mxu0 0
        %1513 = vmatpush1.bf16.msra.mxu0 %v1276
        %1514 = vmatprep.subr.bf16.mxu0 0
        %1515 = vmatpush1.bf16.msra.mxu0 %v1275
        %1516 = vmatprep.subr.bf16.mxu0 0
        %1517 = vmatpush1.bf16.msra.mxu0 %v1274
        %1518 = vmatprep.subr.bf16.mxu0 0
        %1519 = vmatpush1.bf16.msra.mxu0 %v1273
        %1520 = vmatprep.subr.bf16.mxu0 0
        %1521 = vmatpush1.bf16.msra.mxu0 %v1272
        %1522 = vmatprep.subr.bf16.mxu0 0
        %1523 = vmatpush1.bf16.msra.mxu0 %v1271
        %1524 = vmatprep.subr.bf16.mxu0 0
        %1525 = vmatpush1.bf16.msra.mxu0 %v1270
        %1526 = vmatprep.subr.bf16.mxu0 0
        %1527 = vmatpush2.bf16.msra.mxu0 %v1285
        %1528 = vmatprep.subr.bf16.mxu0 0
        %1529 = vmatpush2.bf16.msra.mxu0 %v1284
        %1530 = vmatprep.subr.bf16.mxu0 0
        %1531 = vmatpush2.bf16.msra.mxu0 %v1283
        %1532 = vmatprep.subr.bf16.mxu0 0
        %1533 = vmatpush2.bf16.msra.mxu0 %v1282
        %1534 = vmatprep.subr.bf16.mxu0 0
        %1535 = vmatpush2.bf16.msra.mxu0 %v1281
        %1536 = vmatprep.subr.bf16.mxu0 0
        %1537 = vmatpush2.bf16.msra.mxu0 %v1280
        %1538 = vmatprep.subr.bf16.mxu0 0
        %1539 = vmatpush2.bf16.msra.mxu0 %v1279
        %1540 = vmatprep.subr.bf16.mxu0 0
        %1541 = vmatpush2.bf16.msra.mxu0 %v1278
        %1542 = vmatprep.mubr.bf16.mxu0 %v776
        %1543 = vmatmul.mubr.bf16.gmra.mxu0 %v775
        %v1544 = vpop.f32.mrf.mxu0
        %v1545 = vadd.f32 0.0, %v1544
        %v1546 = vpop.f32.mrf.mxu0
        %v1547 = vpop.f32.mrf.mxu0
        %v1548 = vadd.f32 0.0, %v1547
        %v1549 = vpop.f32.mrf.mxu0
        %1550 = vdwg.mxu0
        %1551 = vmatprep.subr.bf16.mxu0 0
        %1552 = vmatpush1.bf16.msra.mxu0 %v1293
        %1553 = vmatprep.subr.bf16.mxu0 0
        %1554 = vmatpush1.bf16.msra.mxu0 %v1292
        %1555 = vmatprep.subr.bf16.mxu0 0
        %1556 = vmatpush1.bf16.msra.mxu0 %v1291
        %1557 = vmatprep.subr.bf16.mxu0 0
        %1558 = vmatpush1.bf16.msra.mxu0 %v1290
        %1559 = vmatprep.subr.bf16.mxu0 0
        %1560 = vmatpush1.bf16.msra.mxu0 %v1289
        %1561 = vmatprep.subr.bf16.mxu0 0
        %1562 = vmatpush1.bf16.msra.mxu0 %v1288
        %1563 = vmatprep.subr.bf16.mxu0 0
        %1564 = vmatpush1.bf16.msra.mxu0 %v1287
        %1565 = vmatprep.subr.bf16.mxu0 0
        %1566 = vmatpush1.bf16.msra.mxu0 %v1286
        %1567 = vmatprep.subr.bf16.mxu0 0
        %1568 = vmatpush2.bf16.msra.mxu0 %v1301
        %1569 = vmatprep.subr.bf16.mxu0 0
        %1570 = vmatpush2.bf16.msra.mxu0 %v1300
        %1571 = vmatprep.subr.bf16.mxu0 0
        %1572 = vmatpush2.bf16.msra.mxu0 %v1299
        %1573 = vmatprep.subr.bf16.mxu0 0
        %1574 = vmatpush2.bf16.msra.mxu0 %v1298
        %1575 = vmatprep.subr.bf16.mxu0 0
        %1576 = vmatpush2.bf16.msra.mxu0 %v1297
        %1577 = vmatprep.subr.bf16.mxu0 0
        %1578 = vmatpush2.bf16.msra.mxu0 %v1296
        %1579 = vmatprep.subr.bf16.mxu0 0
        %1580 = vmatpush2.bf16.msra.mxu0 %v1295
        %1581 = vmatprep.subr.bf16.mxu0 0
        %1582 = vmatpush2.bf16.msra.mxu0 %v1294
        %1583 = vmatprep.mubr.bf16.mxu0 %v778
        %1584 = vmatmul.mubr.bf16.gmra.mxu0 %v777
        %v1585 = vpop.f32.mrf.mxu0
        %v1586 = vadd.f32 %v1545, %v1585
        %v1587 = vpop.f32.mrf.mxu0
        %v1588 = vpop.f32.mrf.mxu0
        %v1589 = vadd.f32 %v1548, %v1588
        %v1590 = vpop.f32.mrf.mxu0
        %1591 = vdwg.mxu0
        %1592 = vmatprep.subr.bf16.mxu0 0
        %1593 = vmatpush1.bf16.msra.mxu0 %v1309
        %1594 = vmatprep.subr.bf16.mxu0 0
        %1595 = vmatpush1.bf16.msra.mxu0 %v1308
        %1596 = vmatprep.subr.bf16.mxu0 0
        %1597 = vmatpush1.bf16.msra.mxu0 %v1307
        %1598 = vmatprep.subr.bf16.mxu0 0
        %1599 = vmatpush1.bf16.msra.mxu0 %v1306
        %1600 = vmatprep.subr.bf16.mxu0 0
        %1601 = vmatpush1.bf16.msra.mxu0 %v1305
        %1602 = vmatprep.subr.bf16.mxu0 0
        %1603 = vmatpush1.bf16.msra.mxu0 %v1304
        %1604 = vmatprep.subr.bf16.mxu0 0
        %1605 = vmatpush1.bf16.msra.mxu0 %v1303
        %1606 = vmatprep.subr.bf16.mxu0 0
        %1607 = vmatpush1.bf16.msra.mxu0 %v1302
        %1608 = vmatprep.subr.bf16.mxu0 0
        %1609 = vmatpush2.bf16.msra.mxu0 %v1317
        %1610 = vmatprep.subr.bf16.mxu0 0
        %1611 = vmatpush2.bf16.msra.mxu0 %v1316
        %1612 = vmatprep.subr.bf16.mxu0 0
        %1613 = vmatpush2.bf16.msra.mxu0 %v1315
        %1614 = vmatprep.subr.bf16.mxu0 0
        %1615 = vmatpush2.bf16.msra.mxu0 %v1314
        %1616 = vmatprep.subr.bf16.mxu0 0
        %1617 = vmatpush2.bf16.msra.mxu0 %v1313
        %1618 = vmatprep.subr.bf16.mxu0 0
        %1619 = vmatpush2.bf16.msra.mxu0 %v1312
        %1620 = vmatprep.subr.bf16.mxu0 0
        %1621 = vmatpush2.bf16.msra.mxu0 %v1311
        %1622 = vmatprep.subr.bf16.mxu0 0
        %1623 = vmatpush2.bf16.msra.mxu0 %v1310
        %1624 = vmatprep.mubr.bf16.mxu0 %v780
        %1625 = vmatmul.mubr.bf16.gmra.mxu0 %v779
        %v1626 = vpop.f32.mrf.mxu0
        %v1627 = vadd.f32 %v1586, %v1626
        %v1628 = vpop.f32.mrf.mxu0
        %v1629 = vpop.f32.mrf.mxu0
        %v1630 = vadd.f32 %v1589, %v1629
        %v1631 = vpop.f32.mrf.mxu0
        %1632 = vdwg.mxu0
        %1633 = vmatprep.subr.bf16.mxu0 0
        %1634 = vmatpush1.bf16.msra.mxu0 %v1325
        %1635 = vmatprep.subr.bf16.mxu0 0
        %1636 = vmatpush1.bf16.msra.mxu0 %v1324
        %1637 = vmatprep.subr.bf16.mxu0 0
        %1638 = vmatpush1.bf16.msra.mxu0 %v1323
        %1639 = vmatprep.subr.bf16.mxu0 0
        %1640 = vmatpush1.bf16.msra.mxu0 %v1322
        %1641 = vmatprep.subr.bf16.mxu0 0
        %1642 = vmatpush1.bf16.msra.mxu0 %v1321
        %1643 = vmatprep.subr.bf16.mxu0 0
        %1644 = vmatpush1.bf16.msra.mxu0 %v1320
        %1645 = vmatprep.subr.bf16.mxu0 0
        %1646 = vmatpush1.bf16.msra.mxu0 %v1319
        %1647 = vmatprep.subr.bf16.mxu0 0
        %1648 = vmatpush1.bf16.msra.mxu0 %v1318
        %1649 = vmatprep.subr.bf16.mxu0 0
        %1650 = vmatpush2.bf16.msra.mxu0 %v1333
        %1651 = vmatprep.subr.bf16.mxu0 0
        %1652 = vmatpush2.bf16.msra.mxu0 %v1332
        %1653 = vmatprep.subr.bf16.mxu0 0
        %1654 = vmatpush2.bf16.msra.mxu0 %v1331
        %1655 = vmatprep.subr.bf16.mxu0 0
        %1656 = vmatpush2.bf16.msra.mxu0 %v1330
        %1657 = vmatprep.subr.bf16.mxu0 0
        %1658 = vmatpush2.bf16.msra.mxu0 %v1329
        %1659 = vmatprep.subr.bf16.mxu0 0
        %1660 = vmatpush2.bf16.msra.mxu0 %v1328
        %1661 = vmatprep.subr.bf16.mxu0 0
        %1662 = vmatpush2.bf16.msra.mxu0 %v1327
        %1663 = vmatprep.subr.bf16.mxu0 0
        %1664 = vmatpush2.bf16.msra.mxu0 %v1326
        %1665 = vmatprep.mubr.bf16.mxu0 %v782
        %1666 = vmatmul.mubr.bf16.gmra.mxu0 %v781
        %v1667 = vpop.f32.mrf.mxu0
        %v1668 = vadd.f32 %v1627, %v1667
        %v1669 = vpop.f32.mrf.mxu0
        %v1670 = vpop.f32.mrf.mxu0
        %v1671 = vadd.f32 %v1630, %v1670
        %v1672 = vpop.f32.mrf.mxu0
        %1673 = vdwg.mxu0
        %1674 = vmatprep.subr.bf16.mxu0 0
        %1675 = vmatpush1.bf16.msra.mxu0 %v1341
        %1676 = vmatprep.subr.bf16.mxu0 0
        %1677 = vmatpush1.bf16.msra.mxu0 %v1340
        %1678 = vmatprep.subr.bf16.mxu0 0
        %1679 = vmatpush1.bf16.msra.mxu0 %v1339
        %1680 = vmatprep.subr.bf16.mxu0 0
        %1681 = vmatpush1.bf16.msra.mxu0 %v1338
        %1682 = vmatprep.subr.bf16.mxu0 0
        %1683 = vmatpush1.bf16.msra.mxu0 %v1337
        %1684 = vmatprep.subr.bf16.mxu0 0
        %1685 = vmatpush1.bf16.msra.mxu0 %v1336
        %1686 = vmatprep.subr.bf16.mxu0 0
        %1687 = vmatpush1.bf16.msra.mxu0 %v1335
        %1688 = vmatprep.subr.bf16.mxu0 0
        %1689 = vmatpush1.bf16.msra.mxu0 %v1334
        %1690 = vmatprep.subr.bf16.mxu0 0
        %1691 = vmatpush2.bf16.msra.mxu0 %v1349
        %1692 = vmatprep.subr.bf16.mxu0 0
        %1693 = vmatpush2.bf16.msra.mxu0 %v1348
        %1694 = vmatprep.subr.bf16.mxu0 0
        %1695 = vmatpush2.bf16.msra.mxu0 %v1347
        %1696 = vmatprep.subr.bf16.mxu0 0
        %1697 = vmatpush2.bf16.msra.mxu0 %v1346
        %1698 = vmatprep.subr.bf16.mxu0 0
        %1699 = vmatpush2.bf16.msra.mxu0 %v1345
        %1700 = vmatprep.subr.bf16.mxu0 0
        %1701 = vmatpush2.bf16.msra.mxu0 %v1344
        %1702 = vmatprep.subr.bf16.mxu0 0
        %1703 = vmatpush2.bf16.msra.mxu0 %v1343
        %1704 = vmatprep.subr.bf16.mxu0 0
        %1705 = vmatpush2.bf16.msra.mxu0 %v1342
        %1706 = vmatprep.mubr.bf16.mxu0 %v784
        %1707 = vmatmul.mubr.bf16.gmra.mxu0 %v783
        %v1708 = vpop.f32.mrf.mxu0
        %v1709 = vadd.f32 %v1668, %v1708
        %v1710 = vpop.f32.mrf.mxu0
        %v1711 = vpop.f32.mrf.mxu0
        %v1712 = vadd.f32 %v1671, %v1711
        %v1713 = vpop.f32.mrf.mxu0
        %1714 = vdwg.mxu0
        %1715 = vmatprep.subr.bf16.mxu0 0
        %1716 = vmatpush1.bf16.msra.mxu0 %v1357
        %1717 = vmatprep.subr.bf16.mxu0 0
        %1718 = vmatpush1.bf16.msra.mxu0 %v1356
        %1719 = vmatprep.subr.bf16.mxu0 0
        %1720 = vmatpush1.bf16.msra.mxu0 %v1355
        %1721 = vmatprep.subr.bf16.mxu0 0
        %1722 = vmatpush1.bf16.msra.mxu0 %v1354
        %1723 = vmatprep.subr.bf16.mxu0 0
        %1724 = vmatpush1.bf16.msra.mxu0 %v1353
        %1725 = vmatprep.subr.bf16.mxu0 0
        %1726 = vmatpush1.bf16.msra.mxu0 %v1352
        %1727 = vmatprep.subr.bf16.mxu0 0
        %1728 = vmatpush1.bf16.msra.mxu0 %v1351
        %1729 = vmatprep.subr.bf16.mxu0 0
        %1730 = vmatpush1.bf16.msra.mxu0 %v1350
        %1731 = vmatprep.subr.bf16.mxu0 0
        %1732 = vmatpush2.bf16.msra.mxu0 %v1365
        %1733 = vmatprep.subr.bf16.mxu0 0
        %1734 = vmatpush2.bf16.msra.mxu0 %v1364
        %1735 = vmatprep.subr.bf16.mxu0 0
        %1736 = vmatpush2.bf16.msra.mxu0 %v1363
        %1737 = vmatprep.subr.bf16.mxu0 0
        %1738 = vmatpush2.bf16.msra.mxu0 %v1362
        %1739 = vmatprep.subr.bf16.mxu0 0
        %1740 = vmatpush2.bf16.msra.mxu0 %v1361
        %1741 = vmatprep.subr.bf16.mxu0 0
        %1742 = vmatpush2.bf16.msra.mxu0 %v1360
        %1743 = vmatprep.subr.bf16.mxu0 0
        %1744 = vmatpush2.bf16.msra.mxu0 %v1359
        %1745 = vmatprep.subr.bf16.mxu0 0
        %1746 = vmatpush2.bf16.msra.mxu0 %v1358
        %1747 = vmatprep.mubr.bf16.mxu0 %v786
        %1748 = vmatmul.mubr.bf16.gmra.mxu0 %v785
        %v1749 = vpop.f32.mrf.mxu0
        %v1750 = vadd.f32 %v1709, %v1749
        %v1751 = vpop.f32.mrf.mxu0
        %v1752 = vpop.f32.mrf.mxu0
        %v1753 = vadd.f32 %v1712, %v1752
        %v1754 = vpop.f32.mrf.mxu0
        %1755 = vdwg.mxu0
        %1756 = vmatprep.subr.bf16.mxu0 0
        %1757 = vmatpush1.bf16.msra.mxu0 %v1373
        %1758 = vmatprep.subr.bf16.mxu0 0
        %1759 = vmatpush1.bf16.msra.mxu0 %v1372
        %1760 = vmatprep.subr.bf16.mxu0 0
        %1761 = vmatpush1.bf16.msra.mxu0 %v1371
        %1762 = vmatprep.subr.bf16.mxu0 0
        %1763 = vmatpush1.bf16.msra.mxu0 %v1370
        %1764 = vmatprep.subr.bf16.mxu0 0
        %1765 = vmatpush1.bf16.msra.mxu0 %v1369
        %1766 = vmatprep.subr.bf16.mxu0 0
        %1767 = vmatpush1.bf16.msra.mxu0 %v1368
        %1768 = vmatprep.subr.bf16.mxu0 0
        %1769 = vmatpush1.bf16.msra.mxu0 %v1367
        %1770 = vmatprep.subr.bf16.mxu0 0
        %1771 = vmatpush1.bf16.msra.mxu0 %v1366
        %1772 = vmatprep.subr.bf16.mxu0 0
        %1773 = vmatpush2.bf16.msra.mxu0 %v1381
        %1774 = vmatprep.subr.bf16.mxu0 0
        %1775 = vmatpush2.bf16.msra.mxu0 %v1380
        %1776 = vmatprep.subr.bf16.mxu0 0
        %1777 = vmatpush2.bf16.msra.mxu0 %v1379
        %1778 = vmatprep.subr.bf16.mxu0 0
        %1779 = vmatpush2.bf16.msra.mxu0 %v1378
        %1780 = vmatprep.subr.bf16.mxu0 0
        %1781 = vmatpush2.bf16.msra.mxu0 %v1377
        %1782 = vmatprep.subr.bf16.mxu0 0
        %1783 = vmatpush2.bf16.msra.mxu0 %v1376
        %1784 = vmatprep.subr.bf16.mxu0 0
        %1785 = vmatpush2.bf16.msra.mxu0 %v1375
        %1786 = vmatprep.subr.bf16.mxu0 0
        %1787 = vmatpush2.bf16.msra.mxu0 %v1374
        %1788 = vmatprep.mubr.bf16.mxu0 %v788
        %1789 = vmatmul.mubr.bf16.gmra.mxu0 %v787
        %v1790 = vpop.f32.mrf.mxu0
        %v1791 = vadd.f32 %v1750, %v1790
        %v1792 = vpop.f32.mrf.mxu0
        %v1793 = vpop.f32.mrf.mxu0
        %v1794 = vadd.f32 %v1753, %v1793
        %v1795 = vpop.f32.mrf.mxu0
        %1796 = vdwg.mxu0
        %1797 = vmatprep.subr.bf16.mxu0 0
        %1798 = vmatpush1.bf16.msra.mxu0 %v1389
        %1799 = vmatprep.subr.bf16.mxu0 0
        %1800 = vmatpush1.bf16.msra.mxu0 %v1388
        %1801 = vmatprep.subr.bf16.mxu0 0
        %1802 = vmatpush1.bf16.msra.mxu0 %v1387
        %1803 = vmatprep.subr.bf16.mxu0 0
        %1804 = vmatpush1.bf16.msra.mxu0 %v1386
        %1805 = vmatprep.subr.bf16.mxu0 0
        %1806 = vmatpush1.bf16.msra.mxu0 %v1385
        %1807 = vmatprep.subr.bf16.mxu0 0
        %1808 = vmatpush1.bf16.msra.mxu0 %v1384
        %1809 = vmatprep.subr.bf16.mxu0 0
        %1810 = vmatpush1.bf16.msra.mxu0 %v1383
        %1811 = vmatprep.subr.bf16.mxu0 0
        %1812 = vmatpush1.bf16.msra.mxu0 %v1382
        %1813 = vmatprep.subr.bf16.mxu0 0
        %1814 = vmatpush2.bf16.msra.mxu0 0
        %1815 = vmatprep.subr.bf16.mxu0 0
        %1816 = vmatpush2.bf16.msra.mxu0 0
        %1817 = vmatprep.subr.bf16.mxu0 0
        %1818 = vmatpush2.bf16.msra.mxu0 0
        %1819 = vmatprep.subr.bf16.mxu0 0
        %1820 = vmatpush2.bf16.msra.mxu0 0
        %1821 = vmatprep.subr.bf16.mxu0 0
        %1822 = vmatpush2.bf16.msra.mxu0 0
        %1823 = vmatprep.subr.bf16.mxu0 0
        %1824 = vmatpush2.bf16.msra.mxu0 0
        %1825 = vmatprep.subr.bf16.mxu0 0
        %1826 = vmatpush2.bf16.msra.mxu0 0
        %1827 = vmatprep.subr.bf16.mxu0 0
        %1828 = vmatpush2.bf16.msra.mxu0 0
        %1829 = vmatprep.mubr.bf16.mxu0 0
        %1830 = vmatmul.mubr.bf16.gmra.mxu0 %v789
        %v1831 = vpop.f32.mrf.mxu0
        %v1832 = vadd.f32 %v1791, %v1831
        %v1833 = vpop.f32.mrf.mxu0
        %v1834 = vpop.f32.mrf.mxu0
        %v1835 = vadd.f32 %v1794, %v1834
        %v1836 = vpop.f32.mrf.mxu0
        %1837 = vdwg.mxu0
        %v1839 = vrot.slane %v1832, 1
        %v1842 = vrot.slane %v1832, 7
        %v1843 = vrot.slane %v1835, 7
        %v1844 = vsel %vm462, %v1842, %v1843
        %v1847 = vsel %vm462, %v1839, %v1842
        %v1848 = vrot.slane %v1835, 1
        %v1849 = vsel %vm402, %v1839, %v1848
        %v1853 = vsel %vm402, %v1848, %v1843
        %v1854 = vld [vmem:[#allocation3] sm:$0xff]
        %v1855 = vld [vmem:[#allocation3 + $0x8] sm:$0xff]
        %v1856 = vld [vmem:[#allocation3 + $0x10] sm:$0xff]
        %v1857 = vld [vmem:[#allocation3 + $0x18] sm:$0xff]
        %v1858 = vld [vmem:[#allocation3 + $0x20] sm:$0xff]
        %v1859 = vld [vmem:[#allocation3 + $0x28] sm:$0xff]
        %v1860 = vld [vmem:[#allocation3 + $0x30] sm:$0xff]
        %v1861 = vld [vmem:[#allocation3 + $0x38] sm:$0xff]
        %v1862 = vld [vmem:[#allocation3 + $0x40] sm:$0xff]
        %v1863 = vld [vmem:[#allocation3 + $0x48] sm:$0xff]
        %v1864 = vld [vmem:[#allocation3 + $0x50] sm:$0xff]
        %v1865 = vld [vmem:[#allocation3 + $0x58] sm:$0xff]
        %v1866 = vld [vmem:[#allocation3 + $0x60] sm:$0xff]
        %v1867 = vld [vmem:[#allocation3 + $0x68] sm:$0xff]
        %v1868 = vld [vmem:[#allocation3 + $0x70] sm:$0xff]
        %v1869 = vld [vmem:[#allocation3 + $0x78] sm:$0xff]
        %v1870 = vld [vmem:[#allocation3 + $0x80] sm:$0xff]
        %v1871 = vld [vmem:[#allocation3 + $0x88] sm:$0xff]
        %v1872 = vld [vmem:[#allocation3 + $0x90] sm:$0xff]
        %v1873 = vld [vmem:[#allocation3 + $0x98] sm:$0xff]
        %v1874 = vld [vmem:[#allocation3 + $0xa0] sm:$0xff]
        %v1875 = vld [vmem:[#allocation3 + $0xa8] sm:$0xff]
        %v1876 = vld [vmem:[#allocation3 + $0xb0] sm:$0xff]
        %v1877 = vld [vmem:[#allocation3 + $0xb8] sm:$0xff]
        %v1878 = vld [vmem:[#allocation3 + $0xc0] sm:$0xff]
        %v1879 = vld [vmem:[#allocation3 + $0xc8] sm:$0xff]
        %v1880 = vld [vmem:[#allocation3 + $0xd0] sm:$0xff]
        %v1881 = vld [vmem:[#allocation3 + $0xd8] sm:$0xff]
        %v1882 = vld [vmem:[#allocation3 + $0xe0] sm:$0xff]
        %v1883 = vld [vmem:[#allocation3 + $0xe8] sm:$0xff]
        %v1884 = vld [vmem:[#allocation3 + $0xf0] sm:$0xff]
        %v1885 = vld [vmem:[#allocation3 + $0xf8] sm:$0xff]
        %v1886 = vld [vmem:[#allocation3 + $0x100] sm:$0xff]
        %v1887 = vld [vmem:[#allocation3 + $0x108] sm:$0xff]
        %v1888 = vld [vmem:[#allocation3 + $0x110] sm:$0xff]
        %v1889 = vld [vmem:[#allocation3 + $0x118] sm:$0xff]
        %v1890 = vld [vmem:[#allocation3 + $0x120] sm:$0xff]
        %v1891 = vld [vmem:[#allocation3 + $0x128] sm:$0xff]
        %v1892 = vld [vmem:[#allocation3 + $0x130] sm:$0xff]
        %v1893 = vld [vmem:[#allocation3 + $0x138] sm:$0xff]
        %v1894 = vld [vmem:[#allocation3 + $0x140] sm:$0xff]
        %v1895 = vld [vmem:[#allocation3 + $0x148] sm:$0xff]
        %v1896 = vld [vmem:[#allocation3 + $0x150] sm:$0xff]
        %v1897 = vld [vmem:[#allocation3 + $0x158] sm:$0xff]
        %v1898 = vld [vmem:[#allocation3 + $0x160] sm:$0xff]
        %v1899 = vld [vmem:[#allocation3 + $0x168] sm:$0xff]
        %v1900 = vld [vmem:[#allocation3 + $0x170] sm:$0xff]
        %v1901 = vld [vmem:[#allocation3 + $0x178] sm:$0xff]
        %v1902 = vpack.c.bf16 %v1844, %v1847
        %v1903 = vpack.c.bf16 %v1835, %v1832
        %v1904 = vpack.c.bf16 %v1853, %v1849
        %v1905 = vld [vmem:[%s3] sm:$0x3]
        %v1907 = vlaneseq
        %v1908 = vshrl.u32 %v1907, 7
        %v1909 = vsub.s32 0, %v1908
        %v1910 = vrot.slane %v1905, %v1909
        %v1911 = vlaneseq
        %v1912 = vshrl.u32 %v1911, 7
        %v1913 = vsub.s32 1, %v1912
        %v1914 = vrot.slane %v1905, %v1913
        %v1965 = vunpack.c.l.b16 %v1854
        %v1966 = vunpack.c.h.b16 %v1854
        %v1967 = vunpack.c.l.b16 %v1855
        %v1968 = vunpack.c.h.b16 %v1855
        %v1969 = vunpack.c.l.b16 %v1856
        %v1970 = vunpack.c.h.b16 %v1856
        %v1971 = vunpack.c.l.b16 %v1857
        %v1972 = vunpack.c.h.b16 %v1857
        %v1973 = vunpack.c.l.b16 %v1858
        %v1974 = vunpack.c.h.b16 %v1858
        %v1975 = vunpack.c.l.b16 %v1859
        %v1976 = vunpack.c.h.b16 %v1859
        %v1977 = vunpack.c.l.b16 %v1860
        %v1978 = vunpack.c.h.b16 %v1860
        %v1979 = vunpack.c.l.b16 %v1861
        %v1980 = vunpack.c.h.b16 %v1861
        %v1981 = vunpack.c.l.b16 %v1862
        %v1982 = vunpack.c.h.b16 %v1862
        %v1983 = vunpack.c.l.b16 %v1863
        %v1984 = vunpack.c.h.b16 %v1863
        %v1985 = vunpack.c.l.b16 %v1864
        %v1986 = vunpack.c.h.b16 %v1864
        %v1987 = vunpack.c.l.b16 %v1865
        %v1988 = vunpack.c.h.b16 %v1865
        %v1989 = vunpack.c.l.b16 %v1866
        %v1990 = vunpack.c.h.b16 %v1866
        %v1991 = vunpack.c.l.b16 %v1867
        %v1992 = vunpack.c.h.b16 %v1867
        %v1993 = vunpack.c.l.b16 %v1868
        %v1994 = vunpack.c.h.b16 %v1868
        %v1995 = vunpack.c.l.b16 %v1869
        %v1996 = vunpack.c.h.b16 %v1869
        %v1997 = vunpack.c.l.b16 %v1870
        %v1998 = vunpack.c.h.b16 %v1870
        %v1999 = vunpack.c.l.b16 %v1871
        %v2000 = vunpack.c.h.b16 %v1871
        %v2001 = vunpack.c.l.b16 %v1872
        %v2002 = vunpack.c.h.b16 %v1872
        %v2003 = vunpack.c.l.b16 %v1873
        %v2004 = vunpack.c.h.b16 %v1873
        %v2005 = vunpack.c.l.b16 %v1874
        %v2006 = vunpack.c.h.b16 %v1874
        %v2007 = vunpack.c.l.b16 %v1875
        %v2008 = vunpack.c.h.b16 %v1875
        %v2009 = vunpack.c.l.b16 %v1876
        %v2010 = vunpack.c.h.b16 %v1876
        %v2011 = vunpack.c.l.b16 %v1877
        %v2012 = vunpack.c.h.b16 %v1877
        %v2013 = vunpack.c.l.b16 %v1878
        %v2014 = vunpack.c.h.b16 %v1878
        %v2015 = vunpack.c.l.b16 %v1879
        %v2016 = vunpack.c.h.b16 %v1879
        %v2017 = vunpack.c.l.b16 %v1880
        %v2018 = vunpack.c.h.b16 %v1880
        %v2019 = vunpack.c.l.b16 %v1881
        %v2020 = vunpack.c.h.b16 %v1881
        %v2021 = vunpack.c.l.b16 %v1882
        %v2022 = vunpack.c.h.b16 %v1882
        %v2023 = vunpack.c.l.b16 %v1883
        %v2024 = vunpack.c.h.b16 %v1883
        %v2025 = vunpack.c.l.b16 %v1884
        %v2026 = vunpack.c.h.b16 %v1884
        %v2027 = vunpack.c.l.b16 %v1885
        %v2028 = vunpack.c.h.b16 %v1885
        %v2029 = vunpack.c.l.b16 %v1886
        %v2030 = vunpack.c.h.b16 %v1886
        %v2031 = vunpack.c.l.b16 %v1887
        %v2032 = vunpack.c.h.b16 %v1887
        %v2033 = vunpack.c.l.b16 %v1888
        %v2034 = vunpack.c.h.b16 %v1888
        %v2035 = vunpack.c.l.b16 %v1889
        %v2036 = vunpack.c.h.b16 %v1889
        %v2037 = vunpack.c.l.b16 %v1890
        %v2038 = vunpack.c.h.b16 %v1890
        %v2039 = vunpack.c.l.b16 %v1891
        %v2040 = vunpack.c.h.b16 %v1891
        %v2041 = vunpack.c.l.b16 %v1892
        %v2042 = vunpack.c.h.b16 %v1892
        %v2043 = vunpack.c.l.b16 %v1893
        %v2044 = vunpack.c.h.b16 %v1893
        %v2045 = vunpack.c.l.b16 %v1894
        %v2046 = vunpack.c.h.b16 %v1894
        %v2047 = vunpack.c.l.b16 %v1895
        %v2048 = vunpack.c.h.b16 %v1895
        %v2049 = vunpack.c.l.b16 %v1896
        %v2050 = vunpack.c.h.b16 %v1896
        %v2051 = vunpack.c.l.b16 %v1897
        %v2052 = vunpack.c.h.b16 %v1897
        %v2053 = vunpack.c.l.b16 %v1898
        %v2054 = vunpack.c.h.b16 %v1898
        %v2055 = vunpack.c.l.b16 %v1899
        %v2056 = vunpack.c.h.b16 %v1899
        %v2057 = vunpack.c.l.b16 %v1900
        %v2058 = vunpack.c.h.b16 %v1900
        %v2059 = vunpack.c.l.b16 %v1901
        %v2060 = vunpack.c.h.b16 %v1901
        %v2061 = vpack.c.b16 %v1967, %v1965
        %v2062 = vpack.c.b16 %v1968, %v1966
        %v2063 = vpack.c.b16 %v1971, %v1969
        %v2064 = vpack.c.b16 %v1972, %v1970
        %v2065 = vpack.c.b16 %v1975, %v1973
        %v2066 = vpack.c.b16 %v1976, %v1974
        %v2067 = vpack.c.b16 %v1979, %v1977
        %v2068 = vpack.c.b16 %v1980, %v1978
        %v2069 = vpack.c.b16 %v1983, %v1981
        %v2070 = vpack.c.b16 %v1984, %v1982
        %v2071 = vpack.c.b16 %v1987, %v1985
        %v2072 = vpack.c.b16 %v1988, %v1986
        %v2073 = vpack.c.b16 %v1991, %v1989
        %v2074 = vpack.c.b16 %v1992, %v1990
        %v2075 = vpack.c.b16 %v1995, %v1993
        %v2076 = vpack.c.b16 %v1996, %v1994
        %v2077 = vpack.c.b16 %v1999, %v1997
        %v2078 = vpack.c.b16 %v2000, %v1998
        %v2079 = vpack.c.b16 %v2003, %v2001
        %v2080 = vpack.c.b16 %v2004, %v2002
        %v2081 = vpack.c.b16 %v2007, %v2005
        %v2082 = vpack.c.b16 %v2008, %v2006
        %v2083 = vpack.c.b16 %v2011, %v2009
        %v2084 = vpack.c.b16 %v2012, %v2010
        %v2085 = vpack.c.b16 %v2015, %v2013
        %v2086 = vpack.c.b16 %v2016, %v2014
        %v2087 = vpack.c.b16 %v2019, %v2017
        %v2088 = vpack.c.b16 %v2020, %v2018
        %v2089 = vpack.c.b16 %v2023, %v2021
        %v2090 = vpack.c.b16 %v2024, %v2022
        %v2091 = vpack.c.b16 %v2027, %v2025
        %v2092 = vpack.c.b16 %v2028, %v2026
        %v2093 = vpack.c.b16 %v2031, %v2029
        %v2094 = vpack.c.b16 %v2032, %v2030
        %v2095 = vpack.c.b16 %v2035, %v2033
        %v2096 = vpack.c.b16 %v2036, %v2034
        %v2097 = vpack.c.b16 %v2039, %v2037
        %v2098 = vpack.c.b16 %v2040, %v2038
        %v2099 = vpack.c.b16 %v2043, %v2041
        %v2100 = vpack.c.b16 %v2044, %v2042
        %v2101 = vpack.c.b16 %v2047, %v2045
        %v2102 = vpack.c.b16 %v2048, %v2046
        %v2103 = vpack.c.b16 %v2051, %v2049
        %v2104 = vpack.c.b16 %v2052, %v2050
        %v2105 = vpack.c.b16 %v2055, %v2053
        %v2106 = vpack.c.b16 %v2056, %v2054
        %v2107 = vpack.c.b16 %v2059, %v2057
        %v2108 = vpack.c.b16 %v2060, %v2058
        %2157 = vmatprep.subr.bf16.mxu0 %v2076
        %2158 = vmatpush1.bf16.msra.mxu0 %v2075
        %2159 = vmatprep.subr.bf16.mxu0 %v2074
        %2160 = vmatpush1.bf16.msra.mxu0 %v2073
        %2161 = vmatprep.subr.bf16.mxu0 %v2072
        %2162 = vmatpush1.bf16.msra.mxu0 %v2071
        %2163 = vmatprep.subr.bf16.mxu0 %v2070
        %2164 = vmatpush1.bf16.msra.mxu0 %v2069
        %2165 = vmatprep.subr.bf16.mxu0 %v2068
        %2166 = vmatpush1.bf16.msra.mxu0 %v2067
        %2167 = vmatprep.subr.bf16.mxu0 %v2066
        %2168 = vmatpush1.bf16.msra.mxu0 %v2065
        %2169 = vmatprep.subr.bf16.mxu0 %v2064
        %2170 = vmatpush1.bf16.msra.mxu0 %v2063
        %2171 = vmatprep.subr.bf16.mxu0 %v2062
        %2172 = vmatpush1.bf16.msra.mxu0 %v2061
        %2173 = vmatprep.subr.bf16.mxu0 %v2092
        %2174 = vmatpush2.bf16.msra.mxu0 %v2091
        %2175 = vmatprep.subr.bf16.mxu0 %v2090
        %2176 = vmatpush2.bf16.msra.mxu0 %v2089
        %2177 = vmatprep.subr.bf16.mxu0 %v2088
        %2178 = vmatpush2.bf16.msra.mxu0 %v2087
        %2179 = vmatprep.subr.bf16.mxu0 %v2086
        %2180 = vmatpush2.bf16.msra.mxu0 %v2085
        %2181 = vmatprep.subr.bf16.mxu0 %v2084
        %2182 = vmatpush2.bf16.msra.mxu0 %v2083
        %2183 = vmatprep.subr.bf16.mxu0 %v2082
        %2184 = vmatpush2.bf16.msra.mxu0 %v2081
        %2185 = vmatprep.subr.bf16.mxu0 %v2080
        %2186 = vmatpush2.bf16.msra.mxu0 %v2079
        %2187 = vmatprep.subr.bf16.mxu0 %v2078
        %2188 = vmatpush2.bf16.msra.mxu0 %v2077
        %2189 = vmatprep.mubr.bf16.mxu0 %v1903
        %2190 = vmatmul.mubr.bf16.gmra.mxu0 %v1902
        %v2191 = vpop.f32.mrf.mxu0
        %v2192 = vadd.f32 %v1910, %v2191
        %v2193 = vpop.f32.mrf.mxu0
        %v2194 = vadd.f32 %v1914, %v2193
        %v2195 = vpop.f32.mrf.mxu0
        %v2196 = vadd.f32 %v1910, %v2195
        %v2197 = vpop.f32.mrf.mxu0
        %v2198 = vadd.f32 %v1914, %v2197
        %2199 = vdwg.mxu0
        %2200 = vmatprep.subr.bf16.mxu0 %v2108
        %2201 = vmatpush1.bf16.msra.mxu0 %v2107
        %2202 = vmatprep.subr.bf16.mxu0 %v2106
        %2203 = vmatpush1.bf16.msra.mxu0 %v2105
        %2204 = vmatprep.subr.bf16.mxu0 %v2104
        %2205 = vmatpush1.bf16.msra.mxu0 %v2103
        %2206 = vmatprep.subr.bf16.mxu0 %v2102
        %2207 = vmatpush1.bf16.msra.mxu0 %v2101
        %2208 = vmatprep.subr.bf16.mxu0 %v2100
        %2209 = vmatpush1.bf16.msra.mxu0 %v2099
        %2210 = vmatprep.subr.bf16.mxu0 %v2098
        %2211 = vmatpush1.bf16.msra.mxu0 %v2097
        %2212 = vmatprep.subr.bf16.mxu0 %v2096
        %2213 = vmatpush1.bf16.msra.mxu0 %v2095
        %2214 = vmatprep.subr.bf16.mxu0 %v2094
        %2215 = vmatpush1.bf16.msra.mxu0 %v2093
        %2216 = vmatprep.subr.bf16.mxu0 0
        %2217 = vmatpush2.bf16.msra.mxu0 0
        %2218 = vmatprep.subr.bf16.mxu0 0
        %2219 = vmatpush2.bf16.msra.mxu0 0
        %2220 = vmatprep.subr.bf16.mxu0 0
        %2221 = vmatpush2.bf16.msra.mxu0 0
        %2222 = vmatprep.subr.bf16.mxu0 0
        %2223 = vmatpush2.bf16.msra.mxu0 0
        %2224 = vmatprep.subr.bf16.mxu0 0
        %2225 = vmatpush2.bf16.msra.mxu0 0
        %2226 = vmatprep.subr.bf16.mxu0 0
        %2227 = vmatpush2.bf16.msra.mxu0 0
        %2228 = vmatprep.subr.bf16.mxu0 0
        %2229 = vmatpush2.bf16.msra.mxu0 0
        %2230 = vmatprep.subr.bf16.mxu0 0
        %2231 = vmatpush2.bf16.msra.mxu0 0
        %2232 = vmatprep.mubr.bf16.mxu0 0
        %2233 = vmatmul.mubr.bf16.gmra.mxu0 %v1904
        %v2234 = vpop.f32.mrf.mxu0
        %v2235 = vadd.f32 %v2192, %v2234
        %v2236 = vpop.f32.mrf.mxu0
        %v2237 = vadd.f32 %v2194, %v2236
        %v2238 = vpop.f32.mrf.mxu0
        %v2239 = vadd.f32 %v2196, %v2238
        %v2240 = vpop.f32.mrf.mxu0
        %v2241 = vadd.f32 %v2198, %v2240
        %2242 = vdwg.mxu0
        %v2243 = vmax.f32 %v2235, 0.0
        %v2244 = vmax.f32 %v2237, 0.0
        %v2245 = vmax.f32 %v2239, 0.0
        %v2246 = vmax.f32 %v2241, 0.0
        %v2247 = vld [vmem:[#allocation5] sm:$0xff]
        %v2248 = vld [vmem:[#allocation5 + $0x8] sm:$0xf]
        %v2249 = vld [vmem:[#allocation5 + $0xc] sm:$0xff]
        %v2250 = vld [vmem:[#allocation5 + $0x14] sm:$0xf]
        %v2251 = vld [vmem:[#allocation5 + $0x18] sm:$0xff]
        %v2252 = vld [vmem:[#allocation5 + $0x20] sm:$0xf]
        %v2253 = vld [vmem:[#allocation5 + $0x24] sm:$0xff]
        %v2254 = vld [vmem:[#allocation5 + $0x2c] sm:$0xf]
        %v2255 = vld [vmem:[#allocation5 + $0x30] sm:$0xff]
        %v2256 = vld [vmem:[#allocation5 + $0x38] sm:$0xf]
        %v2257 = vld [vmem:[#allocation5 + $0x3c] sm:$0xff]
        %v2258 = vld [vmem:[#allocation5 + $0x44] sm:$0xf]
        %v2259 = vld [vmem:[#allocation5 + $0x48] sm:$0xff]
        %v2260 = vld [vmem:[#allocation5 + $0x50] sm:$0xf]
        %v2261 = vld [vmem:[#allocation5 + $0x54] sm:$0xff]
        %v2262 = vld [vmem:[#allocation5 + $0x5c] sm:$0xf]
        %v2263 = vld [vmem:[#allocation5 + $0x60] sm:$0xff]
        %v2264 = vld [vmem:[#allocation5 + $0x68] sm:$0xf]
        %v2265 = vld [vmem:[#allocation5 + $0x6c] sm:$0xff]
        %v2266 = vld [vmem:[#allocation5 + $0x74] sm:$0xf]
        %v2267 = vld [vmem:[#allocation5 + $0x78] sm:$0xff]
        %v2268 = vld [vmem:[#allocation5 + $0x80] sm:$0xf]
        %v2269 = vld [vmem:[#allocation5 + $0x84] sm:$0xff]
        %v2270 = vld [vmem:[#allocation5 + $0x8c] sm:$0xf]
        %v2271 = vld [vmem:[#allocation5 + $0x90] sm:$0xff]
        %v2272 = vld [vmem:[#allocation5 + $0x98] sm:$0xf]
        %v2273 = vld [vmem:[#allocation5 + $0x9c] sm:$0xff]
        %v2274 = vld [vmem:[#allocation5 + $0xa4] sm:$0xf]
        %v2275 = vld [vmem:[#allocation5 + $0xa8] sm:$0xff]
        %v2276 = vld [vmem:[#allocation5 + $0xb0] sm:$0xf]
        %v2277 = vld [vmem:[#allocation5 + $0xb4] sm:$0xff]
        %v2278 = vld [vmem:[#allocation5 + $0xbc] sm:$0xf]
        %v2279 = vld [vmem:[#allocation5 + $0xc0] sm:$0xff]
        %v2280 = vld [vmem:[#allocation5 + $0xc8] sm:$0xf]
        %v2281 = vld [vmem:[#allocation5 + $0xcc] sm:$0xff]
        %v2282 = vld [vmem:[#allocation5 + $0xd4] sm:$0xf]
        %v2283 = vld [vmem:[#allocation5 + $0xd8] sm:$0xff]
        %v2284 = vld [vmem:[#allocation5 + $0xe0] sm:$0xf]
        %v2285 = vld [vmem:[#allocation5 + $0xe4] sm:$0xff]
        %v2286 = vld [vmem:[#allocation5 + $0xec] sm:$0xf]
        %v2287 = vld [vmem:[#allocation5 + $0xf0] sm:$0xff]
        %v2288 = vld [vmem:[#allocation5 + $0xf8] sm:$0xf]
        %v2289 = vld [vmem:[#allocation5 + $0xfc] sm:$0xff]
        %v2290 = vld [vmem:[#allocation5 + $0x104] sm:$0xf]
        %v2291 = vld [vmem:[#allocation5 + $0x108] sm:$0xff]
        %v2292 = vld [vmem:[#allocation5 + $0x110] sm:$0xf]
        %v2293 = vld [vmem:[#allocation5 + $0x114] sm:$0xff]
        %v2294 = vld [vmem:[#allocation5 + $0x11c] sm:$0xf]
        %v2295 = vld [vmem:[#allocation5 + $0x120] sm:$0xff]
        %v2296 = vld [vmem:[#allocation5 + $0x128] sm:$0xf]
        %v2297 = vld [vmem:[#allocation5 + $0x12c] sm:$0xff]
        %v2298 = vld [vmem:[#allocation5 + $0x134] sm:$0xf]
        %v2299 = vld [vmem:[#allocation5 + $0x138] sm:$0xff]
        %v2300 = vld [vmem:[#allocation5 + $0x140] sm:$0xf]
        %v2301 = vld [vmem:[#allocation5 + $0x144] sm:$0xff]
        %v2302 = vld [vmem:[#allocation5 + $0x14c] sm:$0xf]
        %v2303 = vld [vmem:[#allocation5 + $0x150] sm:$0xff]
        %v2304 = vld [vmem:[#allocation5 + $0x158] sm:$0xf]
        %v2305 = vld [vmem:[#allocation5 + $0x15c] sm:$0xff]
        %v2306 = vld [vmem:[#allocation5 + $0x164] sm:$0xf]
        %v2307 = vld [vmem:[#allocation5 + $0x168] sm:$0xff]
        %v2308 = vld [vmem:[#allocation5 + $0x170] sm:$0xf]
        %v2309 = vld [vmem:[#allocation5 + $0x174] sm:$0xff]
        %v2310 = vld [vmem:[#allocation5 + $0x17c] sm:$0xf]
        %v2311 = vld [vmem:[#allocation5 + $0x180] sm:$0xff]
        %v2312 = vld [vmem:[#allocation5 + $0x188] sm:$0xf]
        %v2313 = vld [vmem:[#allocation5 + $0x18c] sm:$0xff]
        %v2314 = vld [vmem:[#allocation5 + $0x194] sm:$0xf]
        %v2315 = vld [vmem:[#allocation5 + $0x198] sm:$0xff]
        %v2316 = vld [vmem:[#allocation5 + $0x1a0] sm:$0xf]
        %v2317 = vld [vmem:[#allocation5 + $0x1a4] sm:$0xff]
        %v2318 = vld [vmem:[#allocation5 + $0x1ac] sm:$0xf]
        %v2319 = vld [vmem:[#allocation5 + $0x1b0] sm:$0xff]
        %v2320 = vld [vmem:[#allocation5 + $0x1b8] sm:$0xf]
        %v2321 = vld [vmem:[#allocation5 + $0x1bc] sm:$0xff]
        %v2322 = vld [vmem:[#allocation5 + $0x1c4] sm:$0xf]
        %v2323 = vld [vmem:[#allocation5 + $0x1c8] sm:$0xff]
        %v2324 = vld [vmem:[#allocation5 + $0x1d0] sm:$0xf]
        %v2325 = vld [vmem:[#allocation5 + $0x1d4] sm:$0xff]
        %v2326 = vld [vmem:[#allocation5 + $0x1dc] sm:$0xf]
        %v2327 = vld [vmem:[#allocation5 + $0x1e0] sm:$0xff]
        %v2328 = vld [vmem:[#allocation5 + $0x1e8] sm:$0xf]
        %v2329 = vld [vmem:[#allocation5 + $0x1ec] sm:$0xff]
        %v2330 = vld [vmem:[#allocation5 + $0x1f4] sm:$0xf]
        %v2331 = vld [vmem:[#allocation5 + $0x1f8] sm:$0xff]
        %v2332 = vld [vmem:[#allocation5 + $0x200] sm:$0xf]
        %v2333 = vld [vmem:[#allocation5 + $0x204] sm:$0xff]
        %v2334 = vld [vmem:[#allocation5 + $0x20c] sm:$0xf]
        %v2335 = vld [vmem:[#allocation5 + $0x210] sm:$0xff]
        %v2336 = vld [vmem:[#allocation5 + $0x218] sm:$0xf]
        %v2337 = vld [vmem:[#allocation5 + $0x21c] sm:$0xff]
        %v2338 = vld [vmem:[#allocation5 + $0x224] sm:$0xf]
        %v2339 = vld [vmem:[#allocation5 + $0x228] sm:$0xff]
        %v2340 = vld [vmem:[#allocation5 + $0x230] sm:$0xf]
        %v2341 = vld [vmem:[#allocation5 + $0x234] sm:$0xff]
        %v2342 = vld [vmem:[#allocation5 + $0x23c] sm:$0xf]
        %v2439 = vunpack.c.l.b16 %v2247
        %v2440 = vunpack.c.h.b16 %v2247
        %v2441 = vunpack.c.l.b16 %v2248
        %v2442 = vunpack.c.l.b16 %v2249
        %v2443 = vunpack.c.h.b16 %v2249
        %v2444 = vunpack.c.l.b16 %v2250
        %v2445 = vunpack.c.l.b16 %v2251
        %v2446 = vunpack.c.h.b16 %v2251
        %v2447 = vunpack.c.l.b16 %v2252
        %v2448 = vunpack.c.l.b16 %v2253
        %v2449 = vunpack.c.h.b16 %v2253
        %v2450 = vunpack.c.l.b16 %v2254
        %v2451 = vunpack.c.l.b16 %v2255
        %v2452 = vunpack.c.h.b16 %v2255
        %v2453 = vunpack.c.l.b16 %v2256
        %v2454 = vunpack.c.l.b16 %v2257
        %v2455 = vunpack.c.h.b16 %v2257
        %v2456 = vunpack.c.l.b16 %v2258
        %v2457 = vunpack.c.l.b16 %v2259
        %v2458 = vunpack.c.h.b16 %v2259
        %v2459 = vunpack.c.l.b16 %v2260
        %v2460 = vunpack.c.l.b16 %v2261
        %v2461 = vunpack.c.h.b16 %v2261
        %v2462 = vunpack.c.l.b16 %v2262
        %v2463 = vunpack.c.l.b16 %v2263
        %v2464 = vunpack.c.h.b16 %v2263
        %v2465 = vunpack.c.l.b16 %v2264
        %v2466 = vunpack.c.l.b16 %v2265
        %v2467 = vunpack.c.h.b16 %v2265
        %v2468 = vunpack.c.l.b16 %v2266
        %v2469 = vunpack.c.l.b16 %v2267
        %v2470 = vunpack.c.h.b16 %v2267
        %v2471 = vunpack.c.l.b16 %v2268
        %v2472 = vunpack.c.l.b16 %v2269
        %v2473 = vunpack.c.h.b16 %v2269
        %v2474 = vunpack.c.l.b16 %v2270
        %v2475 = vunpack.c.l.b16 %v2271
        %v2476 = vunpack.c.h.b16 %v2271
        %v2477 = vunpack.c.l.b16 %v2272
        %v2478 = vunpack.c.l.b16 %v2273
        %v2479 = vunpack.c.h.b16 %v2273
        %v2480 = vunpack.c.l.b16 %v2274
        %v2481 = vunpack.c.l.b16 %v2275
        %v2482 = vunpack.c.h.b16 %v2275
        %v2483 = vunpack.c.l.b16 %v2276
        %v2484 = vunpack.c.l.b16 %v2277
        %v2485 = vunpack.c.h.b16 %v2277
        %v2486 = vunpack.c.l.b16 %v2278
        %v2487 = vunpack.c.l.b16 %v2279
        %v2488 = vunpack.c.h.b16 %v2279
        %v2489 = vunpack.c.l.b16 %v2280
        %v2490 = vunpack.c.l.b16 %v2281
        %v2491 = vunpack.c.h.b16 %v2281
        %v2492 = vunpack.c.l.b16 %v2282
        %v2493 = vunpack.c.l.b16 %v2283
        %v2494 = vunpack.c.h.b16 %v2283
        %v2495 = vunpack.c.l.b16 %v2284
        %v2496 = vunpack.c.l.b16 %v2285
        %v2497 = vunpack.c.h.b16 %v2285
        %v2498 = vunpack.c.l.b16 %v2286
        %v2499 = vunpack.c.l.b16 %v2287
        %v2500 = vunpack.c.h.b16 %v2287
        %v2501 = vunpack.c.l.b16 %v2288
        %v2502 = vunpack.c.l.b16 %v2289
        %v2503 = vunpack.c.h.b16 %v2289
        %v2504 = vunpack.c.l.b16 %v2290
        %v2505 = vunpack.c.l.b16 %v2291
        %v2506 = vunpack.c.h.b16 %v2291
        %v2507 = vunpack.c.l.b16 %v2292
        %v2508 = vunpack.c.l.b16 %v2293
        %v2509 = vunpack.c.h.b16 %v2293
        %v2510 = vunpack.c.l.b16 %v2294
        %v2511 = vunpack.c.l.b16 %v2295
        %v2512 = vunpack.c.h.b16 %v2295
        %v2513 = vunpack.c.l.b16 %v2296
        %v2514 = vunpack.c.l.b16 %v2297
        %v2515 = vunpack.c.h.b16 %v2297
        %v2516 = vunpack.c.l.b16 %v2298
        %v2517 = vunpack.c.l.b16 %v2299
        %v2518 = vunpack.c.h.b16 %v2299
        %v2519 = vunpack.c.l.b16 %v2300
        %v2520 = vunpack.c.l.b16 %v2301
        %v2521 = vunpack.c.h.b16 %v2301
        %v2522 = vunpack.c.l.b16 %v2302
        %v2523 = vunpack.c.l.b16 %v2303
        %v2524 = vunpack.c.h.b16 %v2303
        %v2525 = vunpack.c.l.b16 %v2304
        %v2526 = vunpack.c.l.b16 %v2305
        %v2527 = vunpack.c.h.b16 %v2305
        %v2528 = vunpack.c.l.b16 %v2306
        %v2529 = vunpack.c.l.b16 %v2307
        %v2530 = vunpack.c.h.b16 %v2307
        %v2531 = vunpack.c.l.b16 %v2308
        %v2532 = vunpack.c.l.b16 %v2309
        %v2533 = vunpack.c.h.b16 %v2309
        %v2534 = vunpack.c.l.b16 %v2310
        %v2535 = vunpack.c.l.b16 %v2311
        %v2536 = vunpack.c.h.b16 %v2311
        %v2537 = vunpack.c.l.b16 %v2312
        %v2538 = vunpack.c.l.b16 %v2313
        %v2539 = vunpack.c.h.b16 %v2313
        %v2540 = vunpack.c.l.b16 %v2314
        %v2541 = vunpack.c.l.b16 %v2315
        %v2542 = vunpack.c.h.b16 %v2315
        %v2543 = vunpack.c.l.b16 %v2316
        %v2544 = vunpack.c.l.b16 %v2317
        %v2545 = vunpack.c.h.b16 %v2317
        %v2546 = vunpack.c.l.b16 %v2318
        %v2547 = vunpack.c.l.b16 %v2319
        %v2548 = vunpack.c.h.b16 %v2319
        %v2549 = vunpack.c.l.b16 %v2320
        %v2550 = vunpack.c.l.b16 %v2321
        %v2551 = vunpack.c.h.b16 %v2321
        %v2552 = vunpack.c.l.b16 %v2322
        %v2553 = vunpack.c.l.b16 %v2323
        %v2554 = vunpack.c.h.b16 %v2323
        %v2555 = vunpack.c.l.b16 %v2324
        %v2556 = vunpack.c.l.b16 %v2325
        %v2557 = vunpack.c.h.b16 %v2325
        %v2558 = vunpack.c.l.b16 %v2326
        %v2559 = vunpack.c.l.b16 %v2327
        %v2560 = vunpack.c.h.b16 %v2327
        %v2561 = vunpack.c.l.b16 %v2328
        %v2562 = vunpack.c.l.b16 %v2329
        %v2563 = vunpack.c.h.b16 %v2329
        %v2564 = vunpack.c.l.b16 %v2330
        %v2565 = vunpack.c.l.b16 %v2331
        %v2566 = vunpack.c.h.b16 %v2331
        %v2567 = vunpack.c.l.b16 %v2332
        %v2568 = vunpack.c.l.b16 %v2333
        %v2569 = vunpack.c.h.b16 %v2333
        %v2570 = vunpack.c.l.b16 %v2334
        %v2571 = vunpack.c.l.b16 %v2335
        %v2572 = vunpack.c.h.b16 %v2335
        %v2573 = vunpack.c.l.b16 %v2336
        %v2574 = vunpack.c.l.b16 %v2337
        %v2575 = vunpack.c.h.b16 %v2337
        %v2576 = vunpack.c.l.b16 %v2338
        %v2577 = vunpack.c.l.b16 %v2339
        %v2578 = vunpack.c.h.b16 %v2339
        %v2579 = vunpack.c.l.b16 %v2340
        %v2580 = vunpack.c.l.b16 %v2341
        %v2581 = vunpack.c.h.b16 %v2341
        %v2582 = vunpack.c.l.b16 %v2342
        %v2583 = vpack.c.b16 %v2442, %v2439
        %v2584 = vpack.c.b16 %v2443, %v2440
        %v2585 = vpack.c.b16 %v2444, %v2441
        %v2586 = vpack.c.b16 %v2448, %v2445
        %v2587 = vpack.c.b16 %v2449, %v2446
        %v2588 = vpack.c.b16 %v2450, %v2447
        %v2589 = vpack.c.b16 %v2454, %v2451
        %v2590 = vpack.c.b16 %v2455, %v2452
        %v2591 = vpack.c.b16 %v2456, %v2453
        %v2592 = vpack.c.b16 %v2460, %v2457
        %v2593 = vpack.c.b16 %v2461, %v2458
        %v2594 = vpack.c.b16 %v2462, %v2459
        %v2595 = vpack.c.b16 %v2466, %v2463
        %v2596 = vpack.c.b16 %v2467, %v2464
        %v2597 = vpack.c.b16 %v2468, %v2465
        %v2598 = vpack.c.b16 %v2472, %v2469
        %v2599 = vpack.c.b16 %v2473, %v2470
        %v2600 = vpack.c.b16 %v2474, %v2471
        %v2601 = vpack.c.b16 %v2478, %v2475
        %v2602 = vpack.c.b16 %v2479, %v2476
        %v2603 = vpack.c.b16 %v2480, %v2477
        %v2604 = vpack.c.b16 %v2484, %v2481
        %v2605 = vpack.c.b16 %v2485, %v2482
        %v2606 = vpack.c.b16 %v2486, %v2483
        %v2607 = vpack.c.b16 %v2490, %v2487
        %v2608 = vpack.c.b16 %v2491, %v2488
        %v2609 = vpack.c.b16 %v2492, %v2489
        %v2610 = vpack.c.b16 %v2496, %v2493
        %v2611 = vpack.c.b16 %v2497, %v2494
        %v2612 = vpack.c.b16 %v2498, %v2495
        %v2613 = vpack.c.b16 %v2502, %v2499
        %v2614 = vpack.c.b16 %v2503, %v2500
        %v2615 = vpack.c.b16 %v2504, %v2501
        %v2616 = vpack.c.b16 %v2508, %v2505
        %v2617 = vpack.c.b16 %v2509, %v2506
        %v2618 = vpack.c.b16 %v2510, %v2507
        %v2619 = vpack.c.b16 %v2514, %v2511
        %v2620 = vpack.c.b16 %v2515, %v2512
        %v2621 = vpack.c.b16 %v2516, %v2513
        %v2622 = vpack.c.b16 %v2520, %v2517
        %v2623 = vpack.c.b16 %v2521, %v2518
        %v2624 = vpack.c.b16 %v2522, %v2519
        %v2625 = vpack.c.b16 %v2526, %v2523
        %v2626 = vpack.c.b16 %v2527, %v2524
        %v2627 = vpack.c.b16 %v2528, %v2525
        %v2628 = vpack.c.b16 %v2532, %v2529
        %v2629 = vpack.c.b16 %v2533, %v2530
        %v2630 = vpack.c.b16 %v2534, %v2531
        %v2631 = vpack.c.b16 %v2538, %v2535
        %v2632 = vpack.c.b16 %v2539, %v2536
        %v2633 = vpack.c.b16 %v2540, %v2537
        %v2634 = vpack.c.b16 %v2544, %v2541
        %v2635 = vpack.c.b16 %v2545, %v2542
        %v2636 = vpack.c.b16 %v2546, %v2543
        %v2637 = vpack.c.b16 %v2550, %v2547
        %v2638 = vpack.c.b16 %v2551, %v2548
        %v2639 = vpack.c.b16 %v2552, %v2549
        %v2640 = vpack.c.b16 %v2556, %v2553
        %v2641 = vpack.c.b16 %v2557, %v2554
        %v2642 = vpack.c.b16 %v2558, %v2555
        %v2643 = vpack.c.b16 %v2562, %v2559
        %v2644 = vpack.c.b16 %v2563, %v2560
        %v2645 = vpack.c.b16 %v2564, %v2561
        %v2646 = vpack.c.b16 %v2568, %v2565
        %v2647 = vpack.c.b16 %v2569, %v2566
        %v2648 = vpack.c.b16 %v2570, %v2567
        %v2649 = vpack.c.b16 %v2574, %v2571
        %v2650 = vpack.c.b16 %v2575, %v2572
        %v2651 = vpack.c.b16 %v2576, %v2573
        %v2652 = vpack.c.b16 %v2580, %v2577
        %v2653 = vpack.c.b16 %v2581, %v2578
        %v2654 = vpack.c.b16 %v2582, %v2579
        %2727 = vmatprep.subr.bf16.mxu0 %v2605
        %2728 = vmatpush1.bf16.msra.mxu0 %v2604
        %2729 = vmatprep.subr.bf16.mxu0 %v2602
        %2730 = vmatpush1.bf16.msra.mxu0 %v2601
        %2731 = vmatprep.subr.bf16.mxu0 %v2599
        %2732 = vmatpush1.bf16.msra.mxu0 %v2598
        %2733 = vmatprep.subr.bf16.mxu0 %v2596
        %2734 = vmatpush1.bf16.msra.mxu0 %v2595
        %2735 = vmatprep.subr.bf16.mxu0 %v2593
        %2736 = vmatpush1.bf16.msra.mxu0 %v2592
        %2737 = vmatprep.subr.bf16.mxu0 %v2590
        %2738 = vmatpush1.bf16.msra.mxu0 %v2589
        %2739 = vmatprep.subr.bf16.mxu0 %v2587
        %2740 = vmatpush1.bf16.msra.mxu0 %v2586
        %2741 = vmatprep.subr.bf16.mxu0 %v2584
        %2742 = vmatpush1.bf16.msra.mxu0 %v2583
        %2743 = vmatprep.subr.bf16.mxu0 %v2629
        %2744 = vmatpush2.bf16.msra.mxu0 %v2628
        %2745 = vmatprep.subr.bf16.mxu0 %v2626
        %2746 = vmatpush2.bf16.msra.mxu0 %v2625
        %2747 = vmatprep.subr.bf16.mxu0 %v2623
        %2748 = vmatpush2.bf16.msra.mxu0 %v2622
        %2749 = vmatprep.subr.bf16.mxu0 %v2620
        %2750 = vmatpush2.bf16.msra.mxu0 %v2619
        %2751 = vmatprep.subr.bf16.mxu0 %v2617
        %2752 = vmatpush2.bf16.msra.mxu0 %v2616
        %2753 = vmatprep.subr.bf16.mxu0 %v2614
        %2754 = vmatpush2.bf16.msra.mxu0 %v2613
        %2755 = vmatprep.subr.bf16.mxu0 %v2611
        %2756 = vmatpush2.bf16.msra.mxu0 %v2610
        %2757 = vmatprep.subr.bf16.mxu0 %v2608
        %2758 = vmatpush2.bf16.msra.mxu0 %v2607
        %2759 = vmatprep.mubr.bf16.mxu0 %v1903
        %2760 = vmatmul.mubr.bf16.gmra.mxu0 %v1902
        %v2761 = vpop.f32.mrf.mxu0
        %v2762 = vadd.f32 0.0, %v2761
        %v2763 = vpop.f32.mrf.mxu0
        %v2764 = vadd.f32 0.0, %v2763
        %v2765 = vpop.f32.mrf.mxu0
        %v2766 = vadd.f32 0.0, %v2765
        %v2767 = vpop.f32.mrf.mxu0
        %v2768 = vadd.f32 0.0, %v2767
        %2769 = vdwg.mxu0
        %2770 = vmatprep.subr.bf16.mxu0 %v2653
        %2771 = vmatpush1.bf16.msra.mxu0 %v2652
        %2772 = vmatprep.subr.bf16.mxu0 %v2650
        %2773 = vmatpush1.bf16.msra.mxu0 %v2649
        %2774 = vmatprep.subr.bf16.mxu0 %v2647
        %2775 = vmatpush1.bf16.msra.mxu0 %v2646
        %2776 = vmatprep.subr.bf16.mxu0 %v2644
        %2777 = vmatpush1.bf16.msra.mxu0 %v2643
        %2778 = vmatprep.subr.bf16.mxu0 %v2641
        %2779 = vmatpush1.bf16.msra.mxu0 %v2640
        %2780 = vmatprep.subr.bf16.mxu0 %v2638
        %2781 = vmatpush1.bf16.msra.mxu0 %v2637
        %2782 = vmatprep.subr.bf16.mxu0 %v2635
        %2783 = vmatpush1.bf16.msra.mxu0 %v2634
        %2784 = vmatprep.subr.bf16.mxu0 %v2632
        %2785 = vmatpush1.bf16.msra.mxu0 %v2631
        %2786 = vmatprep.subr.bf16.mxu0 0
        %2787 = vmatpush2.bf16.msra.mxu0 0
        %2788 = vmatprep.subr.bf16.mxu0 0
        %2789 = vmatpush2.bf16.msra.mxu0 0
        %2790 = vmatprep.subr.bf16.mxu0 0
        %2791 = vmatpush2.bf16.msra.mxu0 0
        %2792 = vmatprep.subr.bf16.mxu0 0
        %2793 = vmatpush2.bf16.msra.mxu0 0
        %2794 = vmatprep.subr.bf16.mxu0 0
        %2795 = vmatpush2.bf16.msra.mxu0 0
        %2796 = vmatprep.subr.bf16.mxu0 0
        %2797 = vmatpush2.bf16.msra.mxu0 0
        %2798 = vmatprep.subr.bf16.mxu0 0
        %2799 = vmatpush2.bf16.msra.mxu0 0
        %2800 = vmatprep.subr.bf16.mxu0 0
        %2801 = vmatpush2.bf16.msra.mxu0 0
        %2802 = vmatprep.mubr.bf16.mxu0 0
        %2803 = vmatmul.mubr.bf16.gmra.mxu0 %v1904
        %v2804 = vpop.f32.mrf.mxu0
        %v2805 = vadd.f32 %v2762, %v2804
        %v2806 = vpop.f32.mrf.mxu0
        %v2807 = vadd.f32 %v2764, %v2806
        %v2808 = vpop.f32.mrf.mxu0
        %v2809 = vadd.f32 %v2766, %v2808
        %v2810 = vpop.f32.mrf.mxu0
        %v2811 = vadd.f32 %v2768, %v2810
        %2812 = vdwg.mxu0
        %2813 = vmatprep.subr.bf16.mxu0 0
        %2814 = vmatpush1.bf16.msra.mxu0 %v2606
        %2815 = vmatprep.subr.bf16.mxu0 0
        %2816 = vmatpush1.bf16.msra.mxu0 %v2603
        %2817 = vmatprep.subr.bf16.mxu0 0
        %2818 = vmatpush1.bf16.msra.mxu0 %v2600
        %2819 = vmatprep.subr.bf16.mxu0 0
        %2820 = vmatpush1.bf16.msra.mxu0 %v2597
        %2821 = vmatprep.subr.bf16.mxu0 0
        %2822 = vmatpush1.bf16.msra.mxu0 %v2594
        %2823 = vmatprep.subr.bf16.mxu0 0
        %2824 = vmatpush1.bf16.msra.mxu0 %v2591
        %2825 = vmatprep.subr.bf16.mxu0 0
        %2826 = vmatpush1.bf16.msra.mxu0 %v2588
        %2827 = vmatprep.subr.bf16.mxu0 0
        %2828 = vmatpush1.bf16.msra.mxu0 %v2585
        %2829 = vmatprep.subr.bf16.mxu0 0
        %2830 = vmatpush2.bf16.msra.mxu0 %v2630
        %2831 = vmatprep.subr.bf16.mxu0 0
        %2832 = vmatpush2.bf16.msra.mxu0 %v2627
        %2833 = vmatprep.subr.bf16.mxu0 0
        %2834 = vmatpush2.bf16.msra.mxu0 %v2624
        %2835 = vmatprep.subr.bf16.mxu0 0
        %2836 = vmatpush2.bf16.msra.mxu0 %v2621
        %2837 = vmatprep.subr.bf16.mxu0 0
        %2838 = vmatpush2.bf16.msra.mxu0 %v2618
        %2839 = vmatprep.subr.bf16.mxu0 0
        %2840 = vmatpush2.bf16.msra.mxu0 %v2615
        %2841 = vmatprep.subr.bf16.mxu0 0
        %2842 = vmatpush2.bf16.msra.mxu0 %v2612
        %2843 = vmatprep.subr.bf16.mxu0 0
        %2844 = vmatpush2.bf16.msra.mxu0 %v2609
        %2845 = vmatprep.mubr.bf16.mxu0 %v1903
        %2846 = vmatmul.mubr.bf16.gmra.mxu0 %v1902
        %v2847 = vpop.f32.mrf.mxu0
        %v2848 = vadd.f32 0.0, %v2847
        %v2849 = vpop.f32.mrf.mxu0
        %v2850 = vpop.f32.mrf.mxu0
        %v2851 = vadd.f32 0.0, %v2850
        %v2852 = vpop.f32.mrf.mxu0
        %2853 = vdwg.mxu0
        %2854 = vmatprep.subr.bf16.mxu0 0
        %2855 = vmatpush1.bf16.msra.mxu0 %v2654
        %2856 = vmatprep.subr.bf16.mxu0 0
        %2857 = vmatpush1.bf16.msra.mxu0 %v2651
        %2858 = vmatprep.subr.bf16.mxu0 0
        %2859 = vmatpush1.bf16.msra.mxu0 %v2648
        %2860 = vmatprep.subr.bf16.mxu0 0
        %2861 = vmatpush1.bf16.msra.mxu0 %v2645
        %2862 = vmatprep.subr.bf16.mxu0 0
        %2863 = vmatpush1.bf16.msra.mxu0 %v2642
        %2864 = vmatprep.subr.bf16.mxu0 0
        %2865 = vmatpush1.bf16.msra.mxu0 %v2639
        %2866 = vmatprep.subr.bf16.mxu0 0
        %2867 = vmatpush1.bf16.msra.mxu0 %v2636
        %2868 = vmatprep.subr.bf16.mxu0 0
        %2869 = vmatpush1.bf16.msra.mxu0 %v2633
        %2870 = vmatprep.subr.bf16.mxu0 0
        %2871 = vmatpush2.bf16.msra.mxu0 0
        %2872 = vmatprep.subr.bf16.mxu0 0
        %2873 = vmatpush2.bf16.msra.mxu0 0
        %2874 = vmatprep.subr.bf16.mxu0 0
        %2875 = vmatpush2.bf16.msra.mxu0 0
        %2876 = vmatprep.subr.bf16.mxu0 0
        %2877 = vmatpush2.bf16.msra.mxu0 0
        %2878 = vmatprep.subr.bf16.mxu0 0
        %2879 = vmatpush2.bf16.msra.mxu0 0
        %2880 = vmatprep.subr.bf16.mxu0 0
        %2881 = vmatpush2.bf16.msra.mxu0 0
        %2882 = vmatprep.subr.bf16.mxu0 0
        %2883 = vmatpush2.bf16.msra.mxu0 0
        %2884 = vmatprep.subr.bf16.mxu0 0
        %2885 = vmatpush2.bf16.msra.mxu0 0
        %2886 = vmatprep.mubr.bf16.mxu0 0
        %2887 = vmatmul.mubr.bf16.gmra.mxu0 %v1904
        %v2888 = vpop.f32.mrf.mxu0
        %v2889 = vadd.f32 %v2848, %v2888
        %v2890 = vpop.f32.mrf.mxu0
        %v2891 = vpop.f32.mrf.mxu0
        %v2892 = vadd.f32 %v2851, %v2891
        %v2893 = vpop.f32.mrf.mxu0
        %2894 = vdwg.mxu0
        %v2895 = vld [vmem:[%s5] sm:$0x3]
        %v2897 = vlaneseq
        %v2898 = vshrl.u32 %v2897, 7
        %v2899 = vsub.s32 0, %v2898
        %v2900 = vrot.slane %v2895, %v2899
        %v2901 = vlaneseq
        %v2902 = vshrl.u32 %v2901, 7
        %v2903 = vsub.s32 1, %v2902
        %v2904 = vrot.slane %v2895, %v2903
        %v2907 = vadd.f32 %v2805, %v2900
        %v2908 = vadd.f32 %v2807, %v2904
        %v2909 = vadd.f32 %v2809, %v2900
        %v2910 = vadd.f32 %v2811, %v2904
        %v2913 = vrot.slane %v2243, 1
        %v2914 = vrot.slane %v2244, 1
        %v2919 = vrot.slane %v2243, 7
        %v2920 = vrot.slane %v2244, 7
        %v2921 = vrot.slane %v2245, 7
        %v2922 = vsel %vm462, %v2919, %v2921
        %v2923 = vrot.slane %v2246, 7
        %v2924 = vsel %vm462, %v2920, %v2923
        %v2929 = vsel %vm462, %v2913, %v2919
        %v2930 = vsel %vm462, %v2914, %v2920
        %v2931 = vrot.slane %v2245, 1
        %v2932 = vsel %vm402, %v2913, %v2931
        %v2933 = vrot.slane %v2246, 1
        %v2934 = vsel %vm402, %v2914, %v2933
        %v2941 = vsel %vm402, %v2931, %v2921
        %v2942 = vsel %vm402, %v2933, %v2923
        %v2943 = vld [vmem:[#allocation7] sm:$0xf]
        %v2944 = vld [vmem:[#allocation7 + $0x4] sm:$0xf]
        %v2945 = vld [vmem:[#allocation7 + $0x8] sm:$0xf]
        %v2946 = vld [vmem:[#allocation7 + $0xc] sm:$0xf]
        %v2947 = vld [vmem:[#allocation7 + $0x10] sm:$0xf]
        %v2948 = vld [vmem:[#allocation7 + $0x14] sm:$0xf]
        %v2949 = vld [vmem:[#allocation7 + $0x18] sm:$0xf]
        %v2950 = vld [vmem:[#allocation7 + $0x1c] sm:$0xf]
        %v2951 = vld [vmem:[#allocation7 + $0x20] sm:$0xf]
        %v2952 = vld [vmem:[#allocation7 + $0x24] sm:$0xf]
        %v2953 = vld [vmem:[#allocation7 + $0x28] sm:$0xf]
        %v2954 = vld [vmem:[#allocation7 + $0x2c] sm:$0xf]
        %v2955 = vld [vmem:[#allocation7 + $0x30] sm:$0xf]
        %v2956 = vld [vmem:[#allocation7 + $0x34] sm:$0xf]
        %v2957 = vld [vmem:[#allocation7 + $0x38] sm:$0xf]
        %v2958 = vld [vmem:[#allocation7 + $0x3c] sm:$0xf]
        %v2959 = vld [vmem:[#allocation7 + $0x40] sm:$0xf]
        %v2960 = vld [vmem:[#allocation7 + $0x44] sm:$0xf]
        %v2961 = vld [vmem:[#allocation7 + $0x48] sm:$0xf]
        %v2962 = vld [vmem:[#allocation7 + $0x4c] sm:$0xf]
        %v2963 = vld [vmem:[#allocation7 + $0x50] sm:$0xf]
        %v2964 = vld [vmem:[#allocation7 + $0x54] sm:$0xf]
        %v2965 = vld [vmem:[#allocation7 + $0x58] sm:$0xf]
        %v2966 = vld [vmem:[#allocation7 + $0x5c] sm:$0xf]
        %v2967 = vld [vmem:[#allocation7 + $0x60] sm:$0xf]
        %v2968 = vld [vmem:[#allocation7 + $0x64] sm:$0xf]
        %v2969 = vld [vmem:[#allocation7 + $0x68] sm:$0xf]
        %v2970 = vld [vmem:[#allocation7 + $0x6c] sm:$0xf]
        %v2971 = vld [vmem:[#allocation7 + $0x70] sm:$0xf]
        %v2972 = vld [vmem:[#allocation7 + $0x74] sm:$0xf]
        %v2973 = vld [vmem:[#allocation7 + $0x78] sm:$0xf]
        %v2974 = vld [vmem:[#allocation7 + $0x7c] sm:$0xf]
        %v2975 = vld [vmem:[#allocation7 + $0x80] sm:$0xf]
        %v2976 = vld [vmem:[#allocation7 + $0x84] sm:$0xf]
        %v2977 = vld [vmem:[#allocation7 + $0x88] sm:$0xf]
        %v2978 = vld [vmem:[#allocation7 + $0x8c] sm:$0xf]
        %v2979 = vld [vmem:[#allocation7 + $0x90] sm:$0xf]
        %v2980 = vld [vmem:[#allocation7 + $0x94] sm:$0xf]
        %v2981 = vld [vmem:[#allocation7 + $0x98] sm:$0xf]
        %v2982 = vld [vmem:[#allocation7 + $0x9c] sm:$0xf]
        %v2983 = vld [vmem:[#allocation7 + $0xa0] sm:$0xf]
        %v2984 = vld [vmem:[#allocation7 + $0xa4] sm:$0xf]
        %v2985 = vld [vmem:[#allocation7 + $0xa8] sm:$0xf]
        %v2986 = vld [vmem:[#allocation7 + $0xac] sm:$0xf]
        %v2987 = vld [vmem:[#allocation7 + $0xb0] sm:$0xf]
        %v2988 = vld [vmem:[#allocation7 + $0xb4] sm:$0xf]
        %v2989 = vld [vmem:[#allocation7 + $0xb8] sm:$0xf]
        %v2990 = vld [vmem:[#allocation7 + $0xbc] sm:$0xf]
        %v2991 = vld [vmem:[#allocation7 + $0xc0] sm:$0xf]
        %v2992 = vld [vmem:[#allocation7 + $0xc4] sm:$0xf]
        %v2993 = vld [vmem:[#allocation7 + $0xc8] sm:$0xf]
        %v2994 = vld [vmem:[#allocation7 + $0xcc] sm:$0xf]
        %v2995 = vld [vmem:[#allocation7 + $0xd0] sm:$0xf]
        %v2996 = vld [vmem:[#allocation7 + $0xd4] sm:$0xf]
        %v2997 = vld [vmem:[#allocation7 + $0xd8] sm:$0xf]
        %v2998 = vld [vmem:[#allocation7 + $0xdc] sm:$0xf]
        %v2999 = vld [vmem:[#allocation7 + $0xe0] sm:$0xf]
        %v3000 = vld [vmem:[#allocation7 + $0xe4] sm:$0xf]
        %v3001 = vld [vmem:[#allocation7 + $0xe8] sm:$0xf]
        %v3002 = vld [vmem:[#allocation7 + $0xec] sm:$0xf]
        %v3003 = vld [vmem:[#allocation7 + $0xf0] sm:$0xf]
        %v3004 = vld [vmem:[#allocation7 + $0xf4] sm:$0xf]
        %v3005 = vld [vmem:[#allocation7 + $0xf8] sm:$0xf]
        %v3006 = vld [vmem:[#allocation7 + $0xfc] sm:$0xf]
        %v3007 = vld [vmem:[#allocation7 + $0x100] sm:$0xf]
        %v3008 = vld [vmem:[#allocation7 + $0x104] sm:$0xf]
        %v3009 = vld [vmem:[#allocation7 + $0x108] sm:$0xf]
        %v3010 = vld [vmem:[#allocation7 + $0x10c] sm:$0xf]
        %v3011 = vld [vmem:[#allocation7 + $0x110] sm:$0xf]
        %v3012 = vld [vmem:[#allocation7 + $0x114] sm:$0xf]
        %v3013 = vld [vmem:[#allocation7 + $0x118] sm:$0xf]
        %v3014 = vld [vmem:[#allocation7 + $0x11c] sm:$0xf]
        %v3015 = vld [vmem:[#allocation7 + $0x120] sm:$0xf]
        %v3016 = vld [vmem:[#allocation7 + $0x124] sm:$0xf]
        %v3017 = vld [vmem:[#allocation7 + $0x128] sm:$0xf]
        %v3018 = vld [vmem:[#allocation7 + $0x12c] sm:$0xf]
        %v3019 = vld [vmem:[#allocation7 + $0x130] sm:$0xf]
        %v3020 = vld [vmem:[#allocation7 + $0x134] sm:$0xf]
        %v3021 = vld [vmem:[#allocation7 + $0x138] sm:$0xf]
        %v3022 = vld [vmem:[#allocation7 + $0x13c] sm:$0xf]
        %v3023 = vld [vmem:[#allocation7 + $0x140] sm:$0xf]
        %v3024 = vld [vmem:[#allocation7 + $0x144] sm:$0xf]
        %v3025 = vld [vmem:[#allocation7 + $0x148] sm:$0xf]
        %v3026 = vld [vmem:[#allocation7 + $0x14c] sm:$0xf]
        %v3027 = vld [vmem:[#allocation7 + $0x150] sm:$0xf]
        %v3028 = vld [vmem:[#allocation7 + $0x154] sm:$0xf]
        %v3029 = vld [vmem:[#allocation7 + $0x158] sm:$0xf]
        %v3030 = vld [vmem:[#allocation7 + $0x15c] sm:$0xf]
        %v3031 = vld [vmem:[#allocation7 + $0x160] sm:$0xf]
        %v3032 = vld [vmem:[#allocation7 + $0x164] sm:$0xf]
        %v3033 = vld [vmem:[#allocation7 + $0x168] sm:$0xf]
        %v3034 = vld [vmem:[#allocation7 + $0x16c] sm:$0xf]
        %v3035 = vld [vmem:[#allocation7 + $0x170] sm:$0xf]
        %v3036 = vld [vmem:[#allocation7 + $0x174] sm:$0xf]
        %v3037 = vld [vmem:[#allocation7 + $0x178] sm:$0xf]
        %v3038 = vld [vmem:[#allocation7 + $0x17c] sm:$0xf]
        %v3039 = vpack.c.bf16 %v2922, %v2929
        %v3040 = vpack.c.bf16 %v2924, %v2930
        %v3041 = vpack.c.bf16 %v2245, %v2243
        %v3042 = vpack.c.bf16 %v2246, %v2244
        %v3043 = vpack.c.bf16 %v2941, %v2932
        %v3044 = vpack.c.bf16 %v2942, %v2934
        %v3141 = vunpack.c.l.b16 %v2943
        %v3142 = vunpack.c.l.b16 %v2944
        %v3143 = vunpack.c.l.b16 %v2945
        %v3144 = vunpack.c.l.b16 %v2946
        %v3145 = vunpack.c.l.b16 %v2947
        %v3146 = vunpack.c.l.b16 %v2948
        %v3147 = vunpack.c.l.b16 %v2949
        %v3148 = vunpack.c.l.b16 %v2950
        %v3149 = vunpack.c.l.b16 %v2951
        %v3150 = vunpack.c.l.b16 %v2952
        %v3151 = vunpack.c.l.b16 %v2953
        %v3152 = vunpack.c.l.b16 %v2954
        %v3153 = vunpack.c.l.b16 %v2955
        %v3154 = vunpack.c.l.b16 %v2956
        %v3155 = vunpack.c.l.b16 %v2957
        %v3156 = vunpack.c.l.b16 %v2958
        %v3157 = vunpack.c.l.b16 %v2959
        %v3158 = vunpack.c.l.b16 %v2960
        %v3159 = vunpack.c.l.b16 %v2961
        %v3160 = vunpack.c.l.b16 %v2962
        %v3161 = vunpack.c.l.b16 %v2963
        %v3162 = vunpack.c.l.b16 %v2964
        %v3163 = vunpack.c.l.b16 %v2965
        %v3164 = vunpack.c.l.b16 %v2966
        %v3165 = vunpack.c.l.b16 %v2967
        %v3166 = vunpack.c.l.b16 %v2968
        %v3167 = vunpack.c.l.b16 %v2969
        %v3168 = vunpack.c.l.b16 %v2970
        %v3169 = vunpack.c.l.b16 %v2971
        %v3170 = vunpack.c.l.b16 %v2972
        %v3171 = vunpack.c.l.b16 %v2973
        %v3172 = vunpack.c.l.b16 %v2974
        %v3173 = vunpack.c.l.b16 %v2975
        %v3174 = vunpack.c.l.b16 %v2976
        %v3175 = vunpack.c.l.b16 %v2977
        %v3176 = vunpack.c.l.b16 %v2978
        %v3177 = vunpack.c.l.b16 %v2979
        %v3178 = vunpack.c.l.b16 %v2980
        %v3179 = vunpack.c.l.b16 %v2981
        %v3180 = vunpack.c.l.b16 %v2982
        %v3181 = vunpack.c.l.b16 %v2983
        %v3182 = vunpack.c.l.b16 %v2984
        %v3183 = vunpack.c.l.b16 %v2985
        %v3184 = vunpack.c.l.b16 %v2986
        %v3185 = vunpack.c.l.b16 %v2987
        %v3186 = vunpack.c.l.b16 %v2988
        %v3187 = vunpack.c.l.b16 %v2989
        %v3188 = vunpack.c.l.b16 %v2990
        %v3189 = vunpack.c.l.b16 %v2991
        %v3190 = vunpack.c.l.b16 %v2992
        %v3191 = vunpack.c.l.b16 %v2993
        %v3192 = vunpack.c.l.b16 %v2994
        %v3193 = vunpack.c.l.b16 %v2995
        %v3194 = vunpack.c.l.b16 %v2996
        %v3195 = vunpack.c.l.b16 %v2997
        %v3196 = vunpack.c.l.b16 %v2998
        %v3197 = vunpack.c.l.b16 %v2999
        %v3198 = vunpack.c.l.b16 %v3000
        %v3199 = vunpack.c.l.b16 %v3001
        %v3200 = vunpack.c.l.b16 %v3002
        %v3201 = vunpack.c.l.b16 %v3003
        %v3202 = vunpack.c.l.b16 %v3004
        %v3203 = vunpack.c.l.b16 %v3005
        %v3204 = vunpack.c.l.b16 %v3006
        %v3205 = vunpack.c.l.b16 %v3007
        %v3206 = vunpack.c.l.b16 %v3008
        %v3207 = vunpack.c.l.b16 %v3009
        %v3208 = vunpack.c.l.b16 %v3010
        %v3209 = vunpack.c.l.b16 %v3011
        %v3210 = vunpack.c.l.b16 %v3012
        %v3211 = vunpack.c.l.b16 %v3013
        %v3212 = vunpack.c.l.b16 %v3014
        %v3213 = vunpack.c.l.b16 %v3015
        %v3214 = vunpack.c.l.b16 %v3016
        %v3215 = vunpack.c.l.b16 %v3017
        %v3216 = vunpack.c.l.b16 %v3018
        %v3217 = vunpack.c.l.b16 %v3019
        %v3218 = vunpack.c.l.b16 %v3020
        %v3219 = vunpack.c.l.b16 %v3021
        %v3220 = vunpack.c.l.b16 %v3022
        %v3221 = vunpack.c.l.b16 %v3023
        %v3222 = vunpack.c.l.b16 %v3024
        %v3223 = vunpack.c.l.b16 %v3025
        %v3224 = vunpack.c.l.b16 %v3026
        %v3225 = vunpack.c.l.b16 %v3027
        %v3226 = vunpack.c.l.b16 %v3028
        %v3227 = vunpack.c.l.b16 %v3029
        %v3228 = vunpack.c.l.b16 %v3030
        %v3229 = vunpack.c.l.b16 %v3031
        %v3230 = vunpack.c.l.b16 %v3032
        %v3231 = vunpack.c.l.b16 %v3033
        %v3232 = vunpack.c.l.b16 %v3034
        %v3233 = vunpack.c.l.b16 %v3035
        %v3234 = vunpack.c.l.b16 %v3036
        %v3235 = vunpack.c.l.b16 %v3037
        %v3236 = vunpack.c.l.b16 %v3038
        %v3237 = vpack.c.b16 %v3142, %v3141
        %v3238 = vpack.c.b16 %v3144, %v3143
        %v3239 = vpack.c.b16 %v3146, %v3145
        %v3240 = vpack.c.b16 %v3148, %v3147
        %v3241 = vpack.c.b16 %v3150, %v3149
        %v3242 = vpack.c.b16 %v3152, %v3151
        %v3243 = vpack.c.b16 %v3154, %v3153
        %v3244 = vpack.c.b16 %v3156, %v3155
        %v3245 = vpack.c.b16 %v3158, %v3157
        %v3246 = vpack.c.b16 %v3160, %v3159
        %v3247 = vpack.c.b16 %v3162, %v3161
        %v3248 = vpack.c.b16 %v3164, %v3163
        %v3249 = vpack.c.b16 %v3166, %v3165
        %v3250 = vpack.c.b16 %v3168, %v3167
        %v3251 = vpack.c.b16 %v3170, %v3169
        %v3252 = vpack.c.b16 %v3172, %v3171
        %v3253 = vpack.c.b16 %v3174, %v3173
        %v3254 = vpack.c.b16 %v3176, %v3175
        %v3255 = vpack.c.b16 %v3178, %v3177
        %v3256 = vpack.c.b16 %v3180, %v3179
        %v3257 = vpack.c.b16 %v3182, %v3181
        %v3258 = vpack.c.b16 %v3184, %v3183
        %v3259 = vpack.c.b16 %v3186, %v3185
        %v3260 = vpack.c.b16 %v3188, %v3187
        %v3261 = vpack.c.b16 %v3190, %v3189
        %v3262 = vpack.c.b16 %v3192, %v3191
        %v3263 = vpack.c.b16 %v3194, %v3193
        %v3264 = vpack.c.b16 %v3196, %v3195
        %v3265 = vpack.c.b16 %v3198, %v3197
        %v3266 = vpack.c.b16 %v3200, %v3199
        %v3267 = vpack.c.b16 %v3202, %v3201
        %v3268 = vpack.c.b16 %v3204, %v3203
        %v3269 = vpack.c.b16 %v3206, %v3205
        %v3270 = vpack.c.b16 %v3208, %v3207
        %v3271 = vpack.c.b16 %v3210, %v3209
        %v3272 = vpack.c.b16 %v3212, %v3211
        %v3273 = vpack.c.b16 %v3214, %v3213
        %v3274 = vpack.c.b16 %v3216, %v3215
        %v3275 = vpack.c.b16 %v3218, %v3217
        %v3276 = vpack.c.b16 %v3220, %v3219
        %v3277 = vpack.c.b16 %v3222, %v3221
        %v3278 = vpack.c.b16 %v3224, %v3223
        %v3279 = vpack.c.b16 %v3226, %v3225
        %v3280 = vpack.c.b16 %v3228, %v3227
        %v3281 = vpack.c.b16 %v3230, %v3229
        %v3282 = vpack.c.b16 %v3232, %v3231
        %v3283 = vpack.c.b16 %v3234, %v3233
        %v3284 = vpack.c.b16 %v3236, %v3235
        %3333 = vmatprep.subr.bf16.mxu0 0
        %3334 = vmatpush1.bf16.msra.mxu0 %v3244
        %3335 = vmatprep.subr.bf16.mxu0 0
        %3336 = vmatpush1.bf16.msra.mxu0 %v3243
        %3337 = vmatprep.subr.bf16.mxu0 0
        %3338 = vmatpush1.bf16.msra.mxu0 %v3242
        %3339 = vmatprep.subr.bf16.mxu0 0
        %3340 = vmatpush1.bf16.msra.mxu0 %v3241
        %3341 = vmatprep.subr.bf16.mxu0 0
        %3342 = vmatpush1.bf16.msra.mxu0 %v3240
        %3343 = vmatprep.subr.bf16.mxu0 0
        %3344 = vmatpush1.bf16.msra.mxu0 %v3239
        %3345 = vmatprep.subr.bf16.mxu0 0
        %3346 = vmatpush1.bf16.msra.mxu0 %v3238
        %3347 = vmatprep.subr.bf16.mxu0 0
        %3348 = vmatpush1.bf16.msra.mxu0 %v3237
        %3349 = vmatprep.subr.bf16.mxu0 0
        %3350 = vmatpush2.bf16.msra.mxu0 %v3252
        %3351 = vmatprep.subr.bf16.mxu0 0
        %3352 = vmatpush2.bf16.msra.mxu0 %v3251
        %3353 = vmatprep.subr.bf16.mxu0 0
        %3354 = vmatpush2.bf16.msra.mxu0 %v3250
        %3355 = vmatprep.subr.bf16.mxu0 0
        %3356 = vmatpush2.bf16.msra.mxu0 %v3249
        %3357 = vmatprep.subr.bf16.mxu0 0
        %3358 = vmatpush2.bf16.msra.mxu0 %v3248
        %3359 = vmatprep.subr.bf16.mxu0 0
        %3360 = vmatpush2.bf16.msra.mxu0 %v3247
        %3361 = vmatprep.subr.bf16.mxu0 0
        %3362 = vmatpush2.bf16.msra.mxu0 %v3246
        %3363 = vmatprep.subr.bf16.mxu0 0
        %3364 = vmatpush2.bf16.msra.mxu0 %v3245
        %3365 = vmatprep.mubr.bf16.mxu0 %v3040
        %3366 = vmatmul.mubr.bf16.gmra.mxu0 %v3039
        %v3367 = vpop.f32.mrf.mxu0
        %v3368 = vadd.f32 0.0, %v3367
        %v3369 = vpop.f32.mrf.mxu0
        %v3370 = vpop.f32.mrf.mxu0
        %v3371 = vadd.f32 0.0, %v3370
        %v3372 = vpop.f32.mrf.mxu0
        %3373 = vdwg.mxu0
        %3374 = vmatprep.subr.bf16.mxu0 0
        %3375 = vmatpush1.bf16.msra.mxu0 %v3260
        %3376 = vmatprep.subr.bf16.mxu0 0
        %3377 = vmatpush1.bf16.msra.mxu0 %v3259
        %3378 = vmatprep.subr.bf16.mxu0 0
        %3379 = vmatpush1.bf16.msra.mxu0 %v3258
        %3380 = vmatprep.subr.bf16.mxu0 0
        %3381 = vmatpush1.bf16.msra.mxu0 %v3257
        %3382 = vmatprep.subr.bf16.mxu0 0
        %3383 = vmatpush1.bf16.msra.mxu0 %v3256
        %3384 = vmatprep.subr.bf16.mxu0 0
        %3385 = vmatpush1.bf16.msra.mxu0 %v3255
        %3386 = vmatprep.subr.bf16.mxu0 0
        %3387 = vmatpush1.bf16.msra.mxu0 %v3254
        %3388 = vmatprep.subr.bf16.mxu0 0
        %3389 = vmatpush1.bf16.msra.mxu0 %v3253
        %3390 = vmatprep.subr.bf16.mxu0 0
        %3391 = vmatpush2.bf16.msra.mxu0 %v3268
        %3392 = vmatprep.subr.bf16.mxu0 0
        %3393 = vmatpush2.bf16.msra.mxu0 %v3267
        %3394 = vmatprep.subr.bf16.mxu0 0
        %3395 = vmatpush2.bf16.msra.mxu0 %v3266
        %3396 = vmatprep.subr.bf16.mxu0 0
        %3397 = vmatpush2.bf16.msra.mxu0 %v3265
        %3398 = vmatprep.subr.bf16.mxu0 0
        %3399 = vmatpush2.bf16.msra.mxu0 %v3264
        %3400 = vmatprep.subr.bf16.mxu0 0
        %3401 = vmatpush2.bf16.msra.mxu0 %v3263
        %3402 = vmatprep.subr.bf16.mxu0 0
        %3403 = vmatpush2.bf16.msra.mxu0 %v3262
        %3404 = vmatprep.subr.bf16.mxu0 0
        %3405 = vmatpush2.bf16.msra.mxu0 %v3261
        %3406 = vmatprep.mubr.bf16.mxu0 %v3042
        %3407 = vmatmul.mubr.bf16.gmra.mxu0 %v3041
        %v3408 = vpop.f32.mrf.mxu0
        %v3409 = vadd.f32 %v3368, %v3408
        %v3410 = vpop.f32.mrf.mxu0
        %v3411 = vpop.f32.mrf.mxu0
        %v3412 = vadd.f32 %v3371, %v3411
        %v3413 = vpop.f32.mrf.mxu0
        %3414 = vdwg.mxu0
        %3415 = vmatprep.subr.bf16.mxu0 0
        %3416 = vmatpush1.bf16.msra.mxu0 %v3276
        %3417 = vmatprep.subr.bf16.mxu0 0
        %3418 = vmatpush1.bf16.msra.mxu0 %v3275
        %3419 = vmatprep.subr.bf16.mxu0 0
        %3420 = vmatpush1.bf16.msra.mxu0 %v3274
        %3421 = vmatprep.subr.bf16.mxu0 0
        %3422 = vmatpush1.bf16.msra.mxu0 %v3273
        %3423 = vmatprep.subr.bf16.mxu0 0
        %3424 = vmatpush1.bf16.msra.mxu0 %v3272
        %3425 = vmatprep.subr.bf16.mxu0 0
        %3426 = vmatpush1.bf16.msra.mxu0 %v3271
        %3427 = vmatprep.subr.bf16.mxu0 0
        %3428 = vmatpush1.bf16.msra.mxu0 %v3270
        %3429 = vmatprep.subr.bf16.mxu0 0
        %3430 = vmatpush1.bf16.msra.mxu0 %v3269
        %3431 = vmatprep.subr.bf16.mxu0 0
        %3432 = vmatpush2.bf16.msra.mxu0 %v3284
        %3433 = vmatprep.subr.bf16.mxu0 0
        %3434 = vmatpush2.bf16.msra.mxu0 %v3283
        %3435 = vmatprep.subr.bf16.mxu0 0
        %3436 = vmatpush2.bf16.msra.mxu0 %v3282
        %3437 = vmatprep.subr.bf16.mxu0 0
        %3438 = vmatpush2.bf16.msra.mxu0 %v3281
        %3439 = vmatprep.subr.bf16.mxu0 0
        %3440 = vmatpush2.bf16.msra.mxu0 %v3280
        %3441 = vmatprep.subr.bf16.mxu0 0
        %3442 = vmatpush2.bf16.msra.mxu0 %v3279
        %3443 = vmatprep.subr.bf16.mxu0 0
        %3444 = vmatpush2.bf16.msra.mxu0 %v3278
        %3445 = vmatprep.subr.bf16.mxu0 0
        %3446 = vmatpush2.bf16.msra.mxu0 %v3277
        %3447 = vmatprep.mubr.bf16.mxu0 %v3044
        %3448 = vmatmul.mubr.bf16.gmra.mxu0 %v3043
        %v3449 = vpop.f32.mrf.mxu0
        %v3450 = vadd.f32 %v3409, %v3449
        %v3451 = vpop.f32.mrf.mxu0
        %v3452 = vpop.f32.mrf.mxu0
        %v3453 = vadd.f32 %v3412, %v3452
        %v3454 = vpop.f32.mrf.mxu0
        %3455 = vdwg.mxu0
        %v3457 = vrot.slane %v3450, 1
        %v3460 = vrot.slane %v3450, 7
        %v3461 = vrot.slane %v3453, 7
        %v3462 = vsel %vm462, %v3460, %v3461
        %v3465 = vsel %vm462, %v3457, %v3460
        %v3466 = vrot.slane %v3453, 1
        %v3467 = vsel %vm402, %v3457, %v3466
        %v3471 = vsel %vm402, %v3466, %v3461
        %v3472 = vld [vmem:[#allocation8] sm:$0xff]
        %v3473 = vld [vmem:[#allocation8 + $0x8] sm:$0xff]
        %v3474 = vld [vmem:[#allocation8 + $0x10] sm:$0xff]
        %v3475 = vld [vmem:[#allocation8 + $0x18] sm:$0xff]
        %v3476 = vld [vmem:[#allocation8 + $0x20] sm:$0xff]
        %v3477 = vld [vmem:[#allocation8 + $0x28] sm:$0xff]
        %v3478 = vld [vmem:[#allocation8 + $0x30] sm:$0xff]
        %v3479 = vld [vmem:[#allocation8 + $0x38] sm:$0xff]
        %v3480 = vld [vmem:[#allocation8 + $0x40] sm:$0xff]
        %v3481 = vld [vmem:[#allocation8 + $0x48] sm:$0xff]
        %v3482 = vld [vmem:[#allocation8 + $0x50] sm:$0xff]
        %v3483 = vld [vmem:[#allocation8 + $0x58] sm:$0xff]
        %v3484 = vld [vmem:[#allocation8 + $0x60] sm:$0xff]
        %v3485 = vld [vmem:[#allocation8 + $0x68] sm:$0xff]
        %v3486 = vld [vmem:[#allocation8 + $0x70] sm:$0xff]
        %v3487 = vld [vmem:[#allocation8 + $0x78] sm:$0xff]
        %v3488 = vld [vmem:[#allocation8 + $0x80] sm:$0xff]
        %v3489 = vld [vmem:[#allocation8 + $0x88] sm:$0xff]
        %v3490 = vld [vmem:[#allocation8 + $0x90] sm:$0xff]
        %v3491 = vld [vmem:[#allocation8 + $0x98] sm:$0xff]
        %v3492 = vld [vmem:[#allocation8 + $0xa0] sm:$0xff]
        %v3493 = vld [vmem:[#allocation8 + $0xa8] sm:$0xff]
        %v3494 = vld [vmem:[#allocation8 + $0xb0] sm:$0xff]
        %v3495 = vld [vmem:[#allocation8 + $0xb8] sm:$0xff]
        %v3496 = vld [vmem:[#allocation8 + $0xc0] sm:$0xff]
        %v3497 = vld [vmem:[#allocation8 + $0xc8] sm:$0xff]
        %v3498 = vld [vmem:[#allocation8 + $0xd0] sm:$0xff]
        %v3499 = vld [vmem:[#allocation8 + $0xd8] sm:$0xff]
        %v3500 = vld [vmem:[#allocation8 + $0xe0] sm:$0xff]
        %v3501 = vld [vmem:[#allocation8 + $0xe8] sm:$0xff]
        %v3502 = vld [vmem:[#allocation8 + $0xf0] sm:$0xff]
        %v3503 = vld [vmem:[#allocation8 + $0xf8] sm:$0xff]
        %v3504 = vld [vmem:[#allocation8 + $0x100] sm:$0xff]
        %v3505 = vld [vmem:[#allocation8 + $0x108] sm:$0xff]
        %v3506 = vld [vmem:[#allocation8 + $0x110] sm:$0xff]
        %v3507 = vld [vmem:[#allocation8 + $0x118] sm:$0xff]
        %v3508 = vld [vmem:[#allocation8 + $0x120] sm:$0xff]
        %v3509 = vld [vmem:[#allocation8 + $0x128] sm:$0xff]
        %v3510 = vld [vmem:[#allocation8 + $0x130] sm:$0xff]
        %v3511 = vld [vmem:[#allocation8 + $0x138] sm:$0xff]
        %v3512 = vld [vmem:[#allocation8 + $0x140] sm:$0xff]
        %v3513 = vld [vmem:[#allocation8 + $0x148] sm:$0xff]
        %v3514 = vld [vmem:[#allocation8 + $0x150] sm:$0xff]
        %v3515 = vld [vmem:[#allocation8 + $0x158] sm:$0xff]
        %v3516 = vld [vmem:[#allocation8 + $0x160] sm:$0xff]
        %v3517 = vld [vmem:[#allocation8 + $0x168] sm:$0xff]
        %v3518 = vld [vmem:[#allocation8 + $0x170] sm:$0xff]
        %v3519 = vld [vmem:[#allocation8 + $0x178] sm:$0xff]
        %v3520 = vpack.c.bf16 %v3462, %v3465
        %v3521 = vpack.c.bf16 %v3453, %v3450
        %v3522 = vpack.c.bf16 %v3471, %v3467
        %v3523 = vld [vmem:[%s8] sm:$0x3]
        %v3525 = vlaneseq
        %v3526 = vshrl.u32 %v3525, 7
        %v3527 = vsub.s32 0, %v3526
        %v3528 = vrot.slane %v3523, %v3527
        %v3529 = vlaneseq
        %v3530 = vshrl.u32 %v3529, 7
        %v3531 = vsub.s32 1, %v3530
        %v3532 = vrot.slane %v3523, %v3531
        %v3583 = vunpack.c.l.b16 %v3472
        %v3584 = vunpack.c.h.b16 %v3472
        %v3585 = vunpack.c.l.b16 %v3473
        %v3586 = vunpack.c.h.b16 %v3473
        %v3587 = vunpack.c.l.b16 %v3474
        %v3588 = vunpack.c.h.b16 %v3474
        %v3589 = vunpack.c.l.b16 %v3475
        %v3590 = vunpack.c.h.b16 %v3475
        %v3591 = vunpack.c.l.b16 %v3476
        %v3592 = vunpack.c.h.b16 %v3476
        %v3593 = vunpack.c.l.b16 %v3477
        %v3594 = vunpack.c.h.b16 %v3477
        %v3595 = vunpack.c.l.b16 %v3478
        %v3596 = vunpack.c.h.b16 %v3478
        %v3597 = vunpack.c.l.b16 %v3479
        %v3598 = vunpack.c.h.b16 %v3479
        %v3599 = vunpack.c.l.b16 %v3480
        %v3600 = vunpack.c.h.b16 %v3480
        %v3601 = vunpack.c.l.b16 %v3481
        %v3602 = vunpack.c.h.b16 %v3481
        %v3603 = vunpack.c.l.b16 %v3482
        %v3604 = vunpack.c.h.b16 %v3482
        %v3605 = vunpack.c.l.b16 %v3483
        %v3606 = vunpack.c.h.b16 %v3483
        %v3607 = vunpack.c.l.b16 %v3484
        %v3608 = vunpack.c.h.b16 %v3484
        %v3609 = vunpack.c.l.b16 %v3485
        %v3610 = vunpack.c.h.b16 %v3485
        %v3611 = vunpack.c.l.b16 %v3486
        %v3612 = vunpack.c.h.b16 %v3486
        %v3613 = vunpack.c.l.b16 %v3487
        %v3614 = vunpack.c.h.b16 %v3487
        %v3615 = vunpack.c.l.b16 %v3488
        %v3616 = vunpack.c.h.b16 %v3488
        %v3617 = vunpack.c.l.b16 %v3489
        %v3618 = vunpack.c.h.b16 %v3489
        %v3619 = vunpack.c.l.b16 %v3490
        %v3620 = vunpack.c.h.b16 %v3490
        %v3621 = vunpack.c.l.b16 %v3491
        %v3622 = vunpack.c.h.b16 %v3491
        %v3623 = vunpack.c.l.b16 %v3492
        %v3624 = vunpack.c.h.b16 %v3492
        %v3625 = vunpack.c.l.b16 %v3493
        %v3626 = vunpack.c.h.b16 %v3493
        %v3627 = vunpack.c.l.b16 %v3494
        %v3628 = vunpack.c.h.b16 %v3494
        %v3629 = vunpack.c.l.b16 %v3495
        %v3630 = vunpack.c.h.b16 %v3495
        %v3631 = vunpack.c.l.b16 %v3496
        %v3632 = vunpack.c.h.b16 %v3496
        %v3633 = vunpack.c.l.b16 %v3497
        %v3634 = vunpack.c.h.b16 %v3497
        %v3635 = vunpack.c.l.b16 %v3498
        %v3636 = vunpack.c.h.b16 %v3498
        %v3637 = vunpack.c.l.b16 %v3499
        %v3638 = vunpack.c.h.b16 %v3499
        %v3639 = vunpack.c.l.b16 %v3500
        %v3640 = vunpack.c.h.b16 %v3500
        %v3641 = vunpack.c.l.b16 %v3501
        %v3642 = vunpack.c.h.b16 %v3501
        %v3643 = vunpack.c.l.b16 %v3502
        %v3644 = vunpack.c.h.b16 %v3502
        %v3645 = vunpack.c.l.b16 %v3503
        %v3646 = vunpack.c.h.b16 %v3503
        %v3647 = vunpack.c.l.b16 %v3504
        %v3648 = vunpack.c.h.b16 %v3504
        %v3649 = vunpack.c.l.b16 %v3505
        %v3650 = vunpack.c.h.b16 %v3505
        %v3651 = vunpack.c.l.b16 %v3506
        %v3652 = vunpack.c.h.b16 %v3506
        %v3653 = vunpack.c.l.b16 %v3507
        %v3654 = vunpack.c.h.b16 %v3507
        %v3655 = vunpack.c.l.b16 %v3508
        %v3656 = vunpack.c.h.b16 %v3508
        %v3657 = vunpack.c.l.b16 %v3509
        %v3658 = vunpack.c.h.b16 %v3509
        %v3659 = vunpack.c.l.b16 %v3510
        %v3660 = vunpack.c.h.b16 %v3510
        %v3661 = vunpack.c.l.b16 %v3511
        %v3662 = vunpack.c.h.b16 %v3511
        %v3663 = vunpack.c.l.b16 %v3512
        %v3664 = vunpack.c.h.b16 %v3512
        %v3665 = vunpack.c.l.b16 %v3513
        %v3666 = vunpack.c.h.b16 %v3513
        %v3667 = vunpack.c.l.b16 %v3514
        %v3668 = vunpack.c.h.b16 %v3514
        %v3669 = vunpack.c.l.b16 %v3515
        %v3670 = vunpack.c.h.b16 %v3515
        %v3671 = vunpack.c.l.b16 %v3516
        %v3672 = vunpack.c.h.b16 %v3516
        %v3673 = vunpack.c.l.b16 %v3517
        %v3674 = vunpack.c.h.b16 %v3517
        %v3675 = vunpack.c.l.b16 %v3518
        %v3676 = vunpack.c.h.b16 %v3518
        %v3677 = vunpack.c.l.b16 %v3519
        %v3678 = vunpack.c.h.b16 %v3519
        %v3679 = vpack.c.b16 %v3585, %v3583
        %v3680 = vpack.c.b16 %v3586, %v3584
        %v3681 = vpack.c.b16 %v3589, %v3587
        %v3682 = vpack.c.b16 %v3590, %v3588
        %v3683 = vpack.c.b16 %v3593, %v3591
        %v3684 = vpack.c.b16 %v3594, %v3592
        %v3685 = vpack.c.b16 %v3597, %v3595
        %v3686 = vpack.c.b16 %v3598, %v3596
        %v3687 = vpack.c.b16 %v3601, %v3599
        %v3688 = vpack.c.b16 %v3602, %v3600
        %v3689 = vpack.c.b16 %v3605, %v3603
        %v3690 = vpack.c.b16 %v3606, %v3604
        %v3691 = vpack.c.b16 %v3609, %v3607
        %v3692 = vpack.c.b16 %v3610, %v3608
        %v3693 = vpack.c.b16 %v3613, %v3611
        %v3694 = vpack.c.b16 %v3614, %v3612
        %v3695 = vpack.c.b16 %v3617, %v3615
        %v3696 = vpack.c.b16 %v3618, %v3616
        %v3697 = vpack.c.b16 %v3621, %v3619
        %v3698 = vpack.c.b16 %v3622, %v3620
        %v3699 = vpack.c.b16 %v3625, %v3623
        %v3700 = vpack.c.b16 %v3626, %v3624
        %v3701 = vpack.c.b16 %v3629, %v3627
        %v3702 = vpack.c.b16 %v3630, %v3628
        %v3703 = vpack.c.b16 %v3633, %v3631
        %v3704 = vpack.c.b16 %v3634, %v3632
        %v3705 = vpack.c.b16 %v3637, %v3635
        %v3706 = vpack.c.b16 %v3638, %v3636
        %v3707 = vpack.c.b16 %v3641, %v3639
        %v3708 = vpack.c.b16 %v3642, %v3640
        %v3709 = vpack.c.b16 %v3645, %v3643
        %v3710 = vpack.c.b16 %v3646, %v3644
        %v3711 = vpack.c.b16 %v3649, %v3647
        %v3712 = vpack.c.b16 %v3650, %v3648
        %v3713 = vpack.c.b16 %v3653, %v3651
        %v3714 = vpack.c.b16 %v3654, %v3652
        %v3715 = vpack.c.b16 %v3657, %v3655
        %v3716 = vpack.c.b16 %v3658, %v3656
        %v3717 = vpack.c.b16 %v3661, %v3659
        %v3718 = vpack.c.b16 %v3662, %v3660
        %v3719 = vpack.c.b16 %v3665, %v3663
        %v3720 = vpack.c.b16 %v3666, %v3664
        %v3721 = vpack.c.b16 %v3669, %v3667
        %v3722 = vpack.c.b16 %v3670, %v3668
        %v3723 = vpack.c.b16 %v3673, %v3671
        %v3724 = vpack.c.b16 %v3674, %v3672
        %v3725 = vpack.c.b16 %v3677, %v3675
        %v3726 = vpack.c.b16 %v3678, %v3676
        %3775 = vmatprep.subr.bf16.mxu0 %v3694
        %3776 = vmatpush1.bf16.msra.mxu0 %v3693
        %3777 = vmatprep.subr.bf16.mxu0 %v3692
        %3778 = vmatpush1.bf16.msra.mxu0 %v3691
        %3779 = vmatprep.subr.bf16.mxu0 %v3690
        %3780 = vmatpush1.bf16.msra.mxu0 %v3689
        %3781 = vmatprep.subr.bf16.mxu0 %v3688
        %3782 = vmatpush1.bf16.msra.mxu0 %v3687
        %3783 = vmatprep.subr.bf16.mxu0 %v3686
        %3784 = vmatpush1.bf16.msra.mxu0 %v3685
        %3785 = vmatprep.subr.bf16.mxu0 %v3684
        %3786 = vmatpush1.bf16.msra.mxu0 %v3683
        %3787 = vmatprep.subr.bf16.mxu0 %v3682
        %3788 = vmatpush1.bf16.msra.mxu0 %v3681
        %3789 = vmatprep.subr.bf16.mxu0 %v3680
        %3790 = vmatpush1.bf16.msra.mxu0 %v3679
        %3791 = vmatprep.subr.bf16.mxu0 %v3710
        %3792 = vmatpush2.bf16.msra.mxu0 %v3709
        %3793 = vmatprep.subr.bf16.mxu0 %v3708
        %3794 = vmatpush2.bf16.msra.mxu0 %v3707
        %3795 = vmatprep.subr.bf16.mxu0 %v3706
        %3796 = vmatpush2.bf16.msra.mxu0 %v3705
        %3797 = vmatprep.subr.bf16.mxu0 %v3704
        %3798 = vmatpush2.bf16.msra.mxu0 %v3703
        %3799 = vmatprep.subr.bf16.mxu0 %v3702
        %3800 = vmatpush2.bf16.msra.mxu0 %v3701
        %3801 = vmatprep.subr.bf16.mxu0 %v3700
        %3802 = vmatpush2.bf16.msra.mxu0 %v3699
        %3803 = vmatprep.subr.bf16.mxu0 %v3698
        %3804 = vmatpush2.bf16.msra.mxu0 %v3697
        %3805 = vmatprep.subr.bf16.mxu0 %v3696
        %3806 = vmatpush2.bf16.msra.mxu0 %v3695
        %3807 = vmatprep.mubr.bf16.mxu0 %v3521
        %3808 = vmatmul.mubr.bf16.gmra.mxu0 %v3520
        %v3809 = vpop.f32.mrf.mxu0
        %v3810 = vadd.f32 %v3528, %v3809
        %v3811 = vpop.f32.mrf.mxu0
        %v3812 = vadd.f32 %v3532, %v3811
        %v3813 = vpop.f32.mrf.mxu0
        %v3814 = vadd.f32 %v3528, %v3813
        %v3815 = vpop.f32.mrf.mxu0
        %v3816 = vadd.f32 %v3532, %v3815
        %3817 = vdwg.mxu0
        %3818 = vmatprep.subr.bf16.mxu0 %v3726
        %3819 = vmatpush1.bf16.msra.mxu0 %v3725
        %3820 = vmatprep.subr.bf16.mxu0 %v3724
        %3821 = vmatpush1.bf16.msra.mxu0 %v3723
        %3822 = vmatprep.subr.bf16.mxu0 %v3722
        %3823 = vmatpush1.bf16.msra.mxu0 %v3721
        %3824 = vmatprep.subr.bf16.mxu0 %v3720
        %3825 = vmatpush1.bf16.msra.mxu0 %v3719
        %3826 = vmatprep.subr.bf16.mxu0 %v3718
        %3827 = vmatpush1.bf16.msra.mxu0 %v3717
        %3828 = vmatprep.subr.bf16.mxu0 %v3716
        %3829 = vmatpush1.bf16.msra.mxu0 %v3715
        %3830 = vmatprep.subr.bf16.mxu0 %v3714
        %3831 = vmatpush1.bf16.msra.mxu0 %v3713
        %3832 = vmatprep.subr.bf16.mxu0 %v3712
        %3833 = vmatpush1.bf16.msra.mxu0 %v3711
        %3834 = vmatprep.subr.bf16.mxu0 0
        %3835 = vmatpush2.bf16.msra.mxu0 0
        %3836 = vmatprep.subr.bf16.mxu0 0
        %3837 = vmatpush2.bf16.msra.mxu0 0
        %3838 = vmatprep.subr.bf16.mxu0 0
        %3839 = vmatpush2.bf16.msra.mxu0 0
        %3840 = vmatprep.subr.bf16.mxu0 0
        %3841 = vmatpush2.bf16.msra.mxu0 0
        %3842 = vmatprep.subr.bf16.mxu0 0
        %3843 = vmatpush2.bf16.msra.mxu0 0
        %3844 = vmatprep.subr.bf16.mxu0 0
        %3845 = vmatpush2.bf16.msra.mxu0 0
        %3846 = vmatprep.subr.bf16.mxu0 0
        %3847 = vmatpush2.bf16.msra.mxu0 0
        %3848 = vmatprep.subr.bf16.mxu0 0
        %3849 = vmatpush2.bf16.msra.mxu0 0
        %3850 = vmatprep.mubr.bf16.mxu0 0
        %3851 = vmatmul.mubr.bf16.gmra.mxu0 %v3522
        %v3852 = vpop.f32.mrf.mxu0
        %v3853 = vadd.f32 %v3810, %v3852
        %v3854 = vpop.f32.mrf.mxu0
        %v3855 = vadd.f32 %v3812, %v3854
        %v3856 = vpop.f32.mrf.mxu0
        %v3857 = vadd.f32 %v3814, %v3856
        %v3858 = vpop.f32.mrf.mxu0
        %v3859 = vadd.f32 %v3816, %v3858
        %3860 = vdwg.mxu0
        %v3861 = vadd.f32 %v2907, %v2243
        %v3862 = vadd.f32 %v2908, %v2244
        %v3863 = vadd.f32 %v2909, %v2245
        %v3864 = vadd.f32 %v2910, %v2246
        %v3865 = vsub.f32 %v3861, %v3853
        %v3866 = vsub.f32 %v3862, %v3855
        %v3867 = vsub.f32 %v3863, %v3857
        %v3868 = vsub.f32 %v3864, %v3859
        %v3869 = vmax.f32 %v3865, 0.0
        %v3870 = vmax.f32 %v3866, 0.0
        %v3871 = vmax.f32 %v3867, 0.0
        %v3872 = vmax.f32 %v3868, 0.0
        %v3874 = vrot.slane %v2889, 1
        %v3877 = vrot.slane %v2889, 7
        %v3878 = vrot.slane %v2892, 7
        %v3879 = vsel %vm462, %v3877, %v3878
        %v3882 = vsel %vm462, %v3874, %v3877
        %v3883 = vrot.slane %v2892, 1
        %v3884 = vsel %vm402, %v3874, %v3883
        %v3888 = vsel %vm402, %v3883, %v3878
        %s3889 = scalar_lea.vmem [#allocation5], 576
        %v3890 = vld [vmem:[%s3889] sm:$0xff]
        %v3891 = vld [vmem:[%s3889 + $0xc] sm:$0xff]
        %v3892 = vld [vmem:[%s3889 + $0x18] sm:$0xff]
        %v3893 = vld [vmem:[%s3889 + $0x24] sm:$0xff]
        %v3894 = vld [vmem:[%s3889 + $0x30] sm:$0xff]
        %v3895 = vld [vmem:[%s3889 + $0x3c] sm:$0xff]
        %v3896 = vld [vmem:[%s3889 + $0x48] sm:$0xff]
        %v3897 = vld [vmem:[%s3889 + $0x54] sm:$0xff]
        %v3898 = vld [vmem:[%s3889 + $0x60] sm:$0xff]
        %v3899 = vld [vmem:[%s3889 + $0x6c] sm:$0xff]
        %v3900 = vld [vmem:[%s3889 + $0x78] sm:$0xff]
        %v3901 = vld [vmem:[%s3889 + $0x84] sm:$0xff]
        %v3902 = vld [vmem:[%s3889 + $0x90] sm:$0xff]
        %v3903 = vld [vmem:[%s3889 + $0x9c] sm:$0xff]
        %v3904 = vld [vmem:[%s3889 + $0xa8] sm:$0xff]
        %v3905 = vld [vmem:[%s3889 + $0xb4] sm:$0xff]
        %v3906 = vld [vmem:[%s3889 + $0xc0] sm:$0xff]
        %v3907 = vld [vmem:[%s3889 + $0xcc] sm:$0xff]
        %v3908 = vld [vmem:[%s3889 + $0xd8] sm:$0xff]
        %v3909 = vld [vmem:[%s3889 + $0xe4] sm:$0xff]
        %v3910 = vld [vmem:[%s3889 + $0xf0] sm:$0xff]
        %v3911 = vld [vmem:[%s3889 + $0xfc] sm:$0xff]
        %v3912 = vld [vmem:[%s3889 + $0x108] sm:$0xff]
        %v3913 = vld [vmem:[%s3889 + $0x114] sm:$0xff]
        %v3914 = vld [vmem:[%s3889 + $0x120] sm:$0xff]
        %v3915 = vld [vmem:[%s3889 + $0x12c] sm:$0xff]
        %v3916 = vld [vmem:[%s3889 + $0x138] sm:$0xff]
        %v3917 = vld [vmem:[%s3889 + $0x144] sm:$0xff]
        %v3918 = vld [vmem:[%s3889 + $0x150] sm:$0xff]
        %v3919 = vld [vmem:[%s3889 + $0x15c] sm:$0xff]
        %v3920 = vld [vmem:[%s3889 + $0x168] sm:$0xff]
        %v3921 = vld [vmem:[%s3889 + $0x174] sm:$0xff]
        %v3922 = vld [vmem:[%s3889 + $0x180] sm:$0xff]
        %v3923 = vld [vmem:[%s3889 + $0x18c] sm:$0xff]
        %v3924 = vld [vmem:[%s3889 + $0x198] sm:$0xff]
        %v3925 = vld [vmem:[%s3889 + $0x1a4] sm:$0xff]
        %v3926 = vld [vmem:[%s3889 + $0x1b0] sm:$0xff]
        %v3927 = vld [vmem:[%s3889 + $0x1bc] sm:$0xff]
        %v3928 = vld [vmem:[%s3889 + $0x1c8] sm:$0xff]
        %v3929 = vld [vmem:[%s3889 + $0x1d4] sm:$0xff]
        %v3930 = vld [vmem:[%s3889 + $0x1e0] sm:$0xff]
        %v3931 = vld [vmem:[%s3889 + $0x1ec] sm:$0xff]
        %v3932 = vld [vmem:[%s3889 + $0x1f8] sm:$0xff]
        %v3933 = vld [vmem:[%s3889 + $0x204] sm:$0xff]
        %v3934 = vld [vmem:[%s3889 + $0x210] sm:$0xff]
        %v3935 = vld [vmem:[%s3889 + $0x21c] sm:$0xff]
        %v3936 = vld [vmem:[%s3889 + $0x228] sm:$0xff]
        %v3937 = vld [vmem:[%s3889 + $0x234] sm:$0xff]
        %v3938 = vpack.c.bf16 %v3879, %v3882
        %v3939 = vpack.c.bf16 %v2892, %v2889
        %v3940 = vpack.c.bf16 %v3888, %v3884
        %v3989 = vunpack.c.l.b16 %v3890
        %v3990 = vunpack.c.h.b16 %v3890
        %v3991 = vunpack.c.l.b16 %v3891
        %v3992 = vunpack.c.h.b16 %v3891
        %v3993 = vunpack.c.l.b16 %v3892
        %v3994 = vunpack.c.h.b16 %v3892
        %v3995 = vunpack.c.l.b16 %v3893
        %v3996 = vunpack.c.h.b16 %v3893
        %v3997 = vunpack.c.l.b16 %v3894
        %v3998 = vunpack.c.h.b16 %v3894
        %v3999 = vunpack.c.l.b16 %v3895
        %v4000 = vunpack.c.h.b16 %v3895
        %v4001 = vunpack.c.l.b16 %v3896
        %v4002 = vunpack.c.h.b16 %v3896
        %v4003 = vunpack.c.l.b16 %v3897
        %v4004 = vunpack.c.h.b16 %v3897
        %v4005 = vunpack.c.l.b16 %v3898
        %v4006 = vunpack.c.h.b16 %v3898
        %v4007 = vunpack.c.l.b16 %v3899
        %v4008 = vunpack.c.h.b16 %v3899
        %v4009 = vunpack.c.l.b16 %v3900
        %v4010 = vunpack.c.h.b16 %v3900
        %v4011 = vunpack.c.l.b16 %v3901
        %v4012 = vunpack.c.h.b16 %v3901
        %v4013 = vunpack.c.l.b16 %v3902
        %v4014 = vunpack.c.h.b16 %v3902
        %v4015 = vunpack.c.l.b16 %v3903
        %v4016 = vunpack.c.h.b16 %v3903
        %v4017 = vunpack.c.l.b16 %v3904
        %v4018 = vunpack.c.h.b16 %v3904
        %v4019 = vunpack.c.l.b16 %v3905
        %v4020 = vunpack.c.h.b16 %v3905
        %v4021 = vunpack.c.l.b16 %v3906
        %v4022 = vunpack.c.h.b16 %v3906
        %v4023 = vunpack.c.l.b16 %v3907
        %v4024 = vunpack.c.h.b16 %v3907
        %v4025 = vunpack.c.l.b16 %v3908
        %v4026 = vunpack.c.h.b16 %v3908
        %v4027 = vunpack.c.l.b16 %v3909
        %v4028 = vunpack.c.h.b16 %v3909
        %v4029 = vunpack.c.l.b16 %v3910
        %v4030 = vunpack.c.h.b16 %v3910
        %v4031 = vunpack.c.l.b16 %v3911
        %v4032 = vunpack.c.h.b16 %v3911
        %v4033 = vunpack.c.l.b16 %v3912
        %v4034 = vunpack.c.h.b16 %v3912
        %v4035 = vunpack.c.l.b16 %v3913
        %v4036 = vunpack.c.h.b16 %v3913
        %v4037 = vunpack.c.l.b16 %v3914
        %v4038 = vunpack.c.h.b16 %v3914
        %v4039 = vunpack.c.l.b16 %v3915
        %v4040 = vunpack.c.h.b16 %v3915
        %v4041 = vunpack.c.l.b16 %v3916
        %v4042 = vunpack.c.h.b16 %v3916
        %v4043 = vunpack.c.l.b16 %v3917
        %v4044 = vunpack.c.h.b16 %v3917
        %v4045 = vunpack.c.l.b16 %v3918
        %v4046 = vunpack.c.h.b16 %v3918
        %v4047 = vunpack.c.l.b16 %v3919
        %v4048 = vunpack.c.h.b16 %v3919
        %v4049 = vunpack.c.l.b16 %v3920
        %v4050 = vunpack.c.h.b16 %v3920
        %v4051 = vunpack.c.l.b16 %v3921
        %v4052 = vunpack.c.h.b16 %v3921
        %v4053 = vunpack.c.l.b16 %v3922
        %v4054 = vunpack.c.h.b16 %v3922
        %v4055 = vunpack.c.l.b16 %v3923
        %v4056 = vunpack.c.h.b16 %v3923
        %v4057 = vunpack.c.l.b16 %v3924
        %v4058 = vunpack.c.h.b16 %v3924
        %v4059 = vunpack.c.l.b16 %v3925
        %v4060 = vunpack.c.h.b16 %v3925
        %v4061 = vunpack.c.l.b16 %v3926
        %v4062 = vunpack.c.h.b16 %v3926
        %v4063 = vunpack.c.l.b16 %v3927
        %v4064 = vunpack.c.h.b16 %v3927
        %v4065 = vunpack.c.l.b16 %v3928
        %v4066 = vunpack.c.h.b16 %v3928
        %v4067 = vunpack.c.l.b16 %v3929
        %v4068 = vunpack.c.h.b16 %v3929
        %v4069 = vunpack.c.l.b16 %v3930
        %v4070 = vunpack.c.h.b16 %v3930
        %v4071 = vunpack.c.l.b16 %v3931
        %v4072 = vunpack.c.h.b16 %v3931
        %v4073 = vunpack.c.l.b16 %v3932
        %v4074 = vunpack.c.h.b16 %v3932
        %v4075 = vunpack.c.l.b16 %v3933
        %v4076 = vunpack.c.h.b16 %v3933
        %v4077 = vunpack.c.l.b16 %v3934
        %v4078 = vunpack.c.h.b16 %v3934
        %v4079 = vunpack.c.l.b16 %v3935
        %v4080 = vunpack.c.h.b16 %v3935
        %v4081 = vunpack.c.l.b16 %v3936
        %v4082 = vunpack.c.h.b16 %v3936
        %v4083 = vunpack.c.l.b16 %v3937
        %v4084 = vunpack.c.h.b16 %v3937
        %v4085 = vpack.c.b16 %v3991, %v3989
        %v4086 = vpack.c.b16 %v3992, %v3990
        %v4087 = vpack.c.b16 %v3995, %v3993
        %v4088 = vpack.c.b16 %v3996, %v3994
        %v4089 = vpack.c.b16 %v3999, %v3997
        %v4090 = vpack.c.b16 %v4000, %v3998
        %v4091 = vpack.c.b16 %v4003, %v4001
        %v4092 = vpack.c.b16 %v4004, %v4002
        %v4093 = vpack.c.b16 %v4007, %v4005
        %v4094 = vpack.c.b16 %v4008, %v4006
        %v4095 = vpack.c.b16 %v4011, %v4009
        %v4096 = vpack.c.b16 %v4012, %v4010
        %v4097 = vpack.c.b16 %v4015, %v4013
        %v4098 = vpack.c.b16 %v4016, %v4014
        %v4099 = vpack.c.b16 %v4019, %v4017
        %v4100 = vpack.c.b16 %v4020, %v4018
        %v4101 = vpack.c.b16 %v4023, %v4021
        %v4102 = vpack.c.b16 %v4024, %v4022
        %v4103 = vpack.c.b16 %v4027, %v4025
        %v4104 = vpack.c.b16 %v4028, %v4026
        %v4105 = vpack.c.b16 %v4031, %v4029
        %v4106 = vpack.c.b16 %v4032, %v4030
        %v4107 = vpack.c.b16 %v4035, %v4033
        %v4108 = vpack.c.b16 %v4036, %v4034
        %v4109 = vpack.c.b16 %v4039, %v4037
        %v4110 = vpack.c.b16 %v4040, %v4038
        %v4111 = vpack.c.b16 %v4043, %v4041
        %v4112 = vpack.c.b16 %v4044, %v4042
        %v4113 = vpack.c.b16 %v4047, %v4045
        %v4114 = vpack.c.b16 %v4048, %v4046
        %v4115 = vpack.c.b16 %v4051, %v4049
        %v4116 = vpack.c.b16 %v4052, %v4050
        %v4117 = vpack.c.b16 %v4055, %v4053
        %v4118 = vpack.c.b16 %v4056, %v4054
        %v4119 = vpack.c.b16 %v4059, %v4057
        %v4120 = vpack.c.b16 %v4060, %v4058
        %v4121 = vpack.c.b16 %v4063, %v4061
        %v4122 = vpack.c.b16 %v4064, %v4062
        %v4123 = vpack.c.b16 %v4067, %v4065
        %v4124 = vpack.c.b16 %v4068, %v4066
        %v4125 = vpack.c.b16 %v4071, %v4069
        %v4126 = vpack.c.b16 %v4072, %v4070
        %v4127 = vpack.c.b16 %v4075, %v4073
        %v4128 = vpack.c.b16 %v4076, %v4074
        %v4129 = vpack.c.b16 %v4079, %v4077
        %v4130 = vpack.c.b16 %v4080, %v4078
        %v4131 = vpack.c.b16 %v4083, %v4081
        %v4132 = vpack.c.b16 %v4084, %v4082
        %4181 = vmatprep.subr.bf16.mxu0 %v4100
        %4182 = vmatpush1.bf16.msra.mxu0 %v4099
        %4183 = vmatprep.subr.bf16.mxu0 %v4098
        %4184 = vmatpush1.bf16.msra.mxu0 %v4097
        %4185 = vmatprep.subr.bf16.mxu0 %v4096
        %4186 = vmatpush1.bf16.msra.mxu0 %v4095
        %4187 = vmatprep.subr.bf16.mxu0 %v4094
        %4188 = vmatpush1.bf16.msra.mxu0 %v4093
        %4189 = vmatprep.subr.bf16.mxu0 %v4092
        %4190 = vmatpush1.bf16.msra.mxu0 %v4091
        %4191 = vmatprep.subr.bf16.mxu0 %v4090
        %4192 = vmatpush1.bf16.msra.mxu0 %v4089
        %4193 = vmatprep.subr.bf16.mxu0 %v4088
        %4194 = vmatpush1.bf16.msra.mxu0 %v4087
        %4195 = vmatprep.subr.bf16.mxu0 %v4086
        %4196 = vmatpush1.bf16.msra.mxu0 %v4085
        %4197 = vmatprep.subr.bf16.mxu0 %v4116
        %4198 = vmatpush2.bf16.msra.mxu0 %v4115
        %4199 = vmatprep.subr.bf16.mxu0 %v4114
        %4200 = vmatpush2.bf16.msra.mxu0 %v4113
        %4201 = vmatprep.subr.bf16.mxu0 %v4112
        %4202 = vmatpush2.bf16.msra.mxu0 %v4111
        %4203 = vmatprep.subr.bf16.mxu0 %v4110
        %4204 = vmatpush2.bf16.msra.mxu0 %v4109
        %4205 = vmatprep.subr.bf16.mxu0 %v4108
        %4206 = vmatpush2.bf16.msra.mxu0 %v4107
        %4207 = vmatprep.subr.bf16.mxu0 %v4106
        %4208 = vmatpush2.bf16.msra.mxu0 %v4105
        %4209 = vmatprep.subr.bf16.mxu0 %v4104
        %4210 = vmatpush2.bf16.msra.mxu0 %v4103
        %4211 = vmatprep.subr.bf16.mxu0 %v4102
        %4212 = vmatpush2.bf16.msra.mxu0 %v4101
        %4213 = vmatprep.mubr.bf16.mxu0 %v3939
        %4214 = vmatmul.mubr.bf16.gmra.mxu0 %v3938
        %v4215 = vpop.f32.mrf.mxu0
        %v4216 = vadd.f32 0.0, %v4215
        %v4217 = vpop.f32.mrf.mxu0
        %v4218 = vadd.f32 0.0, %v4217
        %v4219 = vpop.f32.mrf.mxu0
        %v4220 = vadd.f32 0.0, %v4219
        %v4221 = vpop.f32.mrf.mxu0
        %v4222 = vadd.f32 0.0, %v4221
        %4223 = vdwg.mxu0
        %4224 = vmatprep.subr.bf16.mxu0 %v4132
        %4225 = vmatpush1.bf16.msra.mxu0 %v4131
        %4226 = vmatprep.subr.bf16.mxu0 %v4130
        %4227 = vmatpush1.bf16.msra.mxu0 %v4129
        %4228 = vmatprep.subr.bf16.mxu0 %v4128
        %4229 = vmatpush1.bf16.msra.mxu0 %v4127
        %4230 = vmatprep.subr.bf16.mxu0 %v4126
        %4231 = vmatpush1.bf16.msra.mxu0 %v4125
        %4232 = vmatprep.subr.bf16.mxu0 %v4124
        %4233 = vmatpush1.bf16.msra.mxu0 %v4123
        %4234 = vmatprep.subr.bf16.mxu0 %v4122
        %4235 = vmatpush1.bf16.msra.mxu0 %v4121
        %4236 = vmatprep.subr.bf16.mxu0 %v4120
        %4237 = vmatpush1.bf16.msra.mxu0 %v4119
        %4238 = vmatprep.subr.bf16.mxu0 %v4118
        %4239 = vmatpush1.bf16.msra.mxu0 %v4117
        %4240 = vmatprep.subr.bf16.mxu0 0
        %4241 = vmatpush2.bf16.msra.mxu0 0
        %4242 = vmatprep.subr.bf16.mxu0 0
        %4243 = vmatpush2.bf16.msra.mxu0 0
        %4244 = vmatprep.subr.bf16.mxu0 0
        %4245 = vmatpush2.bf16.msra.mxu0 0
        %4246 = vmatprep.subr.bf16.mxu0 0
        %4247 = vmatpush2.bf16.msra.mxu0 0
        %4248 = vmatprep.subr.bf16.mxu0 0
        %4249 = vmatpush2.bf16.msra.mxu0 0
        %4250 = vmatprep.subr.bf16.mxu0 0
        %4251 = vmatpush2.bf16.msra.mxu0 0
        %4252 = vmatprep.subr.bf16.mxu0 0
        %4253 = vmatpush2.bf16.msra.mxu0 0
        %4254 = vmatprep.subr.bf16.mxu0 0
        %4255 = vmatpush2.bf16.msra.mxu0 0
        %4256 = vmatprep.mubr.bf16.mxu0 0
        %4257 = vmatmul.mubr.bf16.gmra.mxu0 %v3940
        %v4258 = vpop.f32.mrf.mxu0
        %v4259 = vadd.f32 %v4216, %v4258
        %v4260 = vpop.f32.mrf.mxu0
        %v4261 = vadd.f32 %v4218, %v4260
        %v4262 = vpop.f32.mrf.mxu0
        %v4263 = vadd.f32 %v4220, %v4262
        %v4264 = vpop.f32.mrf.mxu0
        %v4265 = vadd.f32 %v4222, %v4264
        %4266 = vdwg.mxu0
        %s4267 = scalar_lea.vmem %s5, 2
        %v4268 = vld [vmem:[%s4267] sm:$0x3]
        %v4270 = vlaneseq
        %v4271 = vshrl.u32 %v4270, 7
        %v4272 = vsub.s32 0, %v4271
        %v4273 = vrot.slane %v4268, %v4272
        %v4274 = vlaneseq
        %v4275 = vshrl.u32 %v4274, 7
        %v4276 = vsub.s32 1, %v4275
        %v4277 = vrot.slane %v4268, %v4276
        %v4280 = vadd.f32 %v4259, %v4273
        %v4281 = vadd.f32 %v4261, %v4277
        %v4282 = vadd.f32 %v4263, %v4273
        %v4283 = vadd.f32 %v4265, %v4277
        %v4286 = vrot.slane %v3869, 1
        %v4287 = vrot.slane %v3870, 1
        %v4292 = vrot.slane %v3869, 7
        %v4293 = vrot.slane %v3870, 7
        %v4294 = vrot.slane %v3871, 7
        %v4295 = vsel %vm462, %v4292, %v4294
        %v4296 = vrot.slane %v3872, 7
        %v4297 = vsel %vm462, %v4293, %v4296
        %v4302 = vsel %vm462, %v4286, %v4292
        %v4303 = vsel %vm462, %v4287, %v4293
        %v4304 = vrot.slane %v3871, 1
        %v4305 = vsel %vm402, %v4286, %v4304
        %v4306 = vrot.slane %v3872, 1
        %v4307 = vsel %vm402, %v4287, %v4306
        %v4314 = vsel %vm402, %v4304, %v4294
        %v4315 = vsel %vm402, %v4306, %v4296
        %s4316 = scalar_lea.vmem [#allocation7], 384
        %v4317 = vld [vmem:[%s4316] sm:$0xf]
        %v4318 = vld [vmem:[%s4316 + $0x4] sm:$0xf]
        %v4319 = vld [vmem:[%s4316 + $0x8] sm:$0xf]
        %v4320 = vld [vmem:[%s4316 + $0xc] sm:$0xf]
        %v4321 = vld [vmem:[%s4316 + $0x10] sm:$0xf]
        %v4322 = vld [vmem:[%s4316 + $0x14] sm:$0xf]
        %v4323 = vld [vmem:[%s4316 + $0x18] sm:$0xf]
        %v4324 = vld [vmem:[%s4316 + $0x1c] sm:$0xf]
        %v4325 = vld [vmem:[%s4316 + $0x20] sm:$0xf]
        %v4326 = vld [vmem:[%s4316 + $0x24] sm:$0xf]
        %v4327 = vld [vmem:[%s4316 + $0x28] sm:$0xf]
        %v4328 = vld [vmem:[%s4316 + $0x2c] sm:$0xf]
        %v4329 = vld [vmem:[%s4316 + $0x30] sm:$0xf]
        %v4330 = vld [vmem:[%s4316 + $0x34] sm:$0xf]
        %v4331 = vld [vmem:[%s4316 + $0x38] sm:$0xf]
        %v4332 = vld [vmem:[%s4316 + $0x3c] sm:$0xf]
        %v4333 = vld [vmem:[%s4316 + $0x40] sm:$0xf]
        %v4334 = vld [vmem:[%s4316 + $0x44] sm:$0xf]
        %v4335 = vld [vmem:[%s4316 + $0x48] sm:$0xf]
        %v4336 = vld [vmem:[%s4316 + $0x4c] sm:$0xf]
        %v4337 = vld [vmem:[%s4316 + $0x50] sm:$0xf]
        %v4338 = vld [vmem:[%s4316 + $0x54] sm:$0xf]
        %v4339 = vld [vmem:[%s4316 + $0x58] sm:$0xf]
        %v4340 = vld [vmem:[%s4316 + $0x5c] sm:$0xf]
        %v4341 = vld [vmem:[%s4316 + $0x60] sm:$0xf]
        %v4342 = vld [vmem:[%s4316 + $0x64] sm:$0xf]
        %v4343 = vld [vmem:[%s4316 + $0x68] sm:$0xf]
        %v4344 = vld [vmem:[%s4316 + $0x6c] sm:$0xf]
        %v4345 = vld [vmem:[%s4316 + $0x70] sm:$0xf]
        %v4346 = vld [vmem:[%s4316 + $0x74] sm:$0xf]
        %v4347 = vld [vmem:[%s4316 + $0x78] sm:$0xf]
        %v4348 = vld [vmem:[%s4316 + $0x7c] sm:$0xf]
        %v4349 = vld [vmem:[%s4316 + $0x80] sm:$0xf]
        %v4350 = vld [vmem:[%s4316 + $0x84] sm:$0xf]
        %v4351 = vld [vmem:[%s4316 + $0x88] sm:$0xf]
        %v4352 = vld [vmem:[%s4316 + $0x8c] sm:$0xf]
        %v4353 = vld [vmem:[%s4316 + $0x90] sm:$0xf]
        %v4354 = vld [vmem:[%s4316 + $0x94] sm:$0xf]
        %v4355 = vld [vmem:[%s4316 + $0x98] sm:$0xf]
        %v4356 = vld [vmem:[%s4316 + $0x9c] sm:$0xf]
        %v4357 = vld [vmem:[%s4316 + $0xa0] sm:$0xf]
        %v4358 = vld [vmem:[%s4316 + $0xa4] sm:$0xf]
        %v4359 = vld [vmem:[%s4316 + $0xa8] sm:$0xf]
        %v4360 = vld [vmem:[%s4316 + $0xac] sm:$0xf]
        %v4361 = vld [vmem:[%s4316 + $0xb0] sm:$0xf]
        %v4362 = vld [vmem:[%s4316 + $0xb4] sm:$0xf]
        %v4363 = vld [vmem:[%s4316 + $0xb8] sm:$0xf]
        %v4364 = vld [vmem:[%s4316 + $0xbc] sm:$0xf]
        %v4365 = vld [vmem:[%s4316 + $0xc0] sm:$0xf]
        %v4366 = vld [vmem:[%s4316 + $0xc4] sm:$0xf]
        %v4367 = vld [vmem:[%s4316 + $0xc8] sm:$0xf]
        %v4368 = vld [vmem:[%s4316 + $0xcc] sm:$0xf]
        %v4369 = vld [vmem:[%s4316 + $0xd0] sm:$0xf]
        %v4370 = vld [vmem:[%s4316 + $0xd4] sm:$0xf]
        %v4371 = vld [vmem:[%s4316 + $0xd8] sm:$0xf]
        %v4372 = vld [vmem:[%s4316 + $0xdc] sm:$0xf]
        %v4373 = vld [vmem:[%s4316 + $0xe0] sm:$0xf]
        %v4374 = vld [vmem:[%s4316 + $0xe4] sm:$0xf]
        %v4375 = vld [vmem:[%s4316 + $0xe8] sm:$0xf]
        %v4376 = vld [vmem:[%s4316 + $0xec] sm:$0xf]
        %v4377 = vld [vmem:[%s4316 + $0xf0] sm:$0xf]
        %v4378 = vld [vmem:[%s4316 + $0xf4] sm:$0xf]
        %v4379 = vld [vmem:[%s4316 + $0xf8] sm:$0xf]
        %v4380 = vld [vmem:[%s4316 + $0xfc] sm:$0xf]
        %v4381 = vld [vmem:[%s4316 + $0x100] sm:$0xf]
        %v4382 = vld [vmem:[%s4316 + $0x104] sm:$0xf]
        %v4383 = vld [vmem:[%s4316 + $0x108] sm:$0xf]
        %v4384 = vld [vmem:[%s4316 + $0x10c] sm:$0xf]
        %v4385 = vld [vmem:[%s4316 + $0x110] sm:$0xf]
        %v4386 = vld [vmem:[%s4316 + $0x114] sm:$0xf]
        %v4387 = vld [vmem:[%s4316 + $0x118] sm:$0xf]
        %v4388 = vld [vmem:[%s4316 + $0x11c] sm:$0xf]
        %v4389 = vld [vmem:[%s4316 + $0x120] sm:$0xf]
        %v4390 = vld [vmem:[%s4316 + $0x124] sm:$0xf]
        %v4391 = vld [vmem:[%s4316 + $0x128] sm:$0xf]
        %v4392 = vld [vmem:[%s4316 + $0x12c] sm:$0xf]
        %v4393 = vld [vmem:[%s4316 + $0x130] sm:$0xf]
        %v4394 = vld [vmem:[%s4316 + $0x134] sm:$0xf]
        %v4395 = vld [vmem:[%s4316 + $0x138] sm:$0xf]
        %v4396 = vld [vmem:[%s4316 + $0x13c] sm:$0xf]
        %v4397 = vld [vmem:[%s4316 + $0x140] sm:$0xf]
        %v4398 = vld [vmem:[%s4316 + $0x144] sm:$0xf]
        %v4399 = vld [vmem:[%s4316 + $0x148] sm:$0xf]
        %v4400 = vld [vmem:[%s4316 + $0x14c] sm:$0xf]
        %v4401 = vld [vmem:[%s4316 + $0x150] sm:$0xf]
        %v4402 = vld [vmem:[%s4316 + $0x154] sm:$0xf]
        %v4403 = vld [vmem:[%s4316 + $0x158] sm:$0xf]
        %v4404 = vld [vmem:[%s4316 + $0x15c] sm:$0xf]
        %v4405 = vld [vmem:[%s4316 + $0x160] sm:$0xf]
        %v4406 = vld [vmem:[%s4316 + $0x164] sm:$0xf]
        %v4407 = vld [vmem:[%s4316 + $0x168] sm:$0xf]
        %v4408 = vld [vmem:[%s4316 + $0x16c] sm:$0xf]
        %v4409 = vld [vmem:[%s4316 + $0x170] sm:$0xf]
        %v4410 = vld [vmem:[%s4316 + $0x174] sm:$0xf]
        %v4411 = vld [vmem:[%s4316 + $0x178] sm:$0xf]
        %v4412 = vld [vmem:[%s4316 + $0x17c] sm:$0xf]
        %v4413 = vpack.c.bf16 %v4295, %v4302
        %v4414 = vpack.c.bf16 %v4297, %v4303
        %v4415 = vpack.c.bf16 %v3871, %v3869
        %v4416 = vpack.c.bf16 %v3872, %v3870
        %v4417 = vpack.c.bf16 %v4314, %v4305
        %v4418 = vpack.c.bf16 %v4315, %v4307
        %v4515 = vunpack.c.l.b16 %v4317
        %v4516 = vunpack.c.l.b16 %v4318
        %v4517 = vunpack.c.l.b16 %v4319
        %v4518 = vunpack.c.l.b16 %v4320
        %v4519 = vunpack.c.l.b16 %v4321
        %v4520 = vunpack.c.l.b16 %v4322
        %v4521 = vunpack.c.l.b16 %v4323
        %v4522 = vunpack.c.l.b16 %v4324
        %v4523 = vunpack.c.l.b16 %v4325
        %v4524 = vunpack.c.l.b16 %v4326
        %v4525 = vunpack.c.l.b16 %v4327
        %v4526 = vunpack.c.l.b16 %v4328
        %v4527 = vunpack.c.l.b16 %v4329
        %v4528 = vunpack.c.l.b16 %v4330
        %v4529 = vunpack.c.l.b16 %v4331
        %v4530 = vunpack.c.l.b16 %v4332
        %v4531 = vunpack.c.l.b16 %v4333
        %v4532 = vunpack.c.l.b16 %v4334
        %v4533 = vunpack.c.l.b16 %v4335
        %v4534 = vunpack.c.l.b16 %v4336
        %v4535 = vunpack.c.l.b16 %v4337
        %v4536 = vunpack.c.l.b16 %v4338
        %v4537 = vunpack.c.l.b16 %v4339
        %v4538 = vunpack.c.l.b16 %v4340
        %v4539 = vunpack.c.l.b16 %v4341
        %v4540 = vunpack.c.l.b16 %v4342
        %v4541 = vunpack.c.l.b16 %v4343
        %v4542 = vunpack.c.l.b16 %v4344
        %v4543 = vunpack.c.l.b16 %v4345
        %v4544 = vunpack.c.l.b16 %v4346
        %v4545 = vunpack.c.l.b16 %v4347
        %v4546 = vunpack.c.l.b16 %v4348
        %v4547 = vunpack.c.l.b16 %v4349
        %v4548 = vunpack.c.l.b16 %v4350
        %v4549 = vunpack.c.l.b16 %v4351
        %v4550 = vunpack.c.l.b16 %v4352
        %v4551 = vunpack.c.l.b16 %v4353
        %v4552 = vunpack.c.l.b16 %v4354
        %v4553 = vunpack.c.l.b16 %v4355
        %v4554 = vunpack.c.l.b16 %v4356
        %v4555 = vunpack.c.l.b16 %v4357
        %v4556 = vunpack.c.l.b16 %v4358
        %v4557 = vunpack.c.l.b16 %v4359
        %v4558 = vunpack.c.l.b16 %v4360
        %v4559 = vunpack.c.l.b16 %v4361
        %v4560 = vunpack.c.l.b16 %v4362
        %v4561 = vunpack.c.l.b16 %v4363
        %v4562 = vunpack.c.l.b16 %v4364
        %v4563 = vunpack.c.l.b16 %v4365
        %v4564 = vunpack.c.l.b16 %v4366
        %v4565 = vunpack.c.l.b16 %v4367
        %v4566 = vunpack.c.l.b16 %v4368
        %v4567 = vunpack.c.l.b16 %v4369
        %v4568 = vunpack.c.l.b16 %v4370
        %v4569 = vunpack.c.l.b16 %v4371
        %v4570 = vunpack.c.l.b16 %v4372
        %v4571 = vunpack.c.l.b16 %v4373
        %v4572 = vunpack.c.l.b16 %v4374
        %v4573 = vunpack.c.l.b16 %v4375
        %v4574 = vunpack.c.l.b16 %v4376
        %v4575 = vunpack.c.l.b16 %v4377
        %v4576 = vunpack.c.l.b16 %v4378
        %v4577 = vunpack.c.l.b16 %v4379
        %v4578 = vunpack.c.l.b16 %v4380
        %v4579 = vunpack.c.l.b16 %v4381
        %v4580 = vunpack.c.l.b16 %v4382
        %v4581 = vunpack.c.l.b16 %v4383
        %v4582 = vunpack.c.l.b16 %v4384
        %v4583 = vunpack.c.l.b16 %v4385
        %v4584 = vunpack.c.l.b16 %v4386
        %v4585 = vunpack.c.l.b16 %v4387
        %v4586 = vunpack.c.l.b16 %v4388
        %v4587 = vunpack.c.l.b16 %v4389
        %v4588 = vunpack.c.l.b16 %v4390
        %v4589 = vunpack.c.l.b16 %v4391
        %v4590 = vunpack.c.l.b16 %v4392
        %v4591 = vunpack.c.l.b16 %v4393
        %v4592 = vunpack.c.l.b16 %v4394
        %v4593 = vunpack.c.l.b16 %v4395
        %v4594 = vunpack.c.l.b16 %v4396
        %v4595 = vunpack.c.l.b16 %v4397
        %v4596 = vunpack.c.l.b16 %v4398
        %v4597 = vunpack.c.l.b16 %v4399
        %v4598 = vunpack.c.l.b16 %v4400
        %v4599 = vunpack.c.l.b16 %v4401
        %v4600 = vunpack.c.l.b16 %v4402
        %v4601 = vunpack.c.l.b16 %v4403
        %v4602 = vunpack.c.l.b16 %v4404
        %v4603 = vunpack.c.l.b16 %v4405
        %v4604 = vunpack.c.l.b16 %v4406
        %v4605 = vunpack.c.l.b16 %v4407
        %v4606 = vunpack.c.l.b16 %v4408
        %v4607 = vunpack.c.l.b16 %v4409
        %v4608 = vunpack.c.l.b16 %v4410
        %v4609 = vunpack.c.l.b16 %v4411
        %v4610 = vunpack.c.l.b16 %v4412
        %v4611 = vpack.c.b16 %v4516, %v4515
        %v4612 = vpack.c.b16 %v4518, %v4517
        %v4613 = vpack.c.b16 %v4520, %v4519
        %v4614 = vpack.c.b16 %v4522, %v4521
        %v4615 = vpack.c.b16 %v4524, %v4523
        %v4616 = vpack.c.b16 %v4526, %v4525
        %v4617 = vpack.c.b16 %v4528, %v4527
        %v4618 = vpack.c.b16 %v4530, %v4529
        %v4619 = vpack.c.b16 %v4532, %v4531
        %v4620 = vpack.c.b16 %v4534, %v4533
        %v4621 = vpack.c.b16 %v4536, %v4535
        %v4622 = vpack.c.b16 %v4538, %v4537
        %v4623 = vpack.c.b16 %v4540, %v4539
        %v4624 = vpack.c.b16 %v4542, %v4541
        %v4625 = vpack.c.b16 %v4544, %v4543
        %v4626 = vpack.c.b16 %v4546, %v4545
        %v4627 = vpack.c.b16 %v4548, %v4547
        %v4628 = vpack.c.b16 %v4550, %v4549
        %v4629 = vpack.c.b16 %v4552, %v4551
        %v4630 = vpack.c.b16 %v4554, %v4553
        %v4631 = vpack.c.b16 %v4556, %v4555
        %v4632 = vpack.c.b16 %v4558, %v4557
        %v4633 = vpack.c.b16 %v4560, %v4559
        %v4634 = vpack.c.b16 %v4562, %v4561
        %v4635 = vpack.c.b16 %v4564, %v4563
        %v4636 = vpack.c.b16 %v4566, %v4565
        %v4637 = vpack.c.b16 %v4568, %v4567
        %v4638 = vpack.c.b16 %v4570, %v4569
        %v4639 = vpack.c.b16 %v4572, %v4571
        %v4640 = vpack.c.b16 %v4574, %v4573
        %v4641 = vpack.c.b16 %v4576, %v4575
        %v4642 = vpack.c.b16 %v4578, %v4577
        %v4643 = vpack.c.b16 %v4580, %v4579
        %v4644 = vpack.c.b16 %v4582, %v4581
        %v4645 = vpack.c.b16 %v4584, %v4583
        %v4646 = vpack.c.b16 %v4586, %v4585
        %v4647 = vpack.c.b16 %v4588, %v4587
        %v4648 = vpack.c.b16 %v4590, %v4589
        %v4649 = vpack.c.b16 %v4592, %v4591
        %v4650 = vpack.c.b16 %v4594, %v4593
        %v4651 = vpack.c.b16 %v4596, %v4595
        %v4652 = vpack.c.b16 %v4598, %v4597
        %v4653 = vpack.c.b16 %v4600, %v4599
        %v4654 = vpack.c.b16 %v4602, %v4601
        %v4655 = vpack.c.b16 %v4604, %v4603
        %v4656 = vpack.c.b16 %v4606, %v4605
        %v4657 = vpack.c.b16 %v4608, %v4607
        %v4658 = vpack.c.b16 %v4610, %v4609
        %4707 = vmatprep.subr.bf16.mxu0 0
        %4708 = vmatpush1.bf16.msra.mxu0 %v4618
        %4709 = vmatprep.subr.bf16.mxu0 0
        %4710 = vmatpush1.bf16.msra.mxu0 %v4617
        %4711 = vmatprep.subr.bf16.mxu0 0
        %4712 = vmatpush1.bf16.msra.mxu0 %v4616
        %4713 = vmatprep.subr.bf16.mxu0 0
        %4714 = vmatpush1.bf16.msra.mxu0 %v4615
        %4715 = vmatprep.subr.bf16.mxu0 0
        %4716 = vmatpush1.bf16.msra.mxu0 %v4614
        %4717 = vmatprep.subr.bf16.mxu0 0
        %4718 = vmatpush1.bf16.msra.mxu0 %v4613
        %4719 = vmatprep.subr.bf16.mxu0 0
        %4720 = vmatpush1.bf16.msra.mxu0 %v4612
        %4721 = vmatprep.subr.bf16.mxu0 0
        %4722 = vmatpush1.bf16.msra.mxu0 %v4611
        %4723 = vmatprep.subr.bf16.mxu0 0
        %4724 = vmatpush2.bf16.msra.mxu0 %v4626
        %4725 = vmatprep.subr.bf16.mxu0 0
        %4726 = vmatpush2.bf16.msra.mxu0 %v4625
        %4727 = vmatprep.subr.bf16.mxu0 0
        %4728 = vmatpush2.bf16.msra.mxu0 %v4624
        %4729 = vmatprep.subr.bf16.mxu0 0
        %4730 = vmatpush2.bf16.msra.mxu0 %v4623
        %4731 = vmatprep.subr.bf16.mxu0 0
        %4732 = vmatpush2.bf16.msra.mxu0 %v4622
        %4733 = vmatprep.subr.bf16.mxu0 0
        %4734 = vmatpush2.bf16.msra.mxu0 %v4621
        %4735 = vmatprep.subr.bf16.mxu0 0
        %4736 = vmatpush2.bf16.msra.mxu0 %v4620
        %4737 = vmatprep.subr.bf16.mxu0 0
        %4738 = vmatpush2.bf16.msra.mxu0 %v4619
        %4739 = vmatprep.mubr.bf16.mxu0 %v4414
        %4740 = vmatmul.mubr.bf16.gmra.mxu0 %v4413
        %v4741 = vpop.f32.mrf.mxu0
        %v4742 = vadd.f32 0.0, %v4741
        %v4743 = vpop.f32.mrf.mxu0
        %v4744 = vpop.f32.mrf.mxu0
        %v4745 = vadd.f32 0.0, %v4744
        %v4746 = vpop.f32.mrf.mxu0
        %4747 = vdwg.mxu0
        %4748 = vmatprep.subr.bf16.mxu0 0
        %4749 = vmatpush1.bf16.msra.mxu0 %v4634
        %4750 = vmatprep.subr.bf16.mxu0 0
        %4751 = vmatpush1.bf16.msra.mxu0 %v4633
        %4752 = vmatprep.subr.bf16.mxu0 0
        %4753 = vmatpush1.bf16.msra.mxu0 %v4632
        %4754 = vmatprep.subr.bf16.mxu0 0
        %4755 = vmatpush1.bf16.msra.mxu0 %v4631
        %4756 = vmatprep.subr.bf16.mxu0 0
        %4757 = vmatpush1.bf16.msra.mxu0 %v4630
        %4758 = vmatprep.subr.bf16.mxu0 0
        %4759 = vmatpush1.bf16.msra.mxu0 %v4629
        %4760 = vmatprep.subr.bf16.mxu0 0
        %4761 = vmatpush1.bf16.msra.mxu0 %v4628
        %4762 = vmatprep.subr.bf16.mxu0 0
        %4763 = vmatpush1.bf16.msra.mxu0 %v4627
        %4764 = vmatprep.subr.bf16.mxu0 0
        %4765 = vmatpush2.bf16.msra.mxu0 %v4642
        %4766 = vmatprep.subr.bf16.mxu0 0
        %4767 = vmatpush2.bf16.msra.mxu0 %v4641
        %4768 = vmatprep.subr.bf16.mxu0 0
        %4769 = vmatpush2.bf16.msra.mxu0 %v4640
        %4770 = vmatprep.subr.bf16.mxu0 0
        %4771 = vmatpush2.bf16.msra.mxu0 %v4639
        %4772 = vmatprep.subr.bf16.mxu0 0
        %4773 = vmatpush2.bf16.msra.mxu0 %v4638
        %4774 = vmatprep.subr.bf16.mxu0 0
        %4775 = vmatpush2.bf16.msra.mxu0 %v4637
        %4776 = vmatprep.subr.bf16.mxu0 0
        %4777 = vmatpush2.bf16.msra.mxu0 %v4636
        %4778 = vmatprep.subr.bf16.mxu0 0
        %4779 = vmatpush2.bf16.msra.mxu0 %v4635
        %4780 = vmatprep.mubr.bf16.mxu0 %v4416
        %4781 = vmatmul.mubr.bf16.gmra.mxu0 %v4415
        %v4782 = vpop.f32.mrf.mxu0
        %v4783 = vadd.f32 %v4742, %v4782
        %v4784 = vpop.f32.mrf.mxu0
        %v4785 = vpop.f32.mrf.mxu0
        %v4786 = vadd.f32 %v4745, %v4785
        %v4787 = vpop.f32.mrf.mxu0
        %4788 = vdwg.mxu0
        %4789 = vmatprep.subr.bf16.mxu0 0
        %4790 = vmatpush1.bf16.msra.mxu0 %v4650
        %4791 = vmatprep.subr.bf16.mxu0 0
        %4792 = vmatpush1.bf16.msra.mxu0 %v4649
        %4793 = vmatprep.subr.bf16.mxu0 0
        %4794 = vmatpush1.bf16.msra.mxu0 %v4648
        %4795 = vmatprep.subr.bf16.mxu0 0
        %4796 = vmatpush1.bf16.msra.mxu0 %v4647
        %4797 = vmatprep.subr.bf16.mxu0 0
        %4798 = vmatpush1.bf16.msra.mxu0 %v4646
        %4799 = vmatprep.subr.bf16.mxu0 0
        %4800 = vmatpush1.bf16.msra.mxu0 %v4645
        %4801 = vmatprep.subr.bf16.mxu0 0
        %4802 = vmatpush1.bf16.msra.mxu0 %v4644
        %4803 = vmatprep.subr.bf16.mxu0 0
        %4804 = vmatpush1.bf16.msra.mxu0 %v4643
        %4805 = vmatprep.subr.bf16.mxu0 0
        %4806 = vmatpush2.bf16.msra.mxu0 %v4658
        %4807 = vmatprep.subr.bf16.mxu0 0
        %4808 = vmatpush2.bf16.msra.mxu0 %v4657
        %4809 = vmatprep.subr.bf16.mxu0 0
        %4810 = vmatpush2.bf16.msra.mxu0 %v4656
        %4811 = vmatprep.subr.bf16.mxu0 0
        %4812 = vmatpush2.bf16.msra.mxu0 %v4655
        %4813 = vmatprep.subr.bf16.mxu0 0
        %4814 = vmatpush2.bf16.msra.mxu0 %v4654
        %4815 = vmatprep.subr.bf16.mxu0 0
        %4816 = vmatpush2.bf16.msra.mxu0 %v4653
        %4817 = vmatprep.subr.bf16.mxu0 0
        %4818 = vmatpush2.bf16.msra.mxu0 %v4652
        %4819 = vmatprep.subr.bf16.mxu0 0
        %4820 = vmatpush2.bf16.msra.mxu0 %v4651
        %4821 = vmatprep.mubr.bf16.mxu0 %v4418
        %4822 = vmatmul.mubr.bf16.gmra.mxu0 %v4417
        %v4823 = vpop.f32.mrf.mxu0
        %v4824 = vadd.f32 %v4783, %v4823
        %v4825 = vpop.f32.mrf.mxu0
        %v4826 = vpop.f32.mrf.mxu0
        %v4827 = vadd.f32 %v4786, %v4826
        %v4828 = vpop.f32.mrf.mxu0
        %4829 = vdwg.mxu0
        %v4831 = vrot.slane %v4824, 1
        %v4834 = vrot.slane %v4824, 7
        %v4835 = vrot.slane %v4827, 7
        %v4836 = vsel %vm462, %v4834, %v4835
        %v4839 = vsel %vm462, %v4831, %v4834
        %v4840 = vrot.slane %v4827, 1
        %v4841 = vsel %vm402, %v4831, %v4840
        %v4845 = vsel %vm402, %v4840, %v4835
        %s4846 = scalar_lea.vmem [#allocation8], 384
        %v4847 = vld [vmem:[%s4846] sm:$0xff]
        %v4848 = vld [vmem:[%s4846 + $0x8] sm:$0xff]
        %v4849 = vld [vmem:[%s4846 + $0x10] sm:$0xff]
        %v4850 = vld [vmem:[%s4846 + $0x18] sm:$0xff]
        %v4851 = vld [vmem:[%s4846 + $0x20] sm:$0xff]
        %v4852 = vld [vmem:[%s4846 + $0x28] sm:$0xff]
        %v4853 = vld [vmem:[%s4846 + $0x30] sm:$0xff]
        %v4854 = vld [vmem:[%s4846 + $0x38] sm:$0xff]
        %v4855 = vld [vmem:[%s4846 + $0x40] sm:$0xff]
        %v4856 = vld [vmem:[%s4846 + $0x48] sm:$0xff]
        %v4857 = vld [vmem:[%s4846 + $0x50] sm:$0xff]
        %v4858 = vld [vmem:[%s4846 + $0x58] sm:$0xff]
        %v4859 = vld [vmem:[%s4846 + $0x60] sm:$0xff]
        %v4860 = vld [vmem:[%s4846 + $0x68] sm:$0xff]
        %v4861 = vld [vmem:[%s4846 + $0x70] sm:$0xff]
        %v4862 = vld [vmem:[%s4846 + $0x78] sm:$0xff]
        %v4863 = vld [vmem:[%s4846 + $0x80] sm:$0xff]
        %v4864 = vld [vmem:[%s4846 + $0x88] sm:$0xff]
        %v4865 = vld [vmem:[%s4846 + $0x90] sm:$0xff]
        %v4866 = vld [vmem:[%s4846 + $0x98] sm:$0xff]
        %v4867 = vld [vmem:[%s4846 + $0xa0] sm:$0xff]
        %v4868 = vld [vmem:[%s4846 + $0xa8] sm:$0xff]
        %v4869 = vld [vmem:[%s4846 + $0xb0] sm:$0xff]
        %v4870 = vld [vmem:[%s4846 + $0xb8] sm:$0xff]
        %v4871 = vld [vmem:[%s4846 + $0xc0] sm:$0xff]
        %v4872 = vld [vmem:[%s4846 + $0xc8] sm:$0xff]
        %v4873 = vld [vmem:[%s4846 + $0xd0] sm:$0xff]
        %v4874 = vld [vmem:[%s4846 + $0xd8] sm:$0xff]
        %v4875 = vld [vmem:[%s4846 + $0xe0] sm:$0xff]
        %v4876 = vld [vmem:[%s4846 + $0xe8] sm:$0xff]
        %v4877 = vld [vmem:[%s4846 + $0xf0] sm:$0xff]
        %v4878 = vld [vmem:[%s4846 + $0xf8] sm:$0xff]
        %v4879 = vld [vmem:[%s4846 + $0x100] sm:$0xff]
        %v4880 = vld [vmem:[%s4846 + $0x108] sm:$0xff]
        %v4881 = vld [vmem:[%s4846 + $0x110] sm:$0xff]
        %v4882 = vld [vmem:[%s4846 + $0x118] sm:$0xff]
        %v4883 = vld [vmem:[%s4846 + $0x120] sm:$0xff]
        %v4884 = vld [vmem:[%s4846 + $0x128] sm:$0xff]
        %v4885 = vld [vmem:[%s4846 + $0x130] sm:$0xff]
        %v4886 = vld [vmem:[%s4846 + $0x138] sm:$0xff]
        %v4887 = vld [vmem:[%s4846 + $0x140] sm:$0xff]
        %v4888 = vld [vmem:[%s4846 + $0x148] sm:$0xff]
        %v4889 = vld [vmem:[%s4846 + $0x150] sm:$0xff]
        %v4890 = vld [vmem:[%s4846 + $0x158] sm:$0xff]
        %v4891 = vld [vmem:[%s4846 + $0x160] sm:$0xff]
        %v4892 = vld [vmem:[%s4846 + $0x168] sm:$0xff]
        %v4893 = vld [vmem:[%s4846 + $0x170] sm:$0xff]
        %v4894 = vld [vmem:[%s4846 + $0x178] sm:$0xff]
        %v4895 = vpack.c.bf16 %v4836, %v4839
        %v4896 = vpack.c.bf16 %v4827, %v4824
        %v4897 = vpack.c.bf16 %v4845, %v4841
        %s4898 = scalar_lea.vmem %s8, 2
        %v4899 = vld [vmem:[%s4898] sm:$0x3]
        %v4901 = vlaneseq
        %v4902 = vshrl.u32 %v4901, 7
        %v4903 = vsub.s32 0, %v4902
        %v4904 = vrot.slane %v4899, %v4903
        %v4905 = vlaneseq
        %v4906 = vshrl.u32 %v4905, 7
        %v4907 = vsub.s32 1, %v4906
        %v4908 = vrot.slane %v4899, %v4907
        %v4959 = vunpack.c.l.b16 %v4847
        %v4960 = vunpack.c.h.b16 %v4847
        %v4961 = vunpack.c.l.b16 %v4848
        %v4962 = vunpack.c.h.b16 %v4848
        %v4963 = vunpack.c.l.b16 %v4849
        %v4964 = vunpack.c.h.b16 %v4849
        %v4965 = vunpack.c.l.b16 %v4850
        %v4966 = vunpack.c.h.b16 %v4850
        %v4967 = vunpack.c.l.b16 %v4851
        %v4968 = vunpack.c.h.b16 %v4851
        %v4969 = vunpack.c.l.b16 %v4852
        %v4970 = vunpack.c.h.b16 %v4852
        %v4971 = vunpack.c.l.b16 %v4853
        %v4972 = vunpack.c.h.b16 %v4853
        %v4973 = vunpack.c.l.b16 %v4854
        %v4974 = vunpack.c.h.b16 %v4854
        %v4975 = vunpack.c.l.b16 %v4855
        %v4976 = vunpack.c.h.b16 %v4855
        %v4977 = vunpack.c.l.b16 %v4856
        %v4978 = vunpack.c.h.b16 %v4856
        %v4979 = vunpack.c.l.b16 %v4857
        %v4980 = vunpack.c.h.b16 %v4857
        %v4981 = vunpack.c.l.b16 %v4858
        %v4982 = vunpack.c.h.b16 %v4858
        %v4983 = vunpack.c.l.b16 %v4859
        %v4984 = vunpack.c.h.b16 %v4859
        %v4985 = vunpack.c.l.b16 %v4860
        %v4986 = vunpack.c.h.b16 %v4860
        %v4987 = vunpack.c.l.b16 %v4861
        %v4988 = vunpack.c.h.b16 %v4861
        %v4989 = vunpack.c.l.b16 %v4862
        %v4990 = vunpack.c.h.b16 %v4862
        %v4991 = vunpack.c.l.b16 %v4863
        %v4992 = vunpack.c.h.b16 %v4863
        %v4993 = vunpack.c.l.b16 %v4864
        %v4994 = vunpack.c.h.b16 %v4864
        %v4995 = vunpack.c.l.b16 %v4865
        %v4996 = vunpack.c.h.b16 %v4865
        %v4997 = vunpack.c.l.b16 %v4866
        %v4998 = vunpack.c.h.b16 %v4866
        %v4999 = vunpack.c.l.b16 %v4867
        %v5000 = vunpack.c.h.b16 %v4867
        %v5001 = vunpack.c.l.b16 %v4868
        %v5002 = vunpack.c.h.b16 %v4868
        %v5003 = vunpack.c.l.b16 %v4869
        %v5004 = vunpack.c.h.b16 %v4869
        %v5005 = vunpack.c.l.b16 %v4870
        %v5006 = vunpack.c.h.b16 %v4870
        %v5007 = vunpack.c.l.b16 %v4871
        %v5008 = vunpack.c.h.b16 %v4871
        %v5009 = vunpack.c.l.b16 %v4872
        %v5010 = vunpack.c.h.b16 %v4872
        %v5011 = vunpack.c.l.b16 %v4873
        %v5012 = vunpack.c.h.b16 %v4873
        %v5013 = vunpack.c.l.b16 %v4874
        %v5014 = vunpack.c.h.b16 %v4874
        %v5015 = vunpack.c.l.b16 %v4875
        %v5016 = vunpack.c.h.b16 %v4875
        %v5017 = vunpack.c.l.b16 %v4876
        %v5018 = vunpack.c.h.b16 %v4876
        %v5019 = vunpack.c.l.b16 %v4877
        %v5020 = vunpack.c.h.b16 %v4877
        %v5021 = vunpack.c.l.b16 %v4878
        %v5022 = vunpack.c.h.b16 %v4878
        %v5023 = vunpack.c.l.b16 %v4879
        %v5024 = vunpack.c.h.b16 %v4879
        %v5025 = vunpack.c.l.b16 %v4880
        %v5026 = vunpack.c.h.b16 %v4880
        %v5027 = vunpack.c.l.b16 %v4881
        %v5028 = vunpack.c.h.b16 %v4881
        %v5029 = vunpack.c.l.b16 %v4882
        %v5030 = vunpack.c.h.b16 %v4882
        %v5031 = vunpack.c.l.b16 %v4883
        %v5032 = vunpack.c.h.b16 %v4883
        %v5033 = vunpack.c.l.b16 %v4884
        %v5034 = vunpack.c.h.b16 %v4884
        %v5035 = vunpack.c.l.b16 %v4885
        %v5036 = vunpack.c.h.b16 %v4885
        %v5037 = vunpack.c.l.b16 %v4886
        %v5038 = vunpack.c.h.b16 %v4886
        %v5039 = vunpack.c.l.b16 %v4887
        %v5040 = vunpack.c.h.b16 %v4887
        %v5041 = vunpack.c.l.b16 %v4888
        %v5042 = vunpack.c.h.b16 %v4888
        %v5043 = vunpack.c.l.b16 %v4889
        %v5044 = vunpack.c.h.b16 %v4889
        %v5045 = vunpack.c.l.b16 %v4890
        %v5046 = vunpack.c.h.b16 %v4890
        %v5047 = vunpack.c.l.b16 %v4891
        %v5048 = vunpack.c.h.b16 %v4891
        %v5049 = vunpack.c.l.b16 %v4892
        %v5050 = vunpack.c.h.b16 %v4892
        %v5051 = vunpack.c.l.b16 %v4893
        %v5052 = vunpack.c.h.b16 %v4893
        %v5053 = vunpack.c.l.b16 %v4894
        %v5054 = vunpack.c.h.b16 %v4894
        %v5055 = vpack.c.b16 %v4961, %v4959
        %v5056 = vpack.c.b16 %v4962, %v4960
        %v5057 = vpack.c.b16 %v4965, %v4963
        %v5058 = vpack.c.b16 %v4966, %v4964
        %v5059 = vpack.c.b16 %v4969, %v4967
        %v5060 = vpack.c.b16 %v4970, %v4968
        %v5061 = vpack.c.b16 %v4973, %v4971
        %v5062 = vpack.c.b16 %v4974, %v4972
        %v5063 = vpack.c.b16 %v4977, %v4975
        %v5064 = vpack.c.b16 %v4978, %v4976
        %v5065 = vpack.c.b16 %v4981, %v4979
        %v5066 = vpack.c.b16 %v4982, %v4980
        %v5067 = vpack.c.b16 %v4985, %v4983
        %v5068 = vpack.c.b16 %v4986, %v4984
        %v5069 = vpack.c.b16 %v4989, %v4987
        %v5070 = vpack.c.b16 %v4990, %v4988
        %v5071 = vpack.c.b16 %v4993, %v4991
        %v5072 = vpack.c.b16 %v4994, %v4992
        %v5073 = vpack.c.b16 %v4997, %v4995
        %v5074 = vpack.c.b16 %v4998, %v4996
        %v5075 = vpack.c.b16 %v5001, %v4999
        %v5076 = vpack.c.b16 %v5002, %v5000
        %v5077 = vpack.c.b16 %v5005, %v5003
        %v5078 = vpack.c.b16 %v5006, %v5004
        %v5079 = vpack.c.b16 %v5009, %v5007
        %v5080 = vpack.c.b16 %v5010, %v5008
        %v5081 = vpack.c.b16 %v5013, %v5011
        %v5082 = vpack.c.b16 %v5014, %v5012
        %v5083 = vpack.c.b16 %v5017, %v5015
        %v5084 = vpack.c.b16 %v5018, %v5016
        %v5085 = vpack.c.b16 %v5021, %v5019
        %v5086 = vpack.c.b16 %v5022, %v5020
        %v5087 = vpack.c.b16 %v5025, %v5023
        %v5088 = vpack.c.b16 %v5026, %v5024
        %v5089 = vpack.c.b16 %v5029, %v5027
        %v5090 = vpack.c.b16 %v5030, %v5028
        %v5091 = vpack.c.b16 %v5033, %v5031
        %v5092 = vpack.c.b16 %v5034, %v5032
        %v5093 = vpack.c.b16 %v5037, %v5035
        %v5094 = vpack.c.b16 %v5038, %v5036
        %v5095 = vpack.c.b16 %v5041, %v5039
        %v5096 = vpack.c.b16 %v5042, %v5040
        %v5097 = vpack.c.b16 %v5045, %v5043
        %v5098 = vpack.c.b16 %v5046, %v5044
        %v5099 = vpack.c.b16 %v5049, %v5047
        %v5100 = vpack.c.b16 %v5050, %v5048
        %v5101 = vpack.c.b16 %v5053, %v5051
        %v5102 = vpack.c.b16 %v5054, %v5052
        %5151 = vmatprep.subr.bf16.mxu0 %v5070
        %5152 = vmatpush1.bf16.msra.mxu0 %v5069
        %5153 = vmatprep.subr.bf16.mxu0 %v5068
        %5154 = vmatpush1.bf16.msra.mxu0 %v5067
        %5155 = vmatprep.subr.bf16.mxu0 %v5066
        %5156 = vmatpush1.bf16.msra.mxu0 %v5065
        %5157 = vmatprep.subr.bf16.mxu0 %v5064
        %5158 = vmatpush1.bf16.msra.mxu0 %v5063
        %5159 = vmatprep.subr.bf16.mxu0 %v5062
        %5160 = vmatpush1.bf16.msra.mxu0 %v5061
        %5161 = vmatprep.subr.bf16.mxu0 %v5060
        %5162 = vmatpush1.bf16.msra.mxu0 %v5059
        %5163 = vmatprep.subr.bf16.mxu0 %v5058
        %5164 = vmatpush1.bf16.msra.mxu0 %v5057
        %5165 = vmatprep.subr.bf16.mxu0 %v5056
        %5166 = vmatpush1.bf16.msra.mxu0 %v5055
        %5167 = vmatprep.subr.bf16.mxu0 %v5086
        %5168 = vmatpush2.bf16.msra.mxu0 %v5085
        %5169 = vmatprep.subr.bf16.mxu0 %v5084
        %5170 = vmatpush2.bf16.msra.mxu0 %v5083
        %5171 = vmatprep.subr.bf16.mxu0 %v5082
        %5172 = vmatpush2.bf16.msra.mxu0 %v5081
        %5173 = vmatprep.subr.bf16.mxu0 %v5080
        %5174 = vmatpush2.bf16.msra.mxu0 %v5079
        %5175 = vmatprep.subr.bf16.mxu0 %v5078
        %5176 = vmatpush2.bf16.msra.mxu0 %v5077
        %5177 = vmatprep.subr.bf16.mxu0 %v5076
        %5178 = vmatpush2.bf16.msra.mxu0 %v5075
        %5179 = vmatprep.subr.bf16.mxu0 %v5074
        %5180 = vmatpush2.bf16.msra.mxu0 %v5073
        %5181 = vmatprep.subr.bf16.mxu0 %v5072
        %5182 = vmatpush2.bf16.msra.mxu0 %v5071
        %5183 = vmatprep.mubr.bf16.mxu0 %v4896
        %5184 = vmatmul.mubr.bf16.gmra.mxu0 %v4895
        %v5185 = vpop.f32.mrf.mxu0
        %v5186 = vadd.f32 %v4904, %v5185
        %v5187 = vpop.f32.mrf.mxu0
        %v5188 = vadd.f32 %v4908, %v5187
        %v5189 = vpop.f32.mrf.mxu0
        %v5190 = vadd.f32 %v4904, %v5189
        %v5191 = vpop.f32.mrf.mxu0
        %v5192 = vadd.f32 %v4908, %v5191
        %5193 = vdwg.mxu0
        %5194 = vmatprep.subr.bf16.mxu0 %v5102
        %5195 = vmatpush1.bf16.msra.mxu0 %v5101
        %5196 = vmatprep.subr.bf16.mxu0 %v5100
        %5197 = vmatpush1.bf16.msra.mxu0 %v5099
        %5198 = vmatprep.subr.bf16.mxu0 %v5098
        %5199 = vmatpush1.bf16.msra.mxu0 %v5097
        %5200 = vmatprep.subr.bf16.mxu0 %v5096
        %5201 = vmatpush1.bf16.msra.mxu0 %v5095
        %5202 = vmatprep.subr.bf16.mxu0 %v5094
        %5203 = vmatpush1.bf16.msra.mxu0 %v5093
        %5204 = vmatprep.subr.bf16.mxu0 %v5092
        %5205 = vmatpush1.bf16.msra.mxu0 %v5091
        %5206 = vmatprep.subr.bf16.mxu0 %v5090
        %5207 = vmatpush1.bf16.msra.mxu0 %v5089
        %5208 = vmatprep.subr.bf16.mxu0 %v5088
        %5209 = vmatpush1.bf16.msra.mxu0 %v5087
        %5210 = vmatprep.subr.bf16.mxu0 0
        %5211 = vmatpush2.bf16.msra.mxu0 0
        %5212 = vmatprep.subr.bf16.mxu0 0
        %5213 = vmatpush2.bf16.msra.mxu0 0
        %5214 = vmatprep.subr.bf16.mxu0 0
        %5215 = vmatpush2.bf16.msra.mxu0 0
        %5216 = vmatprep.subr.bf16.mxu0 0
        %5217 = vmatpush2.bf16.msra.mxu0 0
        %5218 = vmatprep.subr.bf16.mxu0 0
        %5219 = vmatpush2.bf16.msra.mxu0 0
        %5220 = vmatprep.subr.bf16.mxu0 0
        %5221 = vmatpush2.bf16.msra.mxu0 0
        %5222 = vmatprep.subr.bf16.mxu0 0
        %5223 = vmatpush2.bf16.msra.mxu0 0
        %5224 = vmatprep.subr.bf16.mxu0 0
        %5225 = vmatpush2.bf16.msra.mxu0 0
        %5226 = vmatprep.mubr.bf16.mxu0 0
        %5227 = vmatmul.mubr.bf16.gmra.mxu0 %v4897
        %v5228 = vpop.f32.mrf.mxu0
        %v5229 = vadd.f32 %v5186, %v5228
        %v5230 = vpop.f32.mrf.mxu0
        %v5231 = vadd.f32 %v5188, %v5230
        %v5232 = vpop.f32.mrf.mxu0
        %v5233 = vadd.f32 %v5190, %v5232
        %v5234 = vpop.f32.mrf.mxu0
        %v5235 = vadd.f32 %v5192, %v5234
        %5236 = vdwg.mxu0
        %v5237 = vadd.f32 %v4280, %v3869
        %v5238 = vadd.f32 %v4281, %v3870
        %v5239 = vadd.f32 %v4282, %v3871
        %v5240 = vadd.f32 %v4283, %v3872
        %v5241 = vsub.f32 %v5237, %v5229
        %v5242 = vsub.f32 %v5238, %v5231
        %v5243 = vsub.f32 %v5239, %v5233
        %v5244 = vsub.f32 %v5240, %v5235
        %v5245 = vmax.f32 %v5241, 0.0
        %v5246 = vmax.f32 %v5242, 0.0
        %v5247 = vmax.f32 %v5243, 0.0
        %v5248 = vmax.f32 %v5244, 0.0
        %5249 = vst [vmem:[%s391] sm:$0xff] %v5245
        %5250 = vst [vmem:[%s391 + $0x8] sm:$0xff] %v5246
        %5251 = vst [vmem:[%s391 + $0x10] sm:$0xff] %v5247
        %5252 = vst [vmem:[%s391 + $0x18] sm:$0xff] %v5248
        %p5253 = scmp.lt.s32.totalorder %s23, 1
        %s5254 = scalar_select %p5253, %s23, 1
        %s5255 = smul.addr %s5254, 4
        %s5256 = smul.addr %s5255, 8
        %s5257 = scalar_lea.vmem %s9, %s5256
        // Predicated region
        $region73: #{invrs_forward.1} parent=55 // pred_check
          %p5258 = pneg %p235
        $region74: #{invrs_forward.1} parent=55 // pred_check_branch
          %5260 = sbr.rel (%p5258) target = $region76
        $region75: #{invrs_forward.1} parent=55 // pred_region
          _
        $region76: #{invrs_forward.1} parent=55 // pred_fallthru
          _
      $region56: #{invrs_forward.1} parent=5 // pred_fallthru
        _
      %p5261 = scmp.le.s32.totalorder 2, %s18
      // Predicated region
      $region77: #{invrs_forward.1} parent=5 // pred_check
        %p5262 = pneg %p5261
      $region78: #{invrs_forward.1} parent=5 // pred_check_branch
        %5264 = sbr.rel (%p5262) target = $region80
      $region79: #{invrs_forward.1} parent=5 // pred_region
        %s5265 = ssub.s32 %s18, 2
        // Predicated region
        $region81: #{invrs_forward.1} parent=79 // pred_check
          %p5266 = pneg %p241
        $region82: #{invrs_forward.1} parent=79 // pred_check_branch
          %5268 = sbr.rel (%p5266) target = $region84
        $region83: #{invrs_forward.1} parent=79 // pred_region
          %p5269 = scmp.lt.s32.totalorder %s24, 1
          %s5270 = scalar_select %p5269, %s24, 1
          %s5271 = smul.addr %s5270, 4
          %s5272 = smul.addr %s5271, 8
          %s5273 = scalar_lea.vmem %s9, %s5272
        $region84: #{invrs_forward.1} parent=79 // pred_fallthru
          _
      $region80: #{invrs_forward.1} parent=5 // pred_fallthru
        _
    $region6: #{invrs_forward.1} parent=1 // loop_footer
      %s22 = sadd.s32 1, %s18
    $region7: #{invrs_forward.1} parent=1 // loop_footer_branch
      %17 = sbr.rel target = $region3
    $region8: #{invrs_forward.1} parent=1 // loop_exit
      _
    %5274 = vsyncpa [#allocation4], 1
    %s5275 = scalar_lea.sflag [#allocation4], 1
    %5276 = vsyncpa %s5275, 1
    %5277 = vsyncpa [#allocation6], 1
    %5278 = vsyncpa [#allocation9], 1

</llo_original>
